<compile_context>
chip_gen: v5e
topology: v5e:2x2
jax: 0.10.0
libtpu: 0.0.40
codegen_flags: <defaults>
</compile_context>

<pallas_src>
import jax
import jax.numpy as jnp
from jax.experimental import pallas as pl
from jax.experimental.pallas import tpu as pltpu


# ----------------------------------------------------------------------------
# Pallas kernel: tiled  out = adj @ xw + b , f32 accumulation directly in out.
#   adj_ref : (tile_m, tile_k)  bf16   -- streamed per grid step
#   xw_ref  : (n_pad,  c_pad)   bf16   -- VMEM resident (constant index_map)
#   b_ref   : (1, c_pad)        f32    -- VMEM resident
#   out_ref : (tile_m, c_pad)   f32    -- resident across the k sweep
# ----------------------------------------------------------------------------
def _gcn_aggregate_kernel(adj_ref, xw_ref, b_ref, out_ref):
    k = pl.program_id(1)
    tk = adj_ref.shape[1]                       # static contraction tile

    @pl.when(k == 0)
    def _():
        out_ref[...] = jnp.zeros_like(out_ref)

    start = pl.multiple_of(k * tk, tk)
    out_ref[...] += jnp.dot(
        adj_ref[...],
        xw_ref[pl.ds(start, tk), :],
        preferred_element_type=jnp.float32,
    )

    @pl.when(k == pl.num_programs(1) - 1)
    def _():
        # Bias added once, in the epilogue (not per-k iteration).
        out_ref[...] += b_ref[...]


# ----------------------------------------------------------------------------
# Glue: normalized adjacency built directly at padded shape, in bf16.
# Degrees come from segment_sum over edge_index (no dense N^2 passes).
# ----------------------------------------------------------------------------
def _normalized_adjacency_padded_bf16(edge_index, num_nodes, n_pad):
    src = edge_index[0]
    dst = edge_index[1]
    ones = jnp.ones(src.shape, jnp.float32)
    self_mask = (src == dst).astype(jnp.float32)

    # Row sums of the raw adjacency (row = destination) from the edge list.
    in_count = jax.ops.segment_sum(ones, dst, num_segments=num_nodes)
    self_count = jax.ops.segment_sum(self_mask, dst, num_segments=num_nodes)

    # add_remaining_self_loops: nodes without a self loop get one unit loop,
    # existing self loops keep their (accumulated) weight.
    deg = in_count + jnp.where(self_count > 0, 0.0, 1.0)
    dinv = jnp.where(deg > 0, jax.lax.rsqrt(deg), 0.0)   # guard (padded rows)

    # Per-edge normalized weight (O(E), f32) scattered straight into the
    # padded bf16 adjacency:  adj[dst, src] += dinv[dst] * dinv[src].
    w_e = (dinv[dst] * dinv[src]).astype(jnp.bfloat16)
    adj = jnp.zeros((n_pad, n_pad), jnp.bfloat16)
    adj = adj.at[dst, src].add(w_e)

    # Remaining self loops (only where none existed), normalized.
    idx = jnp.arange(num_nodes)
    loop_w = (jnp.where(self_count > 0, 0.0, 1.0) * dinv * dinv).astype(jnp.bfloat16)
    adj = adj.at[idx, idx].add(loop_w)
    return adj


def _choose_tiles(n_pad, tile_m_target=512, tile_k_target=1024):
    # >= 2 row blocks on the "parallel" axis (keeps both v7x TCs busy);
    # n_pad is a multiple of 256, so n_pad // 2 is a multiple of 128.
    tile_m = min(tile_m_target, n_pad // 2)
    tile_m = max(128, (tile_m // 128) * 128)
    while n_pad % tile_m != 0:
        tile_m -= 128
    tile_k = min(tile_k_target, n_pad)
    tile_k = max(128, (tile_k // 128) * 128)
    while n_pad % tile_k != 0:
        tile_k -= 128
    return tile_m, tile_k


# ----------------------------------------------------------------------------
# Wrapper: PPIEncdoer.forward(x, edge_index) -> (mu, logstd)
# ----------------------------------------------------------------------------
def ppi_encoder_forward(x, edge_index, w1, b1, w2, b2):
    n, cin = x.shape
    c_out = w1.shape[1]
    c2 = 2 * c_out
    c_pad = pl.cdiv(c2, 128) * 128              # lane-dense output columns
    n_pad = max(256, pl.cdiv(n, 256) * 256)     # multiple of 256 rows

    tile_m, tile_k = _choose_tiles(n_pad)

    # ---- adjacency (padded, bf16, built in one scatter pass) ----
    adj_p = _normalized_adjacency_padded_bf16(edge_index, n, n_pad)

    # ---- fused feature transform, produced directly at padded shape ----
    w_fused = jnp.concatenate([w1, w2], axis=1)            # (Cin, 2*Cout)
    b_fused = jnp.concatenate([b1, b2], axis=0)            # (2*Cout,)
    x_p = jnp.zeros((n_pad, cin), jnp.float32).at[:n, :].set(x)
    w_p = jnp.zeros((cin, c_pad), jnp.float32).at[:, :c2].set(w_fused)
    xw_p = jnp.dot(x_p, w_p,
                   preferred_element_type=jnp.float32).astype(jnp.bfloat16)
    b_p = jnp.zeros((1, c_pad), jnp.float32).at[0, :c2].set(b_fused)

    # ---- VMEM budget: resident XW + double-buffered adj/out tiles ----
    vmem_need = (n_pad * c_pad * 2            # resident XW (bf16)
                 + 2 * tile_m * tile_k * 2    # adj tile double buffer (bf16)
                 + 2 * tile_m * c_pad * 4     # out tile double buffer (f32)
                 + 2 * c_pad * 4)             # bias
    vmem_limit = int(min(max(2 * vmem_need, 32 * 1024 * 1024),
                         96 * 1024 * 1024))

    grid = (n_pad // tile_m, n_pad // tile_k)

    out = pl.pallas_call(
        _gcn_aggregate_kernel,
        out_shape=jax.ShapeDtypeStruct((n_pad, c_pad), jnp.float32),
        grid=grid,
        in_specs=[
            pl.BlockSpec((tile_m, tile_k), lambda i, k: (i, k)),   # adj (streamed)
            pl.BlockSpec((n_pad, c_pad), lambda i, k: (0, 0)),     # XW (resident)
            pl.BlockSpec((1, c_pad), lambda i, k: (0, 0)),         # bias (resident)
        ],
        out_specs=pl.BlockSpec((tile_m, c_pad), lambda i, k: (i, 0)),
        compiler_params=pltpu.CompilerParams(
            dimension_semantics=("parallel", "arbitrary"),
            vmem_limit_bytes=vmem_limit,
        ),
    )(adj_p, xw_p, b_p)

    mu = out[:n, :c_out]
    logstd = out[:n, c_out:c2]
    return mu, logstd


# ----------------------------------------------------------------------------
# Pure-JAX f32 reference (module semantics) for the sanity check.
# ----------------------------------------------------------------------------
def _normalized_adjacency_dense_ref(edge_index, num_nodes):
    src = edge_index[0]
    dst = edge_index[1]
    adj = jnp.zeros((num_nodes, num_nodes), jnp.float32)
    adj = adj.at[dst, src].add(1.0)             # message flows src -> dst
    diag = jnp.diagonal(adj)
    idx = jnp.arange(num_nodes)
    adj = adj.at[idx, idx].set(jnp.where(diag > 0, diag, 1.0))
    deg = jnp.sum(adj, axis=1)
    dinv = jax.lax.rsqrt(deg)                   # deg >= 1 always
    return adj * dinv[:, None] * dinv[None, :]


def ppi_encoder_ref(x, edge_index, w1, b1, w2, b2):
    n = x.shape[0]
    adj_norm = _normalized_adjacency_dense_ref(edge_index, n)
    mu = adj_norm @ (x @ w1) + b1[None, :]
    logstd = adj_norm @ (x @ w2) + b2[None, :]
    return mu, logstd


if __name__ == "__main__":
    key = jax.random.PRNGKey(0)

    # Small shapes consistent with the module (out_channels = 200 in the spec).
    num_nodes = 512
    in_channels = 64
    out_channels = 200
    extra_edges = 128

    k_x, k_w1, k_w2, k_e1, k_e2 = jax.random.split(key, 5)

    # Node features.
    x = jax.random.normal(k_x, (num_nodes, in_channels), dtype=jnp.float32)

    # Deterministic graph: bidirectional ring + a few random bidirectional edges.
    idx = jnp.arange(num_nodes)
    ring_src = jnp.concatenate([idx, (idx + 1) % num_nodes])
    ring_dst = jnp.concatenate([(idx + 1) % num_nodes, idx])
    rnd_a = jax.random.randint(k_e1, (extra_edges,), 0, num_nodes)
    rnd_b = jax.random.randint(k_e2, (extra_edges,), 0, num_nodes)
    src = jnp.concatenate([ring_src, rnd_a, rnd_b])
    dst = jnp.concatenate([ring_dst, rnd_b, rnd_a])
    edge_index = jnp.stack([src, dst], axis=0).astype(jnp.int32)

    # GCNConv-shaped parameters (glorot-ish weights, zero bias).
    scale = jnp.sqrt(6.0 / (in_channels + out_channels))
    w1 = jax.random.uniform(k_w1, (in_channels, out_channels),
                            minval=-scale, maxval=scale, dtype=jnp.float32)
    b1 = jnp.zeros((out_channels,), jnp.float32)
    w2 = jax.random.uniform(k_w2, (in_channels, out_channels),
                            minval=-scale, maxval=scale, dtype=jnp.float32)
    b2 = jnp.zeros((out_channels,), jnp.float32)

    mu, logstd = ppi_encoder_forward(x, edge_index, w1, b1, w2, b2)
    mu = jax.block_until_ready(mu)
    logstd = jax.block_until_ready(logstd)

    mu_ref, logstd_ref = ppi_encoder_ref(x, edge_index, w1, b1, w2, b2)
    # bf16 adjacency / XW inside the kernel -> looser tolerance vs f32 reference.
    assert jnp.allclose(mu, mu_ref, atol=2e-2, rtol=2e-2), "mu mismatch"
    assert jnp.allclose(logstd, logstd_ref, atol=2e-2, rtol=2e-2), "logstd mismatch"

    print("KERNEL_OK")
</pallas_src>

<mosaic_0001>
module attributes {stable_mosaic.version = 11 : i64} {
  func.func @_gcn_aggregate_kernel(%arg0: i32, %arg1: i32, %arg2: memref<256x512xbf16, #tpu.memory_space<vmem>>, %arg3: memref<512x512xbf16, #tpu.memory_space<vmem>>, %arg4: memref<1x512xf32, #tpu.memory_space<vmem>>, %arg5: memref<256x512xf32, #tpu.memory_space<vmem>>) attributes {dimension_semantics = [#tpu.dimension_semantics<parallel>, #tpu.dimension_semantics<arbitrary>], iteration_bounds = array<i64: 2, 1>, scalar_prefetch = 0 : i64, scratch_operands = 0 : i64, tpu.core_type = #tpu.core_type<tc>, window_params = [{transform_indices = @transform_0, window_bounds = array<i64: 256, 512>}, {pipeline_mode = #tpu.pipeline_mode<synchronous>, transform_indices = @transform_1, window_bounds = array<i64: 512, 512>}, {pipeline_mode = #tpu.pipeline_mode<synchronous>, transform_indices = @transform_2, window_bounds = array<i64: 1, 512>}, {transform_indices = @transform_3, window_bounds = array<i64: 256, 512>}]} {
    %c0_i32 = arith.constant 0 : i32
    %0 = arith.cmpi eq, %arg1, %c0_i32 : i32
    %1 = arith.extui %0 : i1 to i32
    %c0_i32_0 = arith.constant 0 : i32
    %2 = arith.cmpi ne, %1, %c0_i32_0 : i32
    scf.if %2 {
      %cst_9 = arith.constant 0.000000e+00 : f32
      %15 = vector.broadcast %cst_9 : f32 to vector<256x512xf32>
      %c0_10 = arith.constant 0 : index
      %c0_11 = arith.constant 0 : index
      %16 = vector.load %arg5[%c0_10, %c0_11] : memref<256x512xf32, #tpu.memory_space<vmem>>, vector<256x512xf32>
      tpu.vector_store %arg5[%c0_10, %c0_11], %15 {strides = array<i32>} : memref<256x512xf32, #tpu.memory_space<vmem>>, vector<256x512xf32>,
    } else {
    }
    %c512_i32 = arith.constant 512 : i32
    %3 = arith.muli %arg1, %c512_i32 : i32
    %4 = tpu.assume_multiple %3, 512 : i32
    %c0 = arith.constant 0 : index
    %c0_1 = arith.constant 0 : index
    %5 = vector.load %arg5[%c0, %c0_1] : memref<256x512xf32, #tpu.memory_space<vmem>>, vector<256x512xf32>
    %c0_2 = arith.constant 0 : index
    %c0_3 = arith.constant 0 : index
    %6 = vector.load %arg2[%c0_2, %c0_3] : memref<256x512xbf16, #tpu.memory_space<vmem>>, vector<256x512xbf16>
    %7 = arith.index_cast %4 : i32 to index
    %c0_4 = arith.constant 0 : index
    %8 = vector.load %arg3[%7, %c0_4] : memref<512x512xbf16, #tpu.memory_space<vmem>>, vector<512x512xbf16>
    %cst = arith.constant dense<0.000000e+00> : vector<256x512xf32>
    %9 = tpu.matmul %6, %8, %cst {dimension_numbers = #tpu.dot_dimension_numbers<[1], [0], [0], [1], [0, 0, 1, 1], [], []>} : vector<256x512xbf16>, vector<512x512xbf16>, vector<256x512xf32> -> vector<256x512xf32>
    %10 = arith.addf %5, %9 : vector<256x512xf32>
    %c0_5 = arith.constant 0 : index
    %c0_6 = arith.constant 0 : index
    %11 = vector.load %arg5[%c0_5, %c0_6] : memref<256x512xf32, #tpu.memory_space<vmem>>, vector<256x512xf32>
    tpu.vector_store %arg5[%c0_5, %c0_6], %10 {strides = array<i32>} : memref<256x512xf32, #tpu.memory_space<vmem>>, vector<256x512xf32>,
    %c0_i32_7 = arith.constant 0 : i32
    %12 = arith.cmpi eq, %arg1, %c0_i32_7 : i32
    %13 = arith.extui %12 : i1 to i32
    %c0_i32_8 = arith.constant 0 : i32
    %14 = arith.cmpi ne, %13, %c0_i32_8 : i32
    scf.if %14 {
      %c0_9 = arith.constant 0 : index
      %c0_10 = arith.constant 0 : index
      %15 = vector.load %arg5[%c0_9, %c0_10] : memref<256x512xf32, #tpu.memory_space<vmem>>, vector<256x512xf32>
      %c0_11 = arith.constant 0 : index
      %c0_12 = arith.constant 0 : index
      %16 = vector.load %arg4[%c0_11, %c0_12] : memref<1x512xf32, #tpu.memory_space<vmem>>, vector<1x512xf32>
      %17 = vector.broadcast %16 : vector<1x512xf32> to vector<256x512xf32>
      %18 = arith.addf %15, %17 : vector<256x512xf32>
      %c0_13 = arith.constant 0 : index
      %c0_14 = arith.constant 0 : index
      %19 = vector.load %arg5[%c0_13, %c0_14] : memref<256x512xf32, #tpu.memory_space<vmem>>, vector<256x512xf32>
      tpu.vector_store %arg5[%c0_13, %c0_14], %18 {strides = array<i32>} : memref<256x512xf32, #tpu.memory_space<vmem>>, vector<256x512xf32>,
    } else {
    }
    return
  }
  func.func @transform_0(%arg0: i32, %arg1: i32) -> (i32, i32) {
    %c0_i32 = arith.constant 0 : i32
    return %arg0, %arg1 : i32, i32
  }
  func.func @transform_1(%arg0: i32, %arg1: i32) -> (i32, i32) {
    %c0_i32 = arith.constant 0 : i32
    %c0_i32_0 = arith.constant 0 : i32
    %c0_i32_1 = arith.constant 0 : i32
    return %c0_i32, %c0_i32_0 : i32, i32
  }
  func.func @transform_2(%arg0: i32, %arg1: i32) -> (i32, i32) {
    %c0_i32 = arith.constant 0 : i32
    %c0_i32_0 = arith.constant 0 : i32
    %c0_i32_1 = arith.constant 0 : i32
    return %c0_i32, %c0_i32_0 : i32, i32
  }
  func.func @transform_3(%arg0: i32, %arg1: i32) -> (i32, i32) {
    %c0_i32 = arith.constant 0 : i32
    %c0_i32_0 = arith.constant 0 : i32
    return %arg0, %c0_i32 : i32, i32
  }
}

</mosaic_0001>

<llo_original>
// kernel: tpu_custom_call.1
$region0: #{tpu_custom_call.1}
  #allocation0 [shape = 'u32[]', space=smem, size = 0x4, offset = 0x4, fixed_abs, tag = 'smem constant byte address 0x4 - core index']
  #allocation1 [shape = 'u32[72,128]{1,0:T(1,128)}', space=vmem, size = 0x9000, scoped, tag = 'internal scratch']
  %s0 = inlined_call_operand.hbm [shape: bf16[512,512], index: 0, kind: input, shape index: {}]
  %s1 = inlined_call_operand.hbm [shape: bf16[512,512], index: 1, kind: input, shape index: {}]
  %s2 = inlined_call_operand.hbm [shape: f32[1,512], index: 2, kind: input, shape index: {}]
  %s3 = inlined_call_operand.hbm [shape: f32[512,512], index: 3, kind: output, shape index: {}]
  %s4 = sld [smem:[#allocation0]]
  $region65: #{tpu_custom_call.1} parent=0
    _
  %s6 = ssub.s32 1, %s4
  %s7 = scalar_select 0, %s6, %s4
  $region1: #{tpu_custom_call.1} parent=0
    #allocation2 [shape = 'u8[524288]{0}', space=vmem, size = 0x80000, scoped, tag = 'input window, operand 0']
    #allocation3 [shape = 's32[2]{0}', space=sflag, size = 0x8, scoped, tag = 'scoped memory for tpu_custom_call.1']
    #allocation4 [shape = 's32[2]{0}', space=sflag, size = 0x8, scoped, tag = 'scoped memory for tpu_custom_call.1']
    #allocation5 [shape = 'u8[524288]{0}', space=vmem, size = 0x80000, scoped, tag = 'input window, operand 1, single buffered']
    #allocation6 [shape = 's32[1]{0}', space=sflag, size = 0x4, scoped, tag = 'scoped memory for tpu_custom_call.1']
    #allocation7 [shape = 'u8[2048]{0}', space=vmem, size = 0x800, scoped, tag = 'input window, operand 2, single buffered']
    #allocation8 [shape = 'u8[1048576]{0}', space=vmem, size = 0x100000, scoped, tag = 'output window, operand 0']
    %8 = vsyncpa [#allocation3], 0
    %s9 = scalar_lea.sflag [#allocation3], 1
    %10 = vsyncpa %s9, 0
    %11 = vsyncpa [#allocation6], 0
    %12 = vsyncpa [#allocation4], 0
    %s13 = scalar_lea.sflag [#allocation4], 1
    %14 = vsyncpa %s13, 0
    loop: start=0, step=1, limit=4
    $region2: #{tpu_custom_call.1} parent=1 // loop_pre_header
      _
    $region3: #{tpu_custom_call.1} parent=1 // loop_header
      %s16 = sphi 0, %s20
      %p17 = scmp.ge.s32.totalorder %s16, 4
      %s23 = sphi 0, %s35
      %s24 = sphi 0, %s31
      %s25 = sphi 0, %s23
      %s26 = sphi 0, %s24
      %s27 = sphi 0, %s25
      %s28 = sphi 0, %s26
      %s40 = sphi 0, %s42
      %s43 = sphi 0, %s40
      %s44 = sphi 0, %s43
      %s60 = sphi 0, %s44
      %s64 = sphi 0, %s64
      %s66 = sphi 0, %s64
      %s67 = sphi 0, %s66
      %s81 = sphi 0, %s67
      %s85 = sphi 0, %s85
      %s87 = sphi 0, %s85
      %s88 = sphi 0, %s87
      %s102 = sphi 0, %s88
      %s108 = sphi 0, %s110
      %s111 = sphi 0, %s108
      %s112 = sphi 0, %s111
      %s128 = sphi 0, %s112
    $region4: #{tpu_custom_call.1} parent=1 // loop_header_branch
      %19 = sbr.rel (%p17) target = $region8
    $region5: #{tpu_custom_call.1} parent=1 // loop_body
      %s21 = ssub.s32 %s16, 1
      %s22 = ssub.s32 %s16, 2
      %s29 = sadd.s32 1, %s24
      %p30 = scmp.ge.s32.totalorder %s29, 1
      %s31 = scalar_select %p30, 0, %s29
      %s32 = sadd.s32 1, %s23
      %s33 = scalar_select %p30, %s32, %s23
      %p34 = scmp.ge.s32.totalorder %s33, 2
      %s35 = scalar_select %p34, 0, %s33
      %s36 = ssub.s32 %s23, %s35
      %s37 = ssub.s32 %s24, %s31
      %s38 = sor.u32 %s36, %s37
      %p39 = scmp.eq.s32.totalorder %s38, 0
      %s41 = sadd.s32 %s40, 1
      %s42 = scalar_select %p39, %s40, %s41
      %p45 = pneg %p39
      %p46 = scmp.eq.s32.totalorder %s16, 1
      %p47 = por %p45, %p46
      %p48 = scmp.ne.s32.totalorder %s40, %s43
      %p49 = scmp.eq.s32.totalorder %s16, 0
      %p50 = por %p48, %p49
      %p51 = scmp.ne.s32.totalorder %s40, %s43
      %p52 = scmp.eq.s32.totalorder %s21, 1
      %p53 = por %p51, %p52
      %p54 = scmp.ne.s32.totalorder %s43, %s44
      %p55 = scmp.eq.s32.totalorder %s21, 0
      %p56 = por %p54, %p55
      %p57 = scmp.ne.s32.totalorder %s43, %s44
      %p58 = scmp.eq.s32.totalorder %s22, 1
      %p59 = por %p57, %p58
      %p61 = scmp.ne.s32.totalorder %s44, %s60
      %p62 = scmp.eq.s32.totalorder %s22, 0
      %p63 = por %p61, %p62
      %s65 = sadd.s32 %s64, 1
      %p68 = scmp.eq.s32.totalorder %s16, 1
      %p69 = scmp.ne.s32.totalorder %s64, %s66
      %p70 = scmp.eq.s32.totalorder %s16, 0
      %p71 = por %p69, %p70
      %p72 = scmp.ne.s32.totalorder %s64, %s66
      %p73 = scmp.eq.s32.totalorder %s21, 1
      %p74 = por %p72, %p73
      %p75 = scmp.ne.s32.totalorder %s66, %s67
      %p76 = scmp.eq.s32.totalorder %s21, 0
      %p77 = por %p75, %p76
      %p78 = scmp.ne.s32.totalorder %s66, %s67
      %p79 = scmp.eq.s32.totalorder %s22, 1
      %p80 = por %p78, %p79
      %p82 = scmp.ne.s32.totalorder %s67, %s81
      %p83 = scmp.eq.s32.totalorder %s22, 0
      %p84 = por %p82, %p83
      %s86 = sadd.s32 %s85, 1
      %p89 = scmp.eq.s32.totalorder %s16, 1
      %p90 = scmp.ne.s32.totalorder %s85, %s87
      %p91 = scmp.eq.s32.totalorder %s16, 0
      %p92 = por %p90, %p91
      %p93 = scmp.ne.s32.totalorder %s85, %s87
      %p94 = scmp.eq.s32.totalorder %s21, 1
      %p95 = por %p93, %p94
      %p96 = scmp.ne.s32.totalorder %s87, %s88
      %p97 = scmp.eq.s32.totalorder %s21, 0
      %p98 = por %p96, %p97
      %p99 = scmp.ne.s32.totalorder %s87, %s88
      %p100 = scmp.eq.s32.totalorder %s22, 1
      %p101 = por %p99, %p100
      %p103 = scmp.ne.s32.totalorder %s88, %s102
      %p104 = scmp.eq.s32.totalorder %s22, 0
      %p105 = por %p103, %p104
      %s106 = ssub.s32 %s23, %s35
      %p107 = scmp.eq.s32.totalorder %s106, 0
      %s109 = sadd.s32 %s108, 1
      %s110 = scalar_select %p107, %s108, %s109
      %p113 = pneg %p107
      %p114 = scmp.eq.s32.totalorder %s16, 1
      %p115 = por %p113, %p114
      %p116 = scmp.ne.s32.totalorder %s108, %s111
      %p117 = scmp.eq.s32.totalorder %s16, 0
      %p118 = por %p116, %p117
      %p119 = scmp.ne.s32.totalorder %s108, %s111
      %p120 = scmp.eq.s32.totalorder %s21, 1
      %p121 = por %p119, %p120
      %p122 = scmp.ne.s32.totalorder %s111, %s112
      %p123 = scmp.eq.s32.totalorder %s21, 0
      %p124 = por %p122, %p123
      %p125 = scmp.ne.s32.totalorder %s111, %s112
      %p126 = scmp.eq.s32.totalorder %s22, 1
      %p127 = por %p125, %p126
      %p129 = scmp.ne.s32.totalorder %s112, %s128
      %p130 = scmp.eq.s32.totalorder %s22, 0
      %p131 = por %p129, %p130
      %p132 = scmp.le.s32.totalorder 1, %s16
      %p133 = scmp.lt.s32.totalorder %s16, 3
      %p134 = pnand %p132, %p133
      %p135 = pneg %p134
      // Predicated region
      $region9: #{tpu_custom_call.1} parent=5 // pred_check
        _
      $region10: #{tpu_custom_call.1} parent=5 // pred_check_branch
        %137 = sbr.rel (%p134) target = $region12
      $region11: #{tpu_custom_call.1} parent=5 // pred_region
        %s138 = ssub.s32 %s16, 1
        // Predicated region
        $region13: #{tpu_custom_call.1} parent=11 // pred_check
          %p139 = pneg %p77
        $region14: #{tpu_custom_call.1} parent=11 // pred_check_branch
          %141 = sbr.rel (%p139) target = $region16
        $region15: #{tpu_custom_call.1} parent=11 // pred_region
          %143 = vsyncadd [#allocation6], 0
          %s144 = sshll.u32 %s1, 4
          %s145 = int_to_ptr.hbm [resolvable:$true] %s144
          %s146 = sshll.u32 [#allocation5], 4
          %s147 = int_to_ptr.vmem [resolvable:$true] %s146
          %152 = dma.hbm_to_vmem [thread:$0]  %s145, 16384, %s147, [#allocation6], 256, 256, 16
        $region16: #{tpu_custom_call.1} parent=11 // pred_fallthru
          _
        // Predicated region
        $region17: #{tpu_custom_call.1} parent=11 // pred_check
          %p153 = pneg %p98
        $region18: #{tpu_custom_call.1} parent=11 // pred_check_branch
          %155 = sbr.rel (%p153) target = $region20
        $region19: #{tpu_custom_call.1} parent=11 // pred_region
          %157 = vsyncadd [#allocation6], 0
          %s159 = sshll.u32 %s2, 4
          %s160 = int_to_ptr.hbm [resolvable:$true] %s159
          %s161 = sshll.u32 [#allocation7], 4
          %s162 = int_to_ptr.vmem [resolvable:$true] %s161
          %164 = dma.hbm_to_vmem [thread:$0]  %s160, 64, %s162, [#allocation6]
        $region20: #{tpu_custom_call.1} parent=11 // pred_fallthru
          _
      $region12: #{tpu_custom_call.1} parent=5 // pred_fallthru
        _
      %p165 = scmp.lt.s32.totalorder %s16, 2
      // Predicated region
      $region21: #{tpu_custom_call.1} parent=5 // pred_check
        %p166 = pneg %p165
      $region22: #{tpu_custom_call.1} parent=5 // pred_check_branch
        %168 = sbr.rel (%p166) target = $region24
      $region23: #{tpu_custom_call.1} parent=5 // pred_region
        // Predicated region
        $region25: #{tpu_custom_call.1} parent=23 // pred_check
          %p169 = pneg %p50
        $region26: #{tpu_custom_call.1} parent=23 // pred_check_branch
          %171 = sbr.rel (%p169) target = $region28
        $region27: #{tpu_custom_call.1} parent=23 // pred_region
          %s172 = sand.u32 %s40, 1
          %s173 = scalar_lea.sflag [#allocation3], %s172
          %s174 = sand.u32 %s40, 1
          %s175 = smul.addr %s174, 512
          %s176 = scalar_lea.vmem [#allocation2], %s175
          %s177 = smul.u32 32, %s23
          %s178 = smul.u32 4, %s24
          %180 = vsyncadd %s173, 0
          %s181 = smul.addr %s177, 4
          %s182 = sadd.s32 %s178, %s181
          %s183 = smul.addr %s182, 4
          %s184 = scalar_lea.hbm %s0, %s183
          %s185 = sshll.u32 %s184, 4
          %s186 = int_to_ptr.hbm [resolvable:$true] %s185
          %s187 = sshll.u32 %s176, 4
          %s188 = int_to_ptr.vmem [resolvable:$true] %s187
          %193 = dma.hbm_to_vmem [thread:$0]  %s186, 8192, %s188, %s173, 256, 256, 16
        $region28: #{tpu_custom_call.1} parent=23 // pred_fallthru
          _
      $region24: #{tpu_custom_call.1} parent=5 // pred_fallthru
        _
      %p194 = scmp.le.s32.totalorder 1, %s16
      %p195 = scmp.lt.s32.totalorder %s16, 3
      %p196 = pnand %p194, %p195
      %p197 = pneg %p196
      // Predicated region
      $region29: #{tpu_custom_call.1} parent=5 // pred_check
        _
      $region30: #{tpu_custom_call.1} parent=5 // pred_check_branch
        %199 = sbr.rel (%p196) target = $region32
      $region31: #{tpu_custom_call.1} parent=5 // pred_region
        %s200 = ssub.s32 %s16, 1
        %s201 = sand.u32 %s43, 1
        %s202 = scalar_lea.sflag [#allocation3], %s201
        %s203 = sand.u32 %s43, 1
        %s204 = smul.addr %s203, 512
        %s205 = scalar_lea.vmem [#allocation2], %s204
        // Predicated region
        $region33: #{tpu_custom_call.1} parent=31 // pred_check
          %p206 = pneg %p56
        $region34: #{tpu_custom_call.1} parent=31 // pred_check_branch
          %208 = sbr.rel (%p206) target = $region36
        $region35: #{tpu_custom_call.1} parent=31 // pred_region
          %210 = dma.done %s202, 8192
        $region36: #{tpu_custom_call.1} parent=31 // pred_fallthru
          _
        // Predicated region
        $region37: #{tpu_custom_call.1} parent=31 // pred_check
          %p211 = pneg %p77
        $region38: #{tpu_custom_call.1} parent=31 // pred_check_branch
          %213 = sbr.rel (%p211) target = $region40
        $region39: #{tpu_custom_call.1} parent=31 // pred_region
          %215 = dma.done [#allocation6], 16384
        $region40: #{tpu_custom_call.1} parent=31 // pred_fallthru
          _
        // Predicated region
        $region41: #{tpu_custom_call.1} parent=31 // pred_check
          %p216 = pneg %p98
        $region42: #{tpu_custom_call.1} parent=31 // pred_check_branch
          %218 = sbr.rel (%p216) target = $region44
        $region43: #{tpu_custom_call.1} parent=31 // pred_region
          %220 = dma.done [#allocation6], 64
        $region44: #{tpu_custom_call.1} parent=31 // pred_fallthru
          _
        %s221 = sand.u32 %s43, 1
        %s222 = scalar_lea.sflag [#allocation3], %s221
        %s223 = sand.u32 %s43, 1
        %s224 = smul.addr %s223, 512
        %s225 = scalar_lea.vmem [#allocation2], %s224
        %p226 = pneg %p56
        %p227 = pneg %p53
        %p228 = pneg %p77
        %p229 = pneg %p74
        %p230 = pneg %p98
        %p231 = pneg %p95
        %p232 = pneg %p124
        %p233 = pneg %p121
        %s234 = sand.u32 %s111, 1
        %s235 = scalar_lea.sflag [#allocation4], %s234
        %s236 = sand.u32 %s111, 1
        %s237 = smul.addr %s236, 1024
        %s238 = scalar_lea.vmem [#allocation8], %s237
        %s239 = smul.u32 32, %s25
        %s240 = smul.u32 4, %s26
        %s241 = smul.u32 32, %s25
        %p242 = scmp.eq.s32.totalorder %s26, 0
        // Predicated region
        $region45: #{tpu_custom_call.1} parent=31 // pred_check
          %p243 = pneg %p242
        $region46: #{tpu_custom_call.1} parent=31 // pred_check_branch
          %245 = sbr.rel (%p243) target = $region48
        $region47: #{tpu_custom_call.1} parent=31 // pred_region
          %246 = vst [vmem:[%s238] sm:$0xff] 0.0
          %247 = vst [vmem:[%s238 + $0x8] sm:$0xff] 0.0
          %248 = vst [vmem:[%s238 + $0x10] sm:$0xff] 0.0
          %249 = vst [vmem:[%s238 + $0x18] sm:$0xff] 0.0
          %250 = vst [vmem:[%s238 + $0x20] sm:$0xff] 0.0
          %251 = vst [vmem:[%s238 + $0x28] sm:$0xff] 0.0
          %252 = vst [vmem:[%s238 + $0x30] sm:$0xff] 0.0
          %253 = vst [vmem:[%s238 + $0x38] sm:$0xff] 0.0
          %254 = vst [vmem:[%s238 + $0x40] sm:$0xff] 0.0
          %255 = vst [vmem:[%s238 + $0x48] sm:$0xff] 0.0
          %256 = vst [vmem:[%s238 + $0x50] sm:$0xff] 0.0
          %257 = vst [vmem:[%s238 + $0x58] sm:$0xff] 0.0
          %258 = vst [vmem:[%s238 + $0x60] sm:$0xff] 0.0
          %259 = vst [vmem:[%s238 + $0x68] sm:$0xff] 0.0
          %260 = vst [vmem:[%s238 + $0x70] sm:$0xff] 0.0
          %261 = vst [vmem:[%s238 + $0x78] sm:$0xff] 0.0
          %262 = vst [vmem:[%s238 + $0x80] sm:$0xff] 0.0
          %263 = vst [vmem:[%s238 + $0x88] sm:$0xff] 0.0
          %264 = vst [vmem:[%s238 + $0x90] sm:$0xff] 0.0
          %265 = vst [vmem:[%s238 + $0x98] sm:$0xff] 0.0
          %266 = vst [vmem:[%s238 + $0xa0] sm:$0xff] 0.0
          %267 = vst [vmem:[%s238 + $0xa8] sm:$0xff] 0.0
          %268 = vst [vmem:[%s238 + $0xb0] sm:$0xff] 0.0
          %269 = vst [vmem:[%s238 + $0xb8] sm:$0xff] 0.0
          %270 = vst [vmem:[%s238 + $0xc0] sm:$0xff] 0.0
          %271 = vst [vmem:[%s238 + $0xc8] sm:$0xff] 0.0
          %272 = vst [vmem:[%s238 + $0xd0] sm:$0xff] 0.0
          %273 = vst [vmem:[%s238 + $0xd8] sm:$0xff] 0.0
          %274 = vst [vmem:[%s238 + $0xe0] sm:$0xff] 0.0
          %275 = vst [vmem:[%s238 + $0xe8] sm:$0xff] 0.0
          %276 = vst [vmem:[%s238 + $0xf0] sm:$0xff] 0.0
          %277 = vst [vmem:[%s238 + $0xf8] sm:$0xff] 0.0
          %278 = vst [vmem:[%s238 + $0x100] sm:$0xff] 0.0
          %279 = vst [vmem:[%s238 + $0x108] sm:$0xff] 0.0
          %280 = vst [vmem:[%s238 + $0x110] sm:$0xff] 0.0
          %281 = vst [vmem:[%s238 + $0x118] sm:$0xff] 0.0
          %282 = vst [vmem:[%s238 + $0x120] sm:$0xff] 0.0
          %283 = vst [vmem:[%s238 + $0x128] sm:$0xff] 0.0
          %284 = vst [vmem:[%s238 + $0x130] sm:$0xff] 0.0
          %285 = vst [vmem:[%s238 + $0x138] sm:$0xff] 0.0
          %286 = vst [vmem:[%s238 + $0x140] sm:$0xff] 0.0
          %287 = vst [vmem:[%s238 + $0x148] sm:$0xff] 0.0
          %288 = vst [vmem:[%s238 + $0x150] sm:$0xff] 0.0
          %289 = vst [vmem:[%s238 + $0x158] sm:$0xff] 0.0
          %290 = vst [vmem:[%s238 + $0x160] sm:$0xff] 0.0
          %291 = vst [vmem:[%s238 + $0x168] sm:$0xff] 0.0
          %292 = vst [vmem:[%s238 + $0x170] sm:$0xff] 0.0
          %293 = vst [vmem:[%s238 + $0x178] sm:$0xff] 0.0
          %294 = vst [vmem:[%s238 + $0x180] sm:$0xff] 0.0
          %295 = vst [vmem:[%s238 + $0x188] sm:$0xff] 0.0
          %296 = vst [vmem:[%s238 + $0x190] sm:$0xff] 0.0
          %297 = vst [vmem:[%s238 + $0x198] sm:$0xff] 0.0
          %298 = vst [vmem:[%s238 + $0x1a0] sm:$0xff] 0.0
          %299 = vst [vmem:[%s238 + $0x1a8] sm:$0xff] 0.0
          %300 = vst [vmem:[%s238 + $0x1b0] sm:$0xff] 0.0
          %301 = vst [vmem:[%s238 + $0x1b8] sm:$0xff] 0.0
          %302 = vst [vmem:[%s238 + $0x1c0] sm:$0xff] 0.0
          %303 = vst [vmem:[%s238 + $0x1c8] sm:$0xff] 0.0
          %304 = vst [vmem:[%s238 + $0x1d0] sm:$0xff] 0.0
          %305 = vst [vmem:[%s238 + $0x1d8] sm:$0xff] 0.0
          %306 = vst [vmem:[%s238 + $0x1e0] sm:$0xff] 0.0
          %307 = vst [vmem:[%s238 + $0x1e8] sm:$0xff] 0.0
          %308 = vst [vmem:[%s238 + $0x1f0] sm:$0xff] 0.0
          %309 = vst [vmem:[%s238 + $0x1f8] sm:$0xff] 0.0
          %310 = vst [vmem:[%s238 + $0x200] sm:$0xff] 0.0
          %311 = vst [vmem:[%s238 + $0x208] sm:$0xff] 0.0
          %312 = vst [vmem:[%s238 + $0x210] sm:$0xff] 0.0
          %313 = vst [vmem:[%s238 + $0x218] sm:$0xff] 0.0
          %314 = vst [vmem:[%s238 + $0x220] sm:$0xff] 0.0
          %315 = vst [vmem:[%s238 + $0x228] sm:$0xff] 0.0
          %316 = vst [vmem:[%s238 + $0x230] sm:$0xff] 0.0
          %317 = vst [vmem:[%s238 + $0x238] sm:$0xff] 0.0
          %318 = vst [vmem:[%s238 + $0x240] sm:$0xff] 0.0
          %319 = vst [vmem:[%s238 + $0x248] sm:$0xff] 0.0
          %320 = vst [vmem:[%s238 + $0x250] sm:$0xff] 0.0
          %321 = vst [vmem:[%s238 + $0x258] sm:$0xff] 0.0
          %322 = vst [vmem:[%s238 + $0x260] sm:$0xff] 0.0
          %323 = vst [vmem:[%s238 + $0x268] sm:$0xff] 0.0
          %324 = vst [vmem:[%s238 + $0x270] sm:$0xff] 0.0
          %325 = vst [vmem:[%s238 + $0x278] sm:$0xff] 0.0
          %326 = vst [vmem:[%s238 + $0x280] sm:$0xff] 0.0
          %327 = vst [vmem:[%s238 + $0x288] sm:$0xff] 0.0
          %328 = vst [vmem:[%s238 + $0x290] sm:$0xff] 0.0
          %329 = vst [vmem:[%s238 + $0x298] sm:$0xff] 0.0
          %330 = vst [vmem:[%s238 + $0x2a0] sm:$0xff] 0.0
          %331 = vst [vmem:[%s238 + $0x2a8] sm:$0xff] 0.0
          %332 = vst [vmem:[%s238 + $0x2b0] sm:$0xff] 0.0
          %333 = vst [vmem:[%s238 + $0x2b8] sm:$0xff] 0.0
          %334 = vst [vmem:[%s238 + $0x2c0] sm:$0xff] 0.0
          %335 = vst [vmem:[%s238 + $0x2c8] sm:$0xff] 0.0
          %336 = vst [vmem:[%s238 + $0x2d0] sm:$0xff] 0.0
          %337 = vst [vmem:[%s238 + $0x2d8] sm:$0xff] 0.0
          %338 = vst [vmem:[%s238 + $0x2e0] sm:$0xff] 0.0
          %339 = vst [vmem:[%s238 + $0x2e8] sm:$0xff] 0.0
          %340 = vst [vmem:[%s238 + $0x2f0] sm:$0xff] 0.0
          %341 = vst [vmem:[%s238 + $0x2f8] sm:$0xff] 0.0
          %342 = vst [vmem:[%s238 + $0x300] sm:$0xff] 0.0
          %343 = vst [vmem:[%s238 + $0x308] sm:$0xff] 0.0
          %344 = vst [vmem:[%s238 + $0x310] sm:$0xff] 0.0
          %345 = vst [vmem:[%s238 + $0x318] sm:$0xff] 0.0
          %346 = vst [vmem:[%s238 + $0x320] sm:$0xff] 0.0
          %347 = vst [vmem:[%s238 + $0x328] sm:$0xff] 0.0
          %348 = vst [vmem:[%s238 + $0x330] sm:$0xff] 0.0
          %349 = vst [vmem:[%s238 + $0x338] sm:$0xff] 0.0
          %350 = vst [vmem:[%s238 + $0x340] sm:$0xff] 0.0
          %351 = vst [vmem:[%s238 + $0x348] sm:$0xff] 0.0
          %352 = vst [vmem:[%s238 + $0x350] sm:$0xff] 0.0
          %353 = vst [vmem:[%s238 + $0x358] sm:$0xff] 0.0
          %354 = vst [vmem:[%s238 + $0x360] sm:$0xff] 0.0
          %355 = vst [vmem:[%s238 + $0x368] sm:$0xff] 0.0
          %356 = vst [vmem:[%s238 + $0x370] sm:$0xff] 0.0
          %357 = vst [vmem:[%s238 + $0x378] sm:$0xff] 0.0
          %358 = vst [vmem:[%s238 + $0x380] sm:$0xff] 0.0
          %359 = vst [vmem:[%s238 + $0x388] sm:$0xff] 0.0
          %360 = vst [vmem:[%s238 + $0x390] sm:$0xff] 0.0
          %361 = vst [vmem:[%s238 + $0x398] sm:$0xff] 0.0
          %362 = vst [vmem:[%s238 + $0x3a0] sm:$0xff] 0.0
          %363 = vst [vmem:[%s238 + $0x3a8] sm:$0xff] 0.0
          %364 = vst [vmem:[%s238 + $0x3b0] sm:$0xff] 0.0
          %365 = vst [vmem:[%s238 + $0x3b8] sm:$0xff] 0.0
          %366 = vst [vmem:[%s238 + $0x3c0] sm:$0xff] 0.0
          %367 = vst [vmem:[%s238 + $0x3c8] sm:$0xff] 0.0
          %368 = vst [vmem:[%s238 + $0x3d0] sm:$0xff] 0.0
          %369 = vst [vmem:[%s238 + $0x3d8] sm:$0xff] 0.0
          %370 = vst [vmem:[%s238 + $0x3e0] sm:$0xff] 0.0
          %371 = vst [vmem:[%s238 + $0x3e8] sm:$0xff] 0.0
          %372 = vst [vmem:[%s238 + $0x3f0] sm:$0xff] 0.0
          %373 = vst [vmem:[%s238 + $0x3f8] sm:$0xff] 0.0
        $region48: #{tpu_custom_call.1} parent=31 // pred_fallthru
          _
        %s374 = smul.u32 %s26, 512
        %v375 = vld [vmem:[%s238] sm:$0xff]
        %v376 = vld [vmem:[%s238 + $0x8] sm:$0xff]
        %v377 = vld [vmem:[%s238 + $0x10] sm:$0xff]
        %v378 = vld [vmem:[%s238 + $0x18] sm:$0xff]
        %v379 = vld [vmem:[%s238 + $0x20] sm:$0xff]
        %v380 = vld [vmem:[%s238 + $0x28] sm:$0xff]
        %v381 = vld [vmem:[%s238 + $0x30] sm:$0xff]
        %v382 = vld [vmem:[%s238 + $0x38] sm:$0xff]
        %v383 = vld [vmem:[%s238 + $0x40] sm:$0xff]
        %v384 = vld [vmem:[%s238 + $0x48] sm:$0xff]
        %v385 = vld [vmem:[%s238 + $0x50] sm:$0xff]
        %v386 = vld [vmem:[%s238 + $0x58] sm:$0xff]
        %v387 = vld [vmem:[%s238 + $0x60] sm:$0xff]
        %v388 = vld [vmem:[%s238 + $0x68] sm:$0xff]
        %v389 = vld [vmem:[%s238 + $0x70] sm:$0xff]
        %v390 = vld [vmem:[%s238 + $0x78] sm:$0xff]
        %v391 = vld [vmem:[%s238 + $0x80] sm:$0xff]
        %v392 = vld [vmem:[%s238 + $0x88] sm:$0xff]
        %v393 = vld [vmem:[%s238 + $0x90] sm:$0xff]
        %v394 = vld [vmem:[%s238 + $0x98] sm:$0xff]
        %v395 = vld [vmem:[%s238 + $0xa0] sm:$0xff]
        %v396 = vld [vmem:[%s238 + $0xa8] sm:$0xff]
        %v397 = vld [vmem:[%s238 + $0xb0] sm:$0xff]
        %v398 = vld [vmem:[%s238 + $0xb8] sm:$0xff]
        %v399 = vld [vmem:[%s238 + $0xc0] sm:$0xff]
        %v400 = vld [vmem:[%s238 + $0xc8] sm:$0xff]
        %v401 = vld [vmem:[%s238 + $0xd0] sm:$0xff]
        %v402 = vld [vmem:[%s238 + $0xd8] sm:$0xff]
        %v403 = vld [vmem:[%s238 + $0xe0] sm:$0xff]
        %v404 = vld [vmem:[%s238 + $0xe8] sm:$0xff]
        %v405 = vld [vmem:[%s238 + $0xf0] sm:$0xff]
        %v406 = vld [vmem:[%s238 + $0xf8] sm:$0xff]
        %v407 = vld [vmem:[%s238 + $0x100] sm:$0xff]
        %v408 = vld [vmem:[%s238 + $0x108] sm:$0xff]
        %v409 = vld [vmem:[%s238 + $0x110] sm:$0xff]
        %v410 = vld [vmem:[%s238 + $0x118] sm:$0xff]
        %v411 = vld [vmem:[%s238 + $0x120] sm:$0xff]
        %v412 = vld [vmem:[%s238 + $0x128] sm:$0xff]
        %v413 = vld [vmem:[%s238 + $0x130] sm:$0xff]
        %v414 = vld [vmem:[%s238 + $0x138] sm:$0xff]
        %v415 = vld [vmem:[%s238 + $0x140] sm:$0xff]
        %v416 = vld [vmem:[%s238 + $0x148] sm:$0xff]
        %v417 = vld [vmem:[%s238 + $0x150] sm:$0xff]
        %v418 = vld [vmem:[%s238 + $0x158] sm:$0xff]
        %v419 = vld [vmem:[%s238 + $0x160] sm:$0xff]
        %v420 = vld [vmem:[%s238 + $0x168] sm:$0xff]
        %v421 = vld [vmem:[%s238 + $0x170] sm:$0xff]
        %v422 = vld [vmem:[%s238 + $0x178] sm:$0xff]
        %v423 = vld [vmem:[%s238 + $0x180] sm:$0xff]
        %v424 = vld [vmem:[%s238 + $0x188] sm:$0xff]
        %v425 = vld [vmem:[%s238 + $0x190] sm:$0xff]
        %v426 = vld [vmem:[%s238 + $0x198] sm:$0xff]
        %v427 = vld [vmem:[%s238 + $0x1a0] sm:$0xff]
        %v428 = vld [vmem:[%s238 + $0x1a8] sm:$0xff]
        %v429 = vld [vmem:[%s238 + $0x1b0] sm:$0xff]
        %v430 = vld [vmem:[%s238 + $0x1b8] sm:$0xff]
        %v431 = vld [vmem:[%s238 + $0x1c0] sm:$0xff]
        %v432 = vld [vmem:[%s238 + $0x1c8] sm:$0xff]
        %v433 = vld [vmem:[%s238 + $0x1d0] sm:$0xff]
        %v434 = vld [vmem:[%s238 + $0x1d8] sm:$0xff]
        %v435 = vld [vmem:[%s238 + $0x1e0] sm:$0xff]
        %v436 = vld [vmem:[%s238 + $0x1e8] sm:$0xff]
        %v437 = vld [vmem:[%s238 + $0x1f0] sm:$0xff]
        %v438 = vld [vmem:[%s238 + $0x1f8] sm:$0xff]
        %v439 = vld [vmem:[%s238 + $0x200] sm:$0xff]
        %v440 = vld [vmem:[%s238 + $0x208] sm:$0xff]
        %v441 = vld [vmem:[%s238 + $0x210] sm:$0xff]
        %v442 = vld [vmem:[%s238 + $0x218] sm:$0xff]
        %v443 = vld [vmem:[%s238 + $0x220] sm:$0xff]
        %v444 = vld [vmem:[%s238 + $0x228] sm:$0xff]
        %v445 = vld [vmem:[%s238 + $0x230] sm:$0xff]
        %v446 = vld [vmem:[%s238 + $0x238] sm:$0xff]
        %v447 = vld [vmem:[%s238 + $0x240] sm:$0xff]
        %v448 = vld [vmem:[%s238 + $0x248] sm:$0xff]
        %v449 = vld [vmem:[%s238 + $0x250] sm:$0xff]
        %v450 = vld [vmem:[%s238 + $0x258] sm:$0xff]
        %v451 = vld [vmem:[%s238 + $0x260] sm:$0xff]
        %v452 = vld [vmem:[%s238 + $0x268] sm:$0xff]
        %v453 = vld [vmem:[%s238 + $0x270] sm:$0xff]
        %v454 = vld [vmem:[%s238 + $0x278] sm:$0xff]
        %v455 = vld [vmem:[%s238 + $0x280] sm:$0xff]
        %v456 = vld [vmem:[%s238 + $0x288] sm:$0xff]
        %v457 = vld [vmem:[%s238 + $0x290] sm:$0xff]
        %v458 = vld [vmem:[%s238 + $0x298] sm:$0xff]
        %v459 = vld [vmem:[%s238 + $0x2a0] sm:$0xff]
        %v460 = vld [vmem:[%s238 + $0x2a8] sm:$0xff]
        %v461 = vld [vmem:[%s238 + $0x2b0] sm:$0xff]
        %v462 = vld [vmem:[%s238 + $0x2b8] sm:$0xff]
        %v463 = vld [vmem:[%s238 + $0x2c0] sm:$0xff]
        %v464 = vld [vmem:[%s238 + $0x2c8] sm:$0xff]
        %v465 = vld [vmem:[%s238 + $0x2d0] sm:$0xff]
        %v466 = vld [vmem:[%s238 + $0x2d8] sm:$0xff]
        %v467 = vld [vmem:[%s238 + $0x2e0] sm:$0xff]
        %v468 = vld [vmem:[%s238 + $0x2e8] sm:$0xff]
        %v469 = vld [vmem:[%s238 + $0x2f0] sm:$0xff]
        %v470 = vld [vmem:[%s238 + $0x2f8] sm:$0xff]
        %v471 = vld [vmem:[%s238 + $0x300] sm:$0xff]
        %v472 = vld [vmem:[%s238 + $0x308] sm:$0xff]
        %v473 = vld [vmem:[%s238 + $0x310] sm:$0xff]
        %v474 = vld [vmem:[%s238 + $0x318] sm:$0xff]
        %v475 = vld [vmem:[%s238 + $0x320] sm:$0xff]
        %v476 = vld [vmem:[%s238 + $0x328] sm:$0xff]
        %v477 = vld [vmem:[%s238 + $0x330] sm:$0xff]
        %v478 = vld [vmem:[%s238 + $0x338] sm:$0xff]
        %v479 = vld [vmem:[%s238 + $0x340] sm:$0xff]
        %v480 = vld [vmem:[%s238 + $0x348] sm:$0xff]
        %v481 = vld [vmem:[%s238 + $0x350] sm:$0xff]
        %v482 = vld [vmem:[%s238 + $0x358] sm:$0xff]
        %v483 = vld [vmem:[%s238 + $0x360] sm:$0xff]
        %v484 = vld [vmem:[%s238 + $0x368] sm:$0xff]
        %v485 = vld [vmem:[%s238 + $0x370] sm:$0xff]
        %v486 = vld [vmem:[%s238 + $0x378] sm:$0xff]
        %v487 = vld [vmem:[%s238 + $0x380] sm:$0xff]
        %v488 = vld [vmem:[%s238 + $0x388] sm:$0xff]
        %v489 = vld [vmem:[%s238 + $0x390] sm:$0xff]
        %v490 = vld [vmem:[%s238 + $0x398] sm:$0xff]
        %v491 = vld [vmem:[%s238 + $0x3a0] sm:$0xff]
        %v492 = vld [vmem:[%s238 + $0x3a8] sm:$0xff]
        %v493 = vld [vmem:[%s238 + $0x3b0] sm:$0xff]
        %v494 = vld [vmem:[%s238 + $0x3b8] sm:$0xff]
        %v495 = vld [vmem:[%s238 + $0x3c0] sm:$0xff]
        %v496 = vld [vmem:[%s238 + $0x3c8] sm:$0xff]
        %v497 = vld [vmem:[%s238 + $0x3d0] sm:$0xff]
        %v498 = vld [vmem:[%s238 + $0x3d8] sm:$0xff]
        %v499 = vld [vmem:[%s238 + $0x3e0] sm:$0xff]
        %v500 = vld [vmem:[%s238 + $0x3e8] sm:$0xff]
        %v501 = vld [vmem:[%s238 + $0x3f0] sm:$0xff]
        %v502 = vld [vmem:[%s238 + $0x3f8] sm:$0xff]
        %v503 = vld [vmem:[%s205] sm:$0xff]
        %v504 = vld [vmem:[%s205 + $0x8] sm:$0xff]
        %v505 = vld [vmem:[%s205 + $0x10] sm:$0xff]
        %v506 = vld [vmem:[%s205 + $0x18] sm:$0xff]
        %v507 = vld [vmem:[%s205 + $0x20] sm:$0xff]
        %v508 = vld [vmem:[%s205 + $0x28] sm:$0xff]
        %v509 = vld [vmem:[%s205 + $0x30] sm:$0xff]
        %v510 = vld [vmem:[%s205 + $0x38] sm:$0xff]
        %v511 = vld [vmem:[%s205 + $0x40] sm:$0xff]
        %v512 = vld [vmem:[%s205 + $0x48] sm:$0xff]
        %v513 = vld [vmem:[%s205 + $0x50] sm:$0xff]
        %v514 = vld [vmem:[%s205 + $0x58] sm:$0xff]
        %v515 = vld [vmem:[%s205 + $0x60] sm:$0xff]
        %v516 = vld [vmem:[%s205 + $0x68] sm:$0xff]
        %v517 = vld [vmem:[%s205 + $0x70] sm:$0xff]
        %v518 = vld [vmem:[%s205 + $0x78] sm:$0xff]
        %v519 = vld [vmem:[%s205 + $0x80] sm:$0xff]
        %v520 = vld [vmem:[%s205 + $0x88] sm:$0xff]
        %v521 = vld [vmem:[%s205 + $0x90] sm:$0xff]
        %v522 = vld [vmem:[%s205 + $0x98] sm:$0xff]
        %v523 = vld [vmem:[%s205 + $0xa0] sm:$0xff]
        %v524 = vld [vmem:[%s205 + $0xa8] sm:$0xff]
        %v525 = vld [vmem:[%s205 + $0xb0] sm:$0xff]
        %v526 = vld [vmem:[%s205 + $0xb8] sm:$0xff]
        %v527 = vld [vmem:[%s205 + $0xc0] sm:$0xff]
        %v528 = vld [vmem:[%s205 + $0xc8] sm:$0xff]
        %v529 = vld [vmem:[%s205 + $0xd0] sm:$0xff]
        %v530 = vld [vmem:[%s205 + $0xd8] sm:$0xff]
        %v531 = vld [vmem:[%s205 + $0xe0] sm:$0xff]
        %v532 = vld [vmem:[%s205 + $0xe8] sm:$0xff]
        %v533 = vld [vmem:[%s205 + $0xf0] sm:$0xff]
        %v534 = vld [vmem:[%s205 + $0xf8] sm:$0xff]
        %v535 = vld [vmem:[%s205 + $0x100] sm:$0xff]
        %v536 = vld [vmem:[%s205 + $0x108] sm:$0xff]
        %v537 = vld [vmem:[%s205 + $0x110] sm:$0xff]
        %v538 = vld [vmem:[%s205 + $0x118] sm:$0xff]
        %v539 = vld [vmem:[%s205 + $0x120] sm:$0xff]
        %v540 = vld [vmem:[%s205 + $0x128] sm:$0xff]
        %v541 = vld [vmem:[%s205 + $0x130] sm:$0xff]
        %v542 = vld [vmem:[%s205 + $0x138] sm:$0xff]
        %v543 = vld [vmem:[%s205 + $0x140] sm:$0xff]
        %v544 = vld [vmem:[%s205 + $0x148] sm:$0xff]
        %v545 = vld [vmem:[%s205 + $0x150] sm:$0xff]
        %v546 = vld [vmem:[%s205 + $0x158] sm:$0xff]
        %v547 = vld [vmem:[%s205 + $0x160] sm:$0xff]
        %v548 = vld [vmem:[%s205 + $0x168] sm:$0xff]
        %v549 = vld [vmem:[%s205 + $0x170] sm:$0xff]
        %v550 = vld [vmem:[%s205 + $0x178] sm:$0xff]
        %v551 = vld [vmem:[%s205 + $0x180] sm:$0xff]
        %v552 = vld [vmem:[%s205 + $0x188] sm:$0xff]
        %v553 = vld [vmem:[%s205 + $0x190] sm:$0xff]
        %v554 = vld [vmem:[%s205 + $0x198] sm:$0xff]
        %v555 = vld [vmem:[%s205 + $0x1a0] sm:$0xff]
        %v556 = vld [vmem:[%s205 + $0x1a8] sm:$0xff]
        %v557 = vld [vmem:[%s205 + $0x1b0] sm:$0xff]
        %v558 = vld [vmem:[%s205 + $0x1b8] sm:$0xff]
        %v559 = vld [vmem:[%s205 + $0x1c0] sm:$0xff]
        %v560 = vld [vmem:[%s205 + $0x1c8] sm:$0xff]
        %v561 = vld [vmem:[%s205 + $0x1d0] sm:$0xff]
        %v562 = vld [vmem:[%s205 + $0x1d8] sm:$0xff]
        %v563 = vld [vmem:[%s205 + $0x1e0] sm:$0xff]
        %v564 = vld [vmem:[%s205 + $0x1e8] sm:$0xff]
        %v565 = vld [vmem:[%s205 + $0x1f0] sm:$0xff]
        %v566 = vld [vmem:[%s205 + $0x1f8] sm:$0xff]
        %s567 = sshra.s32 %s374, 3
        %s568 = sand.u32 %s374, 7
        %s569 = smul.u32 %s567, 4
        %s570 = smul.addr %s569, 4
        %s571 = scalar_lea.vmem [#allocation5], %s570
        %v572 = vld [vmem:[%s571] sm:$0xff]
        %v573 = vld [vmem:[%s571 + $0x8] sm:$0xff]
        %v574 = vld [vmem:[%s571 + $0x10] sm:$0xff]
        %v575 = vld [vmem:[%s571 + $0x18] sm:$0xff]
        %v576 = vld [vmem:[%s571 + $0x20] sm:$0xff]
        %v577 = vld [vmem:[%s571 + $0x28] sm:$0xff]
        %v578 = vld [vmem:[%s571 + $0x30] sm:$0xff]
        %v579 = vld [vmem:[%s571 + $0x38] sm:$0xff]
        %v580 = vld [vmem:[%s571 + $0x40] sm:$0xff]
        %v581 = vld [vmem:[%s571 + $0x48] sm:$0xff]
        %v582 = vld [vmem:[%s571 + $0x50] sm:$0xff]
        %v583 = vld [vmem:[%s571 + $0x58] sm:$0xff]
        %v584 = vld [vmem:[%s571 + $0x60] sm:$0xff]
        %v585 = vld [vmem:[%s571 + $0x68] sm:$0xff]
        %v586 = vld [vmem:[%s571 + $0x70] sm:$0xff]
        %v587 = vld [vmem:[%s571 + $0x78] sm:$0xff]
        %v588 = vld [vmem:[%s571 + $0x80] sm:$0xff]
        %v589 = vld [vmem:[%s571 + $0x88] sm:$0xff]
        %v590 = vld [vmem:[%s571 + $0x90] sm:$0xff]
        %v591 = vld [vmem:[%s571 + $0x98] sm:$0xff]
        %v592 = vld [vmem:[%s571 + $0xa0] sm:$0xff]
        %v593 = vld [vmem:[%s571 + $0xa8] sm:$0xff]
        %v594 = vld [vmem:[%s571 + $0xb0] sm:$0xff]
        %v595 = vld [vmem:[%s571 + $0xb8] sm:$0xff]
        %v596 = vld [vmem:[%s571 + $0xc0] sm:$0xff]
        %v597 = vld [vmem:[%s571 + $0xc8] sm:$0xff]
        %v598 = vld [vmem:[%s571 + $0xd0] sm:$0xff]
        %v599 = vld [vmem:[%s571 + $0xd8] sm:$0xff]
        %v600 = vld [vmem:[%s571 + $0xe0] sm:$0xff]
        %v601 = vld [vmem:[%s571 + $0xe8] sm:$0xff]
        %v602 = vld [vmem:[%s571 + $0xf0] sm:$0xff]
        %v603 = vld [vmem:[%s571 + $0xf8] sm:$0xff]
        %v604 = vld [vmem:[%s571 + $0x100] sm:$0xff]
        %v605 = vld [vmem:[%s571 + $0x108] sm:$0xff]
        %v606 = vld [vmem:[%s571 + $0x110] sm:$0xff]
        %v607 = vld [vmem:[%s571 + $0x118] sm:$0xff]
        %v608 = vld [vmem:[%s571 + $0x120] sm:$0xff]
        %v609 = vld [vmem:[%s571 + $0x128] sm:$0xff]
        %v610 = vld [vmem:[%s571 + $0x130] sm:$0xff]
        %v611 = vld [vmem:[%s571 + $0x138] sm:$0xff]
        %v612 = vld [vmem:[%s571 + $0x140] sm:$0xff]
        %v613 = vld [vmem:[%s571 + $0x148] sm:$0xff]
        %v614 = vld [vmem:[%s571 + $0x150] sm:$0xff]
        %v615 = vld [vmem:[%s571 + $0x158] sm:$0xff]
        %v616 = vld [vmem:[%s571 + $0x160] sm:$0xff]
        %v617 = vld [vmem:[%s571 + $0x168] sm:$0xff]
        %v618 = vld [vmem:[%s571 + $0x170] sm:$0xff]
        %v619 = vld [vmem:[%s571 + $0x178] sm:$0xff]
        %v620 = vld [vmem:[%s571 + $0x180] sm:$0xff]
        %v621 = vld [vmem:[%s571 + $0x188] sm:$0xff]
        %v622 = vld [vmem:[%s571 + $0x190] sm:$0xff]
        %v623 = vld [vmem:[%s571 + $0x198] sm:$0xff]
        %v624 = vld [vmem:[%s571 + $0x1a0] sm:$0xff]
        %v625 = vld [vmem:[%s571 + $0x1a8] sm:$0xff]
        %v626 = vld [vmem:[%s571 + $0x1b0] sm:$0xff]
        %v627 = vld [vmem:[%s571 + $0x1b8] sm:$0xff]
        %v628 = vld [vmem:[%s571 + $0x1c0] sm:$0xff]
        %v629 = vld [vmem:[%s571 + $0x1c8] sm:$0xff]
        %v630 = vld [vmem:[%s571 + $0x1d0] sm:$0xff]
        %v631 = vld [vmem:[%s571 + $0x1d8] sm:$0xff]
        %v632 = vld [vmem:[%s571 + $0x1e0] sm:$0xff]
        %v633 = vld [vmem:[%s571 + $0x1e8] sm:$0xff]
        %v634 = vld [vmem:[%s571 + $0x1f0] sm:$0xff]
        %v635 = vld [vmem:[%s571 + $0x1f8] sm:$0xff]
        %v636 = vld [vmem:[%s571 + $0x200] sm:$0xff]
        %v637 = vld [vmem:[%s571 + $0x208] sm:$0xff]
        %v638 = vld [vmem:[%s571 + $0x210] sm:$0xff]
        %v639 = vld [vmem:[%s571 + $0x218] sm:$0xff]
        %v640 = vld [vmem:[%s571 + $0x220] sm:$0xff]
        %v641 = vld [vmem:[%s571 + $0x228] sm:$0xff]
        %v642 = vld [vmem:[%s571 + $0x230] sm:$0xff]
        %v643 = vld [vmem:[%s571 + $0x238] sm:$0xff]
        %v644 = vld [vmem:[%s571 + $0x240] sm:$0xff]
        %v645 = vld [vmem:[%s571 + $0x248] sm:$0xff]
        %v646 = vld [vmem:[%s571 + $0x250] sm:$0xff]
        %v647 = vld [vmem:[%s571 + $0x258] sm:$0xff]
        %v648 = vld [vmem:[%s571 + $0x260] sm:$0xff]
        %v649 = vld [vmem:[%s571 + $0x268] sm:$0xff]
        %v650 = vld [vmem:[%s571 + $0x270] sm:$0xff]
        %v651 = vld [vmem:[%s571 + $0x278] sm:$0xff]
        %v652 = vld [vmem:[%s571 + $0x280] sm:$0xff]
        %v653 = vld [vmem:[%s571 + $0x288] sm:$0xff]
        %v654 = vld [vmem:[%s571 + $0x290] sm:$0xff]
        %v655 = vld [vmem:[%s571 + $0x298] sm:$0xff]
        %v656 = vld [vmem:[%s571 + $0x2a0] sm:$0xff]
        %v657 = vld [vmem:[%s571 + $0x2a8] sm:$0xff]
        %v658 = vld [vmem:[%s571 + $0x2b0] sm:$0xff]
        %v659 = vld [vmem:[%s571 + $0x2b8] sm:$0xff]
        %v660 = vld [vmem:[%s571 + $0x2c0] sm:$0xff]
        %v661 = vld [vmem:[%s571 + $0x2c8] sm:$0xff]
        %v662 = vld [vmem:[%s571 + $0x2d0] sm:$0xff]
        %v663 = vld [vmem:[%s571 + $0x2d8] sm:$0xff]
        %v664 = vld [vmem:[%s571 + $0x2e0] sm:$0xff]
        %v665 = vld [vmem:[%s571 + $0x2e8] sm:$0xff]
        %v666 = vld [vmem:[%s571 + $0x2f0] sm:$0xff]
        %v667 = vld [vmem:[%s571 + $0x2f8] sm:$0xff]
        %v668 = vld [vmem:[%s571 + $0x300] sm:$0xff]
        %v669 = vld [vmem:[%s571 + $0x308] sm:$0xff]
        %v670 = vld [vmem:[%s571 + $0x310] sm:$0xff]
        %v671 = vld [vmem:[%s571 + $0x318] sm:$0xff]
        %v672 = vld [vmem:[%s571 + $0x320] sm:$0xff]
        %v673 = vld [vmem:[%s571 + $0x328] sm:$0xff]
        %v674 = vld [vmem:[%s571 + $0x330] sm:$0xff]
        %v675 = vld [vmem:[%s571 + $0x338] sm:$0xff]
        %v676 = vld [vmem:[%s571 + $0x340] sm:$0xff]
        %v677 = vld [vmem:[%s571 + $0x348] sm:$0xff]
        %v678 = vld [vmem:[%s571 + $0x350] sm:$0xff]
        %v679 = vld [vmem:[%s571 + $0x358] sm:$0xff]
        %v680 = vld [vmem:[%s571 + $0x360] sm:$0xff]
        %v681 = vld [vmem:[%s571 + $0x368] sm:$0xff]
        %v682 = vld [vmem:[%s571 + $0x370] sm:$0xff]
        %v683 = vld [vmem:[%s571 + $0x378] sm:$0xff]
        %v684 = vld [vmem:[%s571 + $0x380] sm:$0xff]
        %v685 = vld [vmem:[%s571 + $0x388] sm:$0xff]
        %v686 = vld [vmem:[%s571 + $0x390] sm:$0xff]
        %v687 = vld [vmem:[%s571 + $0x398] sm:$0xff]
        %v688 = vld [vmem:[%s571 + $0x3a0] sm:$0xff]
        %v689 = vld [vmem:[%s571 + $0x3a8] sm:$0xff]
        %v690 = vld [vmem:[%s571 + $0x3b0] sm:$0xff]
        %v691 = vld [vmem:[%s571 + $0x3b8] sm:$0xff]
        %v692 = vld [vmem:[%s571 + $0x3c0] sm:$0xff]
        %v693 = vld [vmem:[%s571 + $0x3c8] sm:$0xff]
        %v694 = vld [vmem:[%s571 + $0x3d0] sm:$0xff]
        %v695 = vld [vmem:[%s571 + $0x3d8] sm:$0xff]
        %v696 = vld [vmem:[%s571 + $0x3e0] sm:$0xff]
        %v697 = vld [vmem:[%s571 + $0x3e8] sm:$0xff]
        %v698 = vld [vmem:[%s571 + $0x3f0] sm:$0xff]
        %v699 = vld [vmem:[%s571 + $0x3f8] sm:$0xff]
        %v764 = vunpack.c.l.b16 %v503
        %v765 = vunpack.c.h.b16 %v503
        %v766 = vunpack.c.l.b16 %v504
        %v767 = vunpack.c.h.b16 %v504
        %v768 = vunpack.c.l.b16 %v505
        %v769 = vunpack.c.h.b16 %v505
        %v770 = vunpack.c.l.b16 %v506
        %v771 = vunpack.c.h.b16 %v506
        %v772 = vunpack.c.l.b16 %v507
        %v773 = vunpack.c.h.b16 %v507
        %v774 = vunpack.c.l.b16 %v508
        %v775 = vunpack.c.h.b16 %v508
        %v776 = vunpack.c.l.b16 %v509
        %v777 = vunpack.c.h.b16 %v509
        %v778 = vunpack.c.l.b16 %v510
        %v779 = vunpack.c.h.b16 %v510
        %v780 = vunpack.c.l.b16 %v511
        %v781 = vunpack.c.h.b16 %v511
        %v782 = vunpack.c.l.b16 %v512
        %v783 = vunpack.c.h.b16 %v512
        %v784 = vunpack.c.l.b16 %v513
        %v785 = vunpack.c.h.b16 %v513
        %v786 = vunpack.c.l.b16 %v514
        %v787 = vunpack.c.h.b16 %v514
        %v788 = vunpack.c.l.b16 %v515
        %v789 = vunpack.c.h.b16 %v515
        %v790 = vunpack.c.l.b16 %v516
        %v791 = vunpack.c.h.b16 %v516
        %v792 = vunpack.c.l.b16 %v517
        %v793 = vunpack.c.h.b16 %v517
        %v794 = vunpack.c.l.b16 %v518
        %v795 = vunpack.c.h.b16 %v518
        %v796 = vunpack.c.l.b16 %v519
        %v797 = vunpack.c.h.b16 %v519
        %v798 = vunpack.c.l.b16 %v520
        %v799 = vunpack.c.h.b16 %v520
        %v800 = vunpack.c.l.b16 %v521
        %v801 = vunpack.c.h.b16 %v521
        %v802 = vunpack.c.l.b16 %v522
        %v803 = vunpack.c.h.b16 %v522
        %v804 = vunpack.c.l.b16 %v523
        %v805 = vunpack.c.h.b16 %v523
        %v806 = vunpack.c.l.b16 %v524
        %v807 = vunpack.c.h.b16 %v524
        %v808 = vunpack.c.l.b16 %v525
        %v809 = vunpack.c.h.b16 %v525
        %v810 = vunpack.c.l.b16 %v526
        %v811 = vunpack.c.h.b16 %v526
        %v812 = vunpack.c.l.b16 %v527
        %v813 = vunpack.c.h.b16 %v527
        %v814 = vunpack.c.l.b16 %v528
        %v815 = vunpack.c.h.b16 %v528
        %v816 = vunpack.c.l.b16 %v529
        %v817 = vunpack.c.h.b16 %v529
        %v818 = vunpack.c.l.b16 %v530
        %v819 = vunpack.c.h.b16 %v530
        %v820 = vunpack.c.l.b16 %v531
        %v821 = vunpack.c.h.b16 %v531
        %v822 = vunpack.c.l.b16 %v532
        %v823 = vunpack.c.h.b16 %v532
        %v824 = vunpack.c.l.b16 %v533
        %v825 = vunpack.c.h.b16 %v533
        %v826 = vunpack.c.l.b16 %v534
        %v827 = vunpack.c.h.b16 %v534
        %v828 = vunpack.c.l.b16 %v535
        %v829 = vunpack.c.h.b16 %v535
        %v830 = vunpack.c.l.b16 %v536
        %v831 = vunpack.c.h.b16 %v536
        %v832 = vunpack.c.l.b16 %v537
        %v833 = vunpack.c.h.b16 %v537
        %v834 = vunpack.c.l.b16 %v538
        %v835 = vunpack.c.h.b16 %v538
        %v836 = vunpack.c.l.b16 %v539
        %v837 = vunpack.c.h.b16 %v539
        %v838 = vunpack.c.l.b16 %v540
        %v839 = vunpack.c.h.b16 %v540
        %v840 = vunpack.c.l.b16 %v541
        %v841 = vunpack.c.h.b16 %v541
        %v842 = vunpack.c.l.b16 %v542
        %v843 = vunpack.c.h.b16 %v542
        %v844 = vunpack.c.l.b16 %v543
        %v845 = vunpack.c.h.b16 %v543
        %v846 = vunpack.c.l.b16 %v544
        %v847 = vunpack.c.h.b16 %v544
        %v848 = vunpack.c.l.b16 %v545
        %v849 = vunpack.c.h.b16 %v545
        %v850 = vunpack.c.l.b16 %v546
        %v851 = vunpack.c.h.b16 %v546
        %v852 = vunpack.c.l.b16 %v547
        %v853 = vunpack.c.h.b16 %v547
        %v854 = vunpack.c.l.b16 %v548
        %v855 = vunpack.c.h.b16 %v548
        %v856 = vunpack.c.l.b16 %v549
        %v857 = vunpack.c.h.b16 %v549
        %v858 = vunpack.c.l.b16 %v550
        %v859 = vunpack.c.h.b16 %v550
        %v860 = vunpack.c.l.b16 %v551
        %v861 = vunpack.c.h.b16 %v551
        %v862 = vunpack.c.l.b16 %v552
        %v863 = vunpack.c.h.b16 %v552
        %v864 = vunpack.c.l.b16 %v553
        %v865 = vunpack.c.h.b16 %v553
        %v866 = vunpack.c.l.b16 %v554
        %v867 = vunpack.c.h.b16 %v554
        %v868 = vunpack.c.l.b16 %v555
        %v869 = vunpack.c.h.b16 %v555
        %v870 = vunpack.c.l.b16 %v556
        %v871 = vunpack.c.h.b16 %v556
        %v872 = vunpack.c.l.b16 %v557
        %v873 = vunpack.c.h.b16 %v557
        %v874 = vunpack.c.l.b16 %v558
        %v875 = vunpack.c.h.b16 %v558
        %v876 = vunpack.c.l.b16 %v559
        %v877 = vunpack.c.h.b16 %v559
        %v878 = vunpack.c.l.b16 %v560
        %v879 = vunpack.c.h.b16 %v560
        %v880 = vunpack.c.l.b16 %v561
        %v881 = vunpack.c.h.b16 %v561
        %v882 = vunpack.c.l.b16 %v562
        %v883 = vunpack.c.h.b16 %v562
        %v884 = vunpack.c.l.b16 %v563
        %v885 = vunpack.c.h.b16 %v563
        %v886 = vunpack.c.l.b16 %v564
        %v887 = vunpack.c.h.b16 %v564
        %v888 = vunpack.c.l.b16 %v565
        %v889 = vunpack.c.h.b16 %v565
        %v890 = vunpack.c.l.b16 %v566
        %v891 = vunpack.c.h.b16 %v566
        %v892 = vpack.c.b16 %v768, %v764
        %v893 = vpack.c.b16 %v769, %v765
        %v894 = vpack.c.b16 %v770, %v766
        %v895 = vpack.c.b16 %v771, %v767
        %v896 = vpack.c.b16 %v776, %v772
        %v897 = vpack.c.b16 %v777, %v773
        %v898 = vpack.c.b16 %v778, %v774
        %v899 = vpack.c.b16 %v779, %v775
        %v900 = vpack.c.b16 %v784, %v780
        %v901 = vpack.c.b16 %v785, %v781
        %v902 = vpack.c.b16 %v786, %v782
        %v903 = vpack.c.b16 %v787, %v783
        %v904 = vpack.c.b16 %v792, %v788
        %v905 = vpack.c.b16 %v793, %v789
        %v906 = vpack.c.b16 %v794, %v790
        %v907 = vpack.c.b16 %v795, %v791
        %v908 = vpack.c.b16 %v800, %v796
        %v909 = vpack.c.b16 %v801, %v797
        %v910 = vpack.c.b16 %v802, %v798
        %v911 = vpack.c.b16 %v803, %v799
        %v912 = vpack.c.b16 %v808, %v804
        %v913 = vpack.c.b16 %v809, %v805
        %v914 = vpack.c.b16 %v810, %v806
        %v915 = vpack.c.b16 %v811, %v807
        %v916 = vpack.c.b16 %v816, %v812
        %v917 = vpack.c.b16 %v817, %v813
        %v918 = vpack.c.b16 %v818, %v814
        %v919 = vpack.c.b16 %v819, %v815
        %v920 = vpack.c.b16 %v824, %v820
        %v921 = vpack.c.b16 %v825, %v821
        %v922 = vpack.c.b16 %v826, %v822
        %v923 = vpack.c.b16 %v827, %v823
        %v924 = vpack.c.b16 %v832, %v828
        %v925 = vpack.c.b16 %v833, %v829
        %v926 = vpack.c.b16 %v834, %v830
        %v927 = vpack.c.b16 %v835, %v831
        %v928 = vpack.c.b16 %v840, %v836
        %v929 = vpack.c.b16 %v841, %v837
        %v930 = vpack.c.b16 %v842, %v838
        %v931 = vpack.c.b16 %v843, %v839
        %v932 = vpack.c.b16 %v848, %v844
        %v933 = vpack.c.b16 %v849, %v845
        %v934 = vpack.c.b16 %v850, %v846
        %v935 = vpack.c.b16 %v851, %v847
        %v936 = vpack.c.b16 %v856, %v852
        %v937 = vpack.c.b16 %v857, %v853
        %v938 = vpack.c.b16 %v858, %v854
        %v939 = vpack.c.b16 %v859, %v855
        %v940 = vpack.c.b16 %v864, %v860
        %v941 = vpack.c.b16 %v865, %v861
        %v942 = vpack.c.b16 %v866, %v862
        %v943 = vpack.c.b16 %v867, %v863
        %v944 = vpack.c.b16 %v872, %v868
        %v945 = vpack.c.b16 %v873, %v869
        %v946 = vpack.c.b16 %v874, %v870
        %v947 = vpack.c.b16 %v875, %v871
        %v948 = vpack.c.b16 %v880, %v876
        %v949 = vpack.c.b16 %v881, %v877
        %v950 = vpack.c.b16 %v882, %v878
        %v951 = vpack.c.b16 %v883, %v879
        %v952 = vpack.c.b16 %v888, %v884
        %v953 = vpack.c.b16 %v889, %v885
        %v954 = vpack.c.b16 %v890, %v886
        %v955 = vpack.c.b16 %v891, %v887
        %v1148 = vunpack.c.l.b16 %v572
        %v1149 = vunpack.c.h.b16 %v572
        %v1150 = vunpack.c.l.b16 %v573
        %v1151 = vunpack.c.h.b16 %v573
        %v1152 = vunpack.c.l.b16 %v574
        %v1153 = vunpack.c.h.b16 %v574
        %v1154 = vunpack.c.l.b16 %v575
        %v1155 = vunpack.c.h.b16 %v575
        %v1156 = vunpack.c.l.b16 %v576
        %v1157 = vunpack.c.h.b16 %v576
        %v1158 = vunpack.c.l.b16 %v577
        %v1159 = vunpack.c.h.b16 %v577
        %v1160 = vunpack.c.l.b16 %v578
        %v1161 = vunpack.c.h.b16 %v578
        %v1162 = vunpack.c.l.b16 %v579
        %v1163 = vunpack.c.h.b16 %v579
        %v1164 = vunpack.c.l.b16 %v580
        %v1165 = vunpack.c.h.b16 %v580
        %v1166 = vunpack.c.l.b16 %v581
        %v1167 = vunpack.c.h.b16 %v581
        %v1168 = vunpack.c.l.b16 %v582
        %v1169 = vunpack.c.h.b16 %v582
        %v1170 = vunpack.c.l.b16 %v583
        %v1171 = vunpack.c.h.b16 %v583
        %v1172 = vunpack.c.l.b16 %v584
        %v1173 = vunpack.c.h.b16 %v584
        %v1174 = vunpack.c.l.b16 %v585
        %v1175 = vunpack.c.h.b16 %v585
        %v1176 = vunpack.c.l.b16 %v586
        %v1177 = vunpack.c.h.b16 %v586
        %v1178 = vunpack.c.l.b16 %v587
        %v1179 = vunpack.c.h.b16 %v587
        %v1180 = vunpack.c.l.b16 %v588
        %v1181 = vunpack.c.h.b16 %v588
        %v1182 = vunpack.c.l.b16 %v589
        %v1183 = vunpack.c.h.b16 %v589
        %v1184 = vunpack.c.l.b16 %v590
        %v1185 = vunpack.c.h.b16 %v590
        %v1186 = vunpack.c.l.b16 %v591
        %v1187 = vunpack.c.h.b16 %v591
        %v1188 = vunpack.c.l.b16 %v592
        %v1189 = vunpack.c.h.b16 %v592
        %v1190 = vunpack.c.l.b16 %v593
        %v1191 = vunpack.c.h.b16 %v593
        %v1192 = vunpack.c.l.b16 %v594
        %v1193 = vunpack.c.h.b16 %v594
        %v1194 = vunpack.c.l.b16 %v595
        %v1195 = vunpack.c.h.b16 %v595
        %v1196 = vunpack.c.l.b16 %v596
        %v1197 = vunpack.c.h.b16 %v596
        %v1198 = vunpack.c.l.b16 %v597
        %v1199 = vunpack.c.h.b16 %v597
        %v1200 = vunpack.c.l.b16 %v598
        %v1201 = vunpack.c.h.b16 %v598
        %v1202 = vunpack.c.l.b16 %v599
        %v1203 = vunpack.c.h.b16 %v599
        %v1204 = vunpack.c.l.b16 %v600
        %v1205 = vunpack.c.h.b16 %v600
        %v1206 = vunpack.c.l.b16 %v601
        %v1207 = vunpack.c.h.b16 %v601
        %v1208 = vunpack.c.l.b16 %v602
        %v1209 = vunpack.c.h.b16 %v602
        %v1210 = vunpack.c.l.b16 %v603
        %v1211 = vunpack.c.h.b16 %v603
        %v1212 = vunpack.c.l.b16 %v604
        %v1213 = vunpack.c.h.b16 %v604
        %v1214 = vunpack.c.l.b16 %v605
        %v1215 = vunpack.c.h.b16 %v605
        %v1216 = vunpack.c.l.b16 %v606
        %v1217 = vunpack.c.h.b16 %v606
        %v1218 = vunpack.c.l.b16 %v607
        %v1219 = vunpack.c.h.b16 %v607
        %v1220 = vunpack.c.l.b16 %v608
        %v1221 = vunpack.c.h.b16 %v608
        %v1222 = vunpack.c.l.b16 %v609
        %v1223 = vunpack.c.h.b16 %v609
        %v1224 = vunpack.c.l.b16 %v610
        %v1225 = vunpack.c.h.b16 %v610
        %v1226 = vunpack.c.l.b16 %v611
        %v1227 = vunpack.c.h.b16 %v611
        %v1228 = vunpack.c.l.b16 %v612
        %v1229 = vunpack.c.h.b16 %v612
        %v1230 = vunpack.c.l.b16 %v613
        %v1231 = vunpack.c.h.b16 %v613
        %v1232 = vunpack.c.l.b16 %v614
        %v1233 = vunpack.c.h.b16 %v614
        %v1234 = vunpack.c.l.b16 %v615
        %v1235 = vunpack.c.h.b16 %v615
        %v1236 = vunpack.c.l.b16 %v616
        %v1237 = vunpack.c.h.b16 %v616
        %v1238 = vunpack.c.l.b16 %v617
        %v1239 = vunpack.c.h.b16 %v617
        %v1240 = vunpack.c.l.b16 %v618
        %v1241 = vunpack.c.h.b16 %v618
        %v1242 = vunpack.c.l.b16 %v619
        %v1243 = vunpack.c.h.b16 %v619
        %v1244 = vunpack.c.l.b16 %v620
        %v1245 = vunpack.c.h.b16 %v620
        %v1246 = vunpack.c.l.b16 %v621
        %v1247 = vunpack.c.h.b16 %v621
        %v1248 = vunpack.c.l.b16 %v622
        %v1249 = vunpack.c.h.b16 %v622
        %v1250 = vunpack.c.l.b16 %v623
        %v1251 = vunpack.c.h.b16 %v623
        %v1252 = vunpack.c.l.b16 %v624
        %v1253 = vunpack.c.h.b16 %v624
        %v1254 = vunpack.c.l.b16 %v625
        %v1255 = vunpack.c.h.b16 %v625
        %v1256 = vunpack.c.l.b16 %v626
        %v1257 = vunpack.c.h.b16 %v626
        %v1258 = vunpack.c.l.b16 %v627
        %v1259 = vunpack.c.h.b16 %v627
        %v1260 = vunpack.c.l.b16 %v628
        %v1261 = vunpack.c.h.b16 %v628
        %v1262 = vunpack.c.l.b16 %v629
        %v1263 = vunpack.c.h.b16 %v629
        %v1264 = vunpack.c.l.b16 %v630
        %v1265 = vunpack.c.h.b16 %v630
        %v1266 = vunpack.c.l.b16 %v631
        %v1267 = vunpack.c.h.b16 %v631
        %v1268 = vunpack.c.l.b16 %v632
        %v1269 = vunpack.c.h.b16 %v632
        %v1270 = vunpack.c.l.b16 %v633
        %v1271 = vunpack.c.h.b16 %v633
        %v1272 = vunpack.c.l.b16 %v634
        %v1273 = vunpack.c.h.b16 %v634
        %v1274 = vunpack.c.l.b16 %v635
        %v1275 = vunpack.c.h.b16 %v635
        %v1276 = vunpack.c.l.b16 %v636
        %v1277 = vunpack.c.h.b16 %v636
        %v1278 = vunpack.c.l.b16 %v637
        %v1279 = vunpack.c.h.b16 %v637
        %v1280 = vunpack.c.l.b16 %v638
        %v1281 = vunpack.c.h.b16 %v638
        %v1282 = vunpack.c.l.b16 %v639
        %v1283 = vunpack.c.h.b16 %v639
        %v1284 = vunpack.c.l.b16 %v640
        %v1285 = vunpack.c.h.b16 %v640
        %v1286 = vunpack.c.l.b16 %v641
        %v1287 = vunpack.c.h.b16 %v641
        %v1288 = vunpack.c.l.b16 %v642
        %v1289 = vunpack.c.h.b16 %v642
        %v1290 = vunpack.c.l.b16 %v643
        %v1291 = vunpack.c.h.b16 %v643
        %v1292 = vunpack.c.l.b16 %v644
        %v1293 = vunpack.c.h.b16 %v644
        %v1294 = vunpack.c.l.b16 %v645
        %v1295 = vunpack.c.h.b16 %v645
        %v1296 = vunpack.c.l.b16 %v646
        %v1297 = vunpack.c.h.b16 %v646
        %v1298 = vunpack.c.l.b16 %v647
        %v1299 = vunpack.c.h.b16 %v647
        %v1300 = vunpack.c.l.b16 %v648
        %v1301 = vunpack.c.h.b16 %v648
        %v1302 = vunpack.c.l.b16 %v649
        %v1303 = vunpack.c.h.b16 %v649
        %v1304 = vunpack.c.l.b16 %v650
        %v1305 = vunpack.c.h.b16 %v650
        %v1306 = vunpack.c.l.b16 %v651
        %v1307 = vunpack.c.h.b16 %v651
        %v1308 = vunpack.c.l.b16 %v652
        %v1309 = vunpack.c.h.b16 %v652
        %v1310 = vunpack.c.l.b16 %v653
        %v1311 = vunpack.c.h.b16 %v653
        %v1312 = vunpack.c.l.b16 %v654
        %v1313 = vunpack.c.h.b16 %v654
        %v1314 = vunpack.c.l.b16 %v655
        %v1315 = vunpack.c.h.b16 %v655
        %v1316 = vunpack.c.l.b16 %v656
        %v1317 = vunpack.c.h.b16 %v656
        %v1318 = vunpack.c.l.b16 %v657
        %v1319 = vunpack.c.h.b16 %v657
        %v1320 = vunpack.c.l.b16 %v658
        %v1321 = vunpack.c.h.b16 %v658
        %v1322 = vunpack.c.l.b16 %v659
        %v1323 = vunpack.c.h.b16 %v659
        %v1324 = vunpack.c.l.b16 %v660
        %v1325 = vunpack.c.h.b16 %v660
        %v1326 = vunpack.c.l.b16 %v661
        %v1327 = vunpack.c.h.b16 %v661
        %v1328 = vunpack.c.l.b16 %v662
        %v1329 = vunpack.c.h.b16 %v662
        %v1330 = vunpack.c.l.b16 %v663
        %v1331 = vunpack.c.h.b16 %v663
        %v1332 = vunpack.c.l.b16 %v664
        %v1333 = vunpack.c.h.b16 %v664
        %v1334 = vunpack.c.l.b16 %v665
        %v1335 = vunpack.c.h.b16 %v665
        %v1336 = vunpack.c.l.b16 %v666
        %v1337 = vunpack.c.h.b16 %v666
        %v1338 = vunpack.c.l.b16 %v667
        %v1339 = vunpack.c.h.b16 %v667
        %v1340 = vunpack.c.l.b16 %v668
        %v1341 = vunpack.c.h.b16 %v668
        %v1342 = vunpack.c.l.b16 %v669
        %v1343 = vunpack.c.h.b16 %v669
        %v1344 = vunpack.c.l.b16 %v670
        %v1345 = vunpack.c.h.b16 %v670
        %v1346 = vunpack.c.l.b16 %v671
        %v1347 = vunpack.c.h.b16 %v671
        %v1348 = vunpack.c.l.b16 %v672
        %v1349 = vunpack.c.h.b16 %v672
        %v1350 = vunpack.c.l.b16 %v673
        %v1351 = vunpack.c.h.b16 %v673
        %v1352 = vunpack.c.l.b16 %v674
        %v1353 = vunpack.c.h.b16 %v674
        %v1354 = vunpack.c.l.b16 %v675
        %v1355 = vunpack.c.h.b16 %v675
        %v1356 = vunpack.c.l.b16 %v676
        %v1357 = vunpack.c.h.b16 %v676
        %v1358 = vunpack.c.l.b16 %v677
        %v1359 = vunpack.c.h.b16 %v677
        %v1360 = vunpack.c.l.b16 %v678
        %v1361 = vunpack.c.h.b16 %v678
        %v1362 = vunpack.c.l.b16 %v679
        %v1363 = vunpack.c.h.b16 %v679
        %v1364 = vunpack.c.l.b16 %v680
        %v1365 = vunpack.c.h.b16 %v680
        %v1366 = vunpack.c.l.b16 %v681
        %v1367 = vunpack.c.h.b16 %v681
        %v1368 = vunpack.c.l.b16 %v682
        %v1369 = vunpack.c.h.b16 %v682
        %v1370 = vunpack.c.l.b16 %v683
        %v1371 = vunpack.c.h.b16 %v683
        %v1372 = vunpack.c.l.b16 %v684
        %v1373 = vunpack.c.h.b16 %v684
        %v1374 = vunpack.c.l.b16 %v685
        %v1375 = vunpack.c.h.b16 %v685
        %v1376 = vunpack.c.l.b16 %v686
        %v1377 = vunpack.c.h.b16 %v686
        %v1378 = vunpack.c.l.b16 %v687
        %v1379 = vunpack.c.h.b16 %v687
        %v1380 = vunpack.c.l.b16 %v688
        %v1381 = vunpack.c.h.b16 %v688
        %v1382 = vunpack.c.l.b16 %v689
        %v1383 = vunpack.c.h.b16 %v689
        %v1384 = vunpack.c.l.b16 %v690
        %v1385 = vunpack.c.h.b16 %v690
        %v1386 = vunpack.c.l.b16 %v691
        %v1387 = vunpack.c.h.b16 %v691
        %v1388 = vunpack.c.l.b16 %v692
        %v1389 = vunpack.c.h.b16 %v692
        %v1390 = vunpack.c.l.b16 %v693
        %v1391 = vunpack.c.h.b16 %v693
        %v1392 = vunpack.c.l.b16 %v694
        %v1393 = vunpack.c.h.b16 %v694
        %v1394 = vunpack.c.l.b16 %v695
        %v1395 = vunpack.c.h.b16 %v695
        %v1396 = vunpack.c.l.b16 %v696
        %v1397 = vunpack.c.h.b16 %v696
        %v1398 = vunpack.c.l.b16 %v697
        %v1399 = vunpack.c.h.b16 %v697
        %v1400 = vunpack.c.l.b16 %v698
        %v1401 = vunpack.c.h.b16 %v698
        %v1402 = vunpack.c.l.b16 %v699
        %v1403 = vunpack.c.h.b16 %v699
        %v1404 = vpack.c.b16 %v1152, %v1148
        %v1405 = vpack.c.b16 %v1153, %v1149
        %v1406 = vpack.c.b16 %v1154, %v1150
        %v1407 = vpack.c.b16 %v1155, %v1151
        %v1408 = vpack.c.b16 %v1160, %v1156
        %v1409 = vpack.c.b16 %v1161, %v1157
        %v1410 = vpack.c.b16 %v1162, %v1158
        %v1411 = vpack.c.b16 %v1163, %v1159
        %v1412 = vpack.c.b16 %v1168, %v1164
        %v1413 = vpack.c.b16 %v1169, %v1165
        %v1414 = vpack.c.b16 %v1170, %v1166
        %v1415 = vpack.c.b16 %v1171, %v1167
        %v1416 = vpack.c.b16 %v1176, %v1172
        %v1417 = vpack.c.b16 %v1177, %v1173
        %v1418 = vpack.c.b16 %v1178, %v1174
        %v1419 = vpack.c.b16 %v1179, %v1175
        %v1420 = vpack.c.b16 %v1184, %v1180
        %v1421 = vpack.c.b16 %v1185, %v1181
        %v1422 = vpack.c.b16 %v1186, %v1182
        %v1423 = vpack.c.b16 %v1187, %v1183
        %v1424 = vpack.c.b16 %v1192, %v1188
        %v1425 = vpack.c.b16 %v1193, %v1189
        %v1426 = vpack.c.b16 %v1194, %v1190
        %v1427 = vpack.c.b16 %v1195, %v1191
        %v1428 = vpack.c.b16 %v1200, %v1196
        %v1429 = vpack.c.b16 %v1201, %v1197
        %v1430 = vpack.c.b16 %v1202, %v1198
        %v1431 = vpack.c.b16 %v1203, %v1199
        %v1432 = vpack.c.b16 %v1208, %v1204
        %v1433 = vpack.c.b16 %v1209, %v1205
        %v1434 = vpack.c.b16 %v1210, %v1206
        %v1435 = vpack.c.b16 %v1211, %v1207
        %v1436 = vpack.c.b16 %v1216, %v1212
        %v1437 = vpack.c.b16 %v1217, %v1213
        %v1438 = vpack.c.b16 %v1218, %v1214
        %v1439 = vpack.c.b16 %v1219, %v1215
        %v1440 = vpack.c.b16 %v1224, %v1220
        %v1441 = vpack.c.b16 %v1225, %v1221
        %v1442 = vpack.c.b16 %v1226, %v1222
        %v1443 = vpack.c.b16 %v1227, %v1223
        %v1444 = vpack.c.b16 %v1232, %v1228
        %v1445 = vpack.c.b16 %v1233, %v1229
        %v1446 = vpack.c.b16 %v1234, %v1230
        %v1447 = vpack.c.b16 %v1235, %v1231
        %v1448 = vpack.c.b16 %v1240, %v1236
        %v1449 = vpack.c.b16 %v1241, %v1237
        %v1450 = vpack.c.b16 %v1242, %v1238
        %v1451 = vpack.c.b16 %v1243, %v1239
        %v1452 = vpack.c.b16 %v1248, %v1244
        %v1453 = vpack.c.b16 %v1249, %v1245
        %v1454 = vpack.c.b16 %v1250, %v1246
        %v1455 = vpack.c.b16 %v1251, %v1247
        %v1456 = vpack.c.b16 %v1256, %v1252
        %v1457 = vpack.c.b16 %v1257, %v1253
        %v1458 = vpack.c.b16 %v1258, %v1254
        %v1459 = vpack.c.b16 %v1259, %v1255
        %v1460 = vpack.c.b16 %v1264, %v1260
        %v1461 = vpack.c.b16 %v1265, %v1261
        %v1462 = vpack.c.b16 %v1266, %v1262
        %v1463 = vpack.c.b16 %v1267, %v1263
        %v1464 = vpack.c.b16 %v1272, %v1268
        %v1465 = vpack.c.b16 %v1273, %v1269
        %v1466 = vpack.c.b16 %v1274, %v1270
        %v1467 = vpack.c.b16 %v1275, %v1271
        %v1468 = vpack.c.b16 %v1280, %v1276
        %v1469 = vpack.c.b16 %v1281, %v1277
        %v1470 = vpack.c.b16 %v1282, %v1278
        %v1471 = vpack.c.b16 %v1283, %v1279
        %v1472 = vpack.c.b16 %v1288, %v1284
        %v1473 = vpack.c.b16 %v1289, %v1285
        %v1474 = vpack.c.b16 %v1290, %v1286
        %v1475 = vpack.c.b16 %v1291, %v1287
        %v1476 = vpack.c.b16 %v1296, %v1292
        %v1477 = vpack.c.b16 %v1297, %v1293
        %v1478 = vpack.c.b16 %v1298, %v1294
        %v1479 = vpack.c.b16 %v1299, %v1295
        %v1480 = vpack.c.b16 %v1304, %v1300
        %v1481 = vpack.c.b16 %v1305, %v1301
        %v1482 = vpack.c.b16 %v1306, %v1302
        %v1483 = vpack.c.b16 %v1307, %v1303
        %v1484 = vpack.c.b16 %v1312, %v1308
        %v1485 = vpack.c.b16 %v1313, %v1309
        %v1486 = vpack.c.b16 %v1314, %v1310
        %v1487 = vpack.c.b16 %v1315, %v1311
        %v1488 = vpack.c.b16 %v1320, %v1316
        %v1489 = vpack.c.b16 %v1321, %v1317
        %v1490 = vpack.c.b16 %v1322, %v1318
        %v1491 = vpack.c.b16 %v1323, %v1319
        %v1492 = vpack.c.b16 %v1328, %v1324
        %v1493 = vpack.c.b16 %v1329, %v1325
        %v1494 = vpack.c.b16 %v1330, %v1326
        %v1495 = vpack.c.b16 %v1331, %v1327
        %v1496 = vpack.c.b16 %v1336, %v1332
        %v1497 = vpack.c.b16 %v1337, %v1333
        %v1498 = vpack.c.b16 %v1338, %v1334
        %v1499 = vpack.c.b16 %v1339, %v1335
        %v1500 = vpack.c.b16 %v1344, %v1340
        %v1501 = vpack.c.b16 %v1345, %v1341
        %v1502 = vpack.c.b16 %v1346, %v1342
        %v1503 = vpack.c.b16 %v1347, %v1343
        %v1504 = vpack.c.b16 %v1352, %v1348
        %v1505 = vpack.c.b16 %v1353, %v1349
        %v1506 = vpack.c.b16 %v1354, %v1350
        %v1507 = vpack.c.b16 %v1355, %v1351
        %v1508 = vpack.c.b16 %v1360, %v1356
        %v1509 = vpack.c.b16 %v1361, %v1357
        %v1510 = vpack.c.b16 %v1362, %v1358
        %v1511 = vpack.c.b16 %v1363, %v1359
        %v1512 = vpack.c.b16 %v1368, %v1364
        %v1513 = vpack.c.b16 %v1369, %v1365
        %v1514 = vpack.c.b16 %v1370, %v1366
        %v1515 = vpack.c.b16 %v1371, %v1367
        %v1516 = vpack.c.b16 %v1376, %v1372
        %v1517 = vpack.c.b16 %v1377, %v1373
        %v1518 = vpack.c.b16 %v1378, %v1374
        %v1519 = vpack.c.b16 %v1379, %v1375
        %v1520 = vpack.c.b16 %v1384, %v1380
        %v1521 = vpack.c.b16 %v1385, %v1381
        %v1522 = vpack.c.b16 %v1386, %v1382
        %v1523 = vpack.c.b16 %v1387, %v1383
        %v1524 = vpack.c.b16 %v1392, %v1388
        %v1525 = vpack.c.b16 %v1393, %v1389
        %v1526 = vpack.c.b16 %v1394, %v1390
        %v1527 = vpack.c.b16 %v1395, %v1391
        %v1528 = vpack.c.b16 %v1400, %v1396
        %v1529 = vpack.c.b16 %v1401, %v1397
        %v1530 = vpack.c.b16 %v1402, %v1398
        %v1531 = vpack.c.b16 %v1403, %v1399
        %1660 = vmatpush.bf16.msra.mxu0 %v1432
        %1661 = vmatpush.bf16.msra.mxu0 %v1428
        %1662 = vmatpush.bf16.msra.mxu0 %v1424
        %1663 = vmatpush.bf16.msra.mxu0 %v1420
        %1664 = vmatpush.bf16.msra.mxu0 %v1416
        %1665 = vmatpush.bf16.msra.mxu0 %v1412
        %1666 = vmatpush.bf16.msra.mxu0 %v1408
        %1667 = vmatpush.bf16.msra.mxu0 %v1404
        %1668 = vmatmul.bf16.gmra.mxu0 %v892
        %v1669 = vpop.f32.mrf.mxu0
        %v1670 = vadd.f32 0.0, %v1669
        %v1671 = vpop.f32.mrf.mxu0
        %v1672 = vadd.f32 0.0, %v1671
        %1673 = vmatmul.bf16.gmra.mxu0 %v896
        %v1674 = vpop.f32.mrf.mxu0
        %v1675 = vadd.f32 0.0, %v1674
        %v1676 = vpop.f32.mrf.mxu0
        %v1677 = vadd.f32 0.0, %v1676
        %1678 = vmatmul.bf16.gmra.mxu0 %v900
        %v1679 = vpop.f32.mrf.mxu0
        %v1680 = vadd.f32 0.0, %v1679
        %v1681 = vpop.f32.mrf.mxu0
        %v1682 = vadd.f32 0.0, %v1681
        %1683 = vmatmul.bf16.gmra.mxu0 %v904
        %v1684 = vpop.f32.mrf.mxu0
        %v1685 = vadd.f32 0.0, %v1684
        %v1686 = vpop.f32.mrf.mxu0
        %v1687 = vadd.f32 0.0, %v1686
        %1688 = vmatmul.bf16.gmra.mxu0 %v908
        %v1689 = vpop.f32.mrf.mxu0
        %v1690 = vadd.f32 0.0, %v1689
        %v1691 = vpop.f32.mrf.mxu0
        %v1692 = vadd.f32 0.0, %v1691
        %1693 = vmatmul.bf16.gmra.mxu0 %v912
        %v1694 = vpop.f32.mrf.mxu0
        %v1695 = vadd.f32 0.0, %v1694
        %v1696 = vpop.f32.mrf.mxu0
        %v1697 = vadd.f32 0.0, %v1696
        %1698 = vmatmul.bf16.gmra.mxu0 %v916
        %v1699 = vpop.f32.mrf.mxu0
        %v1700 = vadd.f32 0.0, %v1699
        %v1701 = vpop.f32.mrf.mxu0
        %v1702 = vadd.f32 0.0, %v1701
        %1703 = vmatmul.bf16.gmra.mxu0 %v920
        %v1704 = vpop.f32.mrf.mxu0
        %v1705 = vadd.f32 0.0, %v1704
        %v1706 = vpop.f32.mrf.mxu0
        %v1707 = vadd.f32 0.0, %v1706
        %1708 = vmatmul.bf16.gmra.mxu0 %v924
        %v1709 = vpop.f32.mrf.mxu0
        %v1710 = vadd.f32 0.0, %v1709
        %v1711 = vpop.f32.mrf.mxu0
        %v1712 = vadd.f32 0.0, %v1711
        %1713 = vmatmul.bf16.gmra.mxu0 %v928
        %v1714 = vpop.f32.mrf.mxu0
        %v1715 = vadd.f32 0.0, %v1714
        %v1716 = vpop.f32.mrf.mxu0
        %v1717 = vadd.f32 0.0, %v1716
        %1718 = vmatmul.bf16.gmra.mxu0 %v932
        %v1719 = vpop.f32.mrf.mxu0
        %v1720 = vadd.f32 0.0, %v1719
        %v1721 = vpop.f32.mrf.mxu0
        %v1722 = vadd.f32 0.0, %v1721
        %1723 = vmatmul.bf16.gmra.mxu0 %v936
        %v1724 = vpop.f32.mrf.mxu0
        %v1725 = vadd.f32 0.0, %v1724
        %v1726 = vpop.f32.mrf.mxu0
        %v1727 = vadd.f32 0.0, %v1726
        %1728 = vmatmul.bf16.gmra.mxu0 %v940
        %v1729 = vpop.f32.mrf.mxu0
        %v1730 = vadd.f32 0.0, %v1729
        %v1731 = vpop.f32.mrf.mxu0
        %v1732 = vadd.f32 0.0, %v1731
        %1733 = vmatmul.bf16.gmra.mxu0 %v944
        %v1734 = vpop.f32.mrf.mxu0
        %v1735 = vadd.f32 0.0, %v1734
        %v1736 = vpop.f32.mrf.mxu0
        %v1737 = vadd.f32 0.0, %v1736
        %1738 = vmatmul.bf16.gmra.mxu0 %v948
        %v1739 = vpop.f32.mrf.mxu0
        %v1740 = vadd.f32 0.0, %v1739
        %v1741 = vpop.f32.mrf.mxu0
        %v1742 = vadd.f32 0.0, %v1741
        %1743 = vmatmul.bf16.gmra.mxu0 %v952
        %v1744 = vpop.f32.mrf.mxu0
        %v1745 = vadd.f32 0.0, %v1744
        %v1746 = vpop.f32.mrf.mxu0
        %v1747 = vadd.f32 0.0, %v1746
        %1748 = vdwg.mxu0
        %1749 = vmatpush.bf16.msra.mxu0 %v1464
        %1750 = vmatpush.bf16.msra.mxu0 %v1460
        %1751 = vmatpush.bf16.msra.mxu0 %v1456
        %1752 = vmatpush.bf16.msra.mxu0 %v1452
        %1753 = vmatpush.bf16.msra.mxu0 %v1448
        %1754 = vmatpush.bf16.msra.mxu0 %v1444
        %1755 = vmatpush.bf16.msra.mxu0 %v1440
        %1756 = vmatpush.bf16.msra.mxu0 %v1436
        %1757 = vmatmul.bf16.gmra.mxu0 %v893
        %v1758 = vpop.f32.mrf.mxu0
        %v1759 = vadd.f32 %v1670, %v1758
        %v1760 = vpop.f32.mrf.mxu0
        %v1761 = vadd.f32 %v1672, %v1760
        %1762 = vmatmul.bf16.gmra.mxu0 %v897
        %v1763 = vpop.f32.mrf.mxu0
        %v1764 = vadd.f32 %v1675, %v1763
        %v1765 = vpop.f32.mrf.mxu0
        %v1766 = vadd.f32 %v1677, %v1765
        %1767 = vmatmul.bf16.gmra.mxu0 %v901
        %v1768 = vpop.f32.mrf.mxu0
        %v1769 = vadd.f32 %v1680, %v1768
        %v1770 = vpop.f32.mrf.mxu0
        %v1771 = vadd.f32 %v1682, %v1770
        %1772 = vmatmul.bf16.gmra.mxu0 %v905
        %v1773 = vpop.f32.mrf.mxu0
        %v1774 = vadd.f32 %v1685, %v1773
        %v1775 = vpop.f32.mrf.mxu0
        %v1776 = vadd.f32 %v1687, %v1775
        %1777 = vmatmul.bf16.gmra.mxu0 %v909
        %v1778 = vpop.f32.mrf.mxu0
        %v1779 = vadd.f32 %v1690, %v1778
        %v1780 = vpop.f32.mrf.mxu0
        %v1781 = vadd.f32 %v1692, %v1780
        %1782 = vmatmul.bf16.gmra.mxu0 %v913
        %v1783 = vpop.f32.mrf.mxu0
        %v1784 = vadd.f32 %v1695, %v1783
        %v1785 = vpop.f32.mrf.mxu0
        %v1786 = vadd.f32 %v1697, %v1785
        %1787 = vmatmul.bf16.gmra.mxu0 %v917
        %v1788 = vpop.f32.mrf.mxu0
        %v1789 = vadd.f32 %v1700, %v1788
        %v1790 = vpop.f32.mrf.mxu0
        %v1791 = vadd.f32 %v1702, %v1790
        %1792 = vmatmul.bf16.gmra.mxu0 %v921
        %v1793 = vpop.f32.mrf.mxu0
        %v1794 = vadd.f32 %v1705, %v1793
        %v1795 = vpop.f32.mrf.mxu0
        %v1796 = vadd.f32 %v1707, %v1795
        %1797 = vmatmul.bf16.gmra.mxu0 %v925
        %v1798 = vpop.f32.mrf.mxu0
        %v1799 = vadd.f32 %v1710, %v1798
        %v1800 = vpop.f32.mrf.mxu0
        %v1801 = vadd.f32 %v1712, %v1800
        %1802 = vmatmul.bf16.gmra.mxu0 %v929
        %v1803 = vpop.f32.mrf.mxu0
        %v1804 = vadd.f32 %v1715, %v1803
        %v1805 = vpop.f32.mrf.mxu0
        %v1806 = vadd.f32 %v1717, %v1805
        %1807 = vmatmul.bf16.gmra.mxu0 %v933
        %v1808 = vpop.f32.mrf.mxu0
        %v1809 = vadd.f32 %v1720, %v1808
        %v1810 = vpop.f32.mrf.mxu0
        %v1811 = vadd.f32 %v1722, %v1810
        %1812 = vmatmul.bf16.gmra.mxu0 %v937
        %v1813 = vpop.f32.mrf.mxu0
        %v1814 = vadd.f32 %v1725, %v1813
        %v1815 = vpop.f32.mrf.mxu0
        %v1816 = vadd.f32 %v1727, %v1815
        %1817 = vmatmul.bf16.gmra.mxu0 %v941
        %v1818 = vpop.f32.mrf.mxu0
        %v1819 = vadd.f32 %v1730, %v1818
        %v1820 = vpop.f32.mrf.mxu0
        %v1821 = vadd.f32 %v1732, %v1820
        %1822 = vmatmul.bf16.gmra.mxu0 %v945
        %v1823 = vpop.f32.mrf.mxu0
        %v1824 = vadd.f32 %v1735, %v1823
        %v1825 = vpop.f32.mrf.mxu0
        %v1826 = vadd.f32 %v1737, %v1825
        %1827 = vmatmul.bf16.gmra.mxu0 %v949
        %v1828 = vpop.f32.mrf.mxu0
        %v1829 = vadd.f32 %v1740, %v1828
        %v1830 = vpop.f32.mrf.mxu0
        %v1831 = vadd.f32 %v1742, %v1830
        %1832 = vmatmul.bf16.gmra.mxu0 %v953
        %v1833 = vpop.f32.mrf.mxu0
        %v1834 = vadd.f32 %v1745, %v1833
        %v1835 = vpop.f32.mrf.mxu0
        %v1836 = vadd.f32 %v1747, %v1835
        %1837 = vdwg.mxu0
        %1838 = vmatpush.bf16.msra.mxu0 %v1496
        %1839 = vmatpush.bf16.msra.mxu0 %v1492
        %1840 = vmatpush.bf16.msra.mxu0 %v1488
        %1841 = vmatpush.bf16.msra.mxu0 %v1484
        %1842 = vmatpush.bf16.msra.mxu0 %v1480
        %1843 = vmatpush.bf16.msra.mxu0 %v1476
        %1844 = vmatpush.bf16.msra.mxu0 %v1472
        %1845 = vmatpush.bf16.msra.mxu0 %v1468
        %1846 = vmatmul.bf16.gmra.mxu0 %v894
        %v1847 = vpop.f32.mrf.mxu0
        %v1848 = vadd.f32 %v1759, %v1847
        %v1849 = vpop.f32.mrf.mxu0
        %v1850 = vadd.f32 %v1761, %v1849
        %1851 = vmatmul.bf16.gmra.mxu0 %v898
        %v1852 = vpop.f32.mrf.mxu0
        %v1853 = vadd.f32 %v1764, %v1852
        %v1854 = vpop.f32.mrf.mxu0
        %v1855 = vadd.f32 %v1766, %v1854
        %1856 = vmatmul.bf16.gmra.mxu0 %v902
        %v1857 = vpop.f32.mrf.mxu0
        %v1858 = vadd.f32 %v1769, %v1857
        %v1859 = vpop.f32.mrf.mxu0
        %v1860 = vadd.f32 %v1771, %v1859
        %1861 = vmatmul.bf16.gmra.mxu0 %v906
        %v1862 = vpop.f32.mrf.mxu0
        %v1863 = vadd.f32 %v1774, %v1862
        %v1864 = vpop.f32.mrf.mxu0
        %v1865 = vadd.f32 %v1776, %v1864
        %1866 = vmatmul.bf16.gmra.mxu0 %v910
        %v1867 = vpop.f32.mrf.mxu0
        %v1868 = vadd.f32 %v1779, %v1867
        %v1869 = vpop.f32.mrf.mxu0
        %v1870 = vadd.f32 %v1781, %v1869
        %1871 = vmatmul.bf16.gmra.mxu0 %v914
        %v1872 = vpop.f32.mrf.mxu0
        %v1873 = vadd.f32 %v1784, %v1872
        %v1874 = vpop.f32.mrf.mxu0
        %v1875 = vadd.f32 %v1786, %v1874
        %1876 = vmatmul.bf16.gmra.mxu0 %v918
        %v1877 = vpop.f32.mrf.mxu0
        %v1878 = vadd.f32 %v1789, %v1877
        %v1879 = vpop.f32.mrf.mxu0
        %v1880 = vadd.f32 %v1791, %v1879
        %1881 = vmatmul.bf16.gmra.mxu0 %v922
        %v1882 = vpop.f32.mrf.mxu0
        %v1883 = vadd.f32 %v1794, %v1882
        %v1884 = vpop.f32.mrf.mxu0
        %v1885 = vadd.f32 %v1796, %v1884
        %1886 = vmatmul.bf16.gmra.mxu0 %v926
        %v1887 = vpop.f32.mrf.mxu0
        %v1888 = vadd.f32 %v1799, %v1887
        %v1889 = vpop.f32.mrf.mxu0
        %v1890 = vadd.f32 %v1801, %v1889
        %1891 = vmatmul.bf16.gmra.mxu0 %v930
        %v1892 = vpop.f32.mrf.mxu0
        %v1893 = vadd.f32 %v1804, %v1892
        %v1894 = vpop.f32.mrf.mxu0
        %v1895 = vadd.f32 %v1806, %v1894
        %1896 = vmatmul.bf16.gmra.mxu0 %v934
        %v1897 = vpop.f32.mrf.mxu0
        %v1898 = vadd.f32 %v1809, %v1897
        %v1899 = vpop.f32.mrf.mxu0
        %v1900 = vadd.f32 %v1811, %v1899
        %1901 = vmatmul.bf16.gmra.mxu0 %v938
        %v1902 = vpop.f32.mrf.mxu0
        %v1903 = vadd.f32 %v1814, %v1902
        %v1904 = vpop.f32.mrf.mxu0
        %v1905 = vadd.f32 %v1816, %v1904
        %1906 = vmatmul.bf16.gmra.mxu0 %v942
        %v1907 = vpop.f32.mrf.mxu0
        %v1908 = vadd.f32 %v1819, %v1907
        %v1909 = vpop.f32.mrf.mxu0
        %v1910 = vadd.f32 %v1821, %v1909
        %1911 = vmatmul.bf16.gmra.mxu0 %v946
        %v1912 = vpop.f32.mrf.mxu0
        %v1913 = vadd.f32 %v1824, %v1912
        %v1914 = vpop.f32.mrf.mxu0
        %v1915 = vadd.f32 %v1826, %v1914
        %1916 = vmatmul.bf16.gmra.mxu0 %v950
        %v1917 = vpop.f32.mrf.mxu0
        %v1918 = vadd.f32 %v1829, %v1917
        %v1919 = vpop.f32.mrf.mxu0
        %v1920 = vadd.f32 %v1831, %v1919
        %1921 = vmatmul.bf16.gmra.mxu0 %v954
        %v1922 = vpop.f32.mrf.mxu0
        %v1923 = vadd.f32 %v1834, %v1922
        %v1924 = vpop.f32.mrf.mxu0
        %v1925 = vadd.f32 %v1836, %v1924
        %1926 = vdwg.mxu0
        %1927 = vmatpush.bf16.msra.mxu0 %v1528
        %1928 = vmatpush.bf16.msra.mxu0 %v1524
        %1929 = vmatpush.bf16.msra.mxu0 %v1520
        %1930 = vmatpush.bf16.msra.mxu0 %v1516
        %1931 = vmatpush.bf16.msra.mxu0 %v1512
        %1932 = vmatpush.bf16.msra.mxu0 %v1508
        %1933 = vmatpush.bf16.msra.mxu0 %v1504
        %1934 = vmatpush.bf16.msra.mxu0 %v1500
        %1935 = vmatmul.bf16.gmra.mxu0 %v895
        %v1936 = vpop.f32.mrf.mxu0
        %v1937 = vadd.f32 %v1848, %v1936
        %v1938 = vpop.f32.mrf.mxu0
        %v1939 = vadd.f32 %v1850, %v1938
        %1940 = vmatmul.bf16.gmra.mxu0 %v899
        %v1941 = vpop.f32.mrf.mxu0
        %v1942 = vadd.f32 %v1853, %v1941
        %v1943 = vpop.f32.mrf.mxu0
        %v1944 = vadd.f32 %v1855, %v1943
        %1945 = vmatmul.bf16.gmra.mxu0 %v903
        %v1946 = vpop.f32.mrf.mxu0
        %v1947 = vadd.f32 %v1858, %v1946
        %v1948 = vpop.f32.mrf.mxu0
        %v1949 = vadd.f32 %v1860, %v1948
        %1950 = vmatmul.bf16.gmra.mxu0 %v907
        %v1951 = vpop.f32.mrf.mxu0
        %v1952 = vadd.f32 %v1863, %v1951
        %v1953 = vpop.f32.mrf.mxu0
        %v1954 = vadd.f32 %v1865, %v1953
        %1955 = vmatmul.bf16.gmra.mxu0 %v911
        %v1956 = vpop.f32.mrf.mxu0
        %v1957 = vadd.f32 %v1868, %v1956
        %v1958 = vpop.f32.mrf.mxu0
        %v1959 = vadd.f32 %v1870, %v1958
        %1960 = vmatmul.bf16.gmra.mxu0 %v915
        %v1961 = vpop.f32.mrf.mxu0
        %v1962 = vadd.f32 %v1873, %v1961
        %v1963 = vpop.f32.mrf.mxu0
        %v1964 = vadd.f32 %v1875, %v1963
        %1965 = vmatmul.bf16.gmra.mxu0 %v919
        %v1966 = vpop.f32.mrf.mxu0
        %v1967 = vadd.f32 %v1878, %v1966
        %v1968 = vpop.f32.mrf.mxu0
        %v1969 = vadd.f32 %v1880, %v1968
        %1970 = vmatmul.bf16.gmra.mxu0 %v923
        %v1971 = vpop.f32.mrf.mxu0
        %v1972 = vadd.f32 %v1883, %v1971
        %v1973 = vpop.f32.mrf.mxu0
        %v1974 = vadd.f32 %v1885, %v1973
        %1975 = vmatmul.bf16.gmra.mxu0 %v927
        %v1976 = vpop.f32.mrf.mxu0
        %v1977 = vadd.f32 %v1888, %v1976
        %v1978 = vpop.f32.mrf.mxu0
        %v1979 = vadd.f32 %v1890, %v1978
        %1980 = vmatmul.bf16.gmra.mxu0 %v931
        %v1981 = vpop.f32.mrf.mxu0
        %v1982 = vadd.f32 %v1893, %v1981
        %v1983 = vpop.f32.mrf.mxu0
        %v1984 = vadd.f32 %v1895, %v1983
        %1985 = vmatmul.bf16.gmra.mxu0 %v935
        %v1986 = vpop.f32.mrf.mxu0
        %v1987 = vadd.f32 %v1898, %v1986
        %v1988 = vpop.f32.mrf.mxu0
        %v1989 = vadd.f32 %v1900, %v1988
        %1990 = vmatmul.bf16.gmra.mxu0 %v939
        %v1991 = vpop.f32.mrf.mxu0
        %v1992 = vadd.f32 %v1903, %v1991
        %v1993 = vpop.f32.mrf.mxu0
        %v1994 = vadd.f32 %v1905, %v1993
        %1995 = vmatmul.bf16.gmra.mxu0 %v943
        %v1996 = vpop.f32.mrf.mxu0
        %v1997 = vadd.f32 %v1908, %v1996
        %v1998 = vpop.f32.mrf.mxu0
        %v1999 = vadd.f32 %v1910, %v1998
        %2000 = vmatmul.bf16.gmra.mxu0 %v947
        %v2001 = vpop.f32.mrf.mxu0
        %v2002 = vadd.f32 %v1913, %v2001
        %v2003 = vpop.f32.mrf.mxu0
        %v2004 = vadd.f32 %v1915, %v2003
        %2005 = vmatmul.bf16.gmra.mxu0 %v951
        %v2006 = vpop.f32.mrf.mxu0
        %v2007 = vadd.f32 %v1918, %v2006
        %v2008 = vpop.f32.mrf.mxu0
        %v2009 = vadd.f32 %v1920, %v2008
        %2010 = vmatmul.bf16.gmra.mxu0 %v955
        %v2011 = vpop.f32.mrf.mxu0
        %v2012 = vadd.f32 %v1923, %v2011
        %v2013 = vpop.f32.mrf.mxu0
        %v2014 = vadd.f32 %v1925, %v2013
        %2015 = vdwg.mxu0
        %2016 = vmatpush.bf16.msra.mxu0 %v1433
        %2017 = vmatpush.bf16.msra.mxu0 %v1429
        %2018 = vmatpush.bf16.msra.mxu0 %v1425
        %2019 = vmatpush.bf16.msra.mxu0 %v1421
        %2020 = vmatpush.bf16.msra.mxu0 %v1417
        %2021 = vmatpush.bf16.msra.mxu0 %v1413
        %2022 = vmatpush.bf16.msra.mxu0 %v1409
        %2023 = vmatpush.bf16.msra.mxu0 %v1405
        %2024 = vmatmul.bf16.gmra.mxu0 %v892
        %v2025 = vpop.f32.mrf.mxu0
        %v2026 = vadd.f32 0.0, %v2025
        %v2027 = vpop.f32.mrf.mxu0
        %v2028 = vadd.f32 0.0, %v2027
        %2029 = vmatmul.bf16.gmra.mxu0 %v896
        %v2030 = vpop.f32.mrf.mxu0
        %v2031 = vadd.f32 0.0, %v2030
        %v2032 = vpop.f32.mrf.mxu0
        %v2033 = vadd.f32 0.0, %v2032
        %2034 = vmatmul.bf16.gmra.mxu0 %v900
        %v2035 = vpop.f32.mrf.mxu0
        %v2036 = vadd.f32 0.0, %v2035
        %v2037 = vpop.f32.mrf.mxu0
        %v2038 = vadd.f32 0.0, %v2037
        %2039 = vmatmul.bf16.gmra.mxu0 %v904
        %v2040 = vpop.f32.mrf.mxu0
        %v2041 = vadd.f32 0.0, %v2040
        %v2042 = vpop.f32.mrf.mxu0
        %v2043 = vadd.f32 0.0, %v2042
        %2044 = vmatmul.bf16.gmra.mxu0 %v908
        %v2045 = vpop.f32.mrf.mxu0
        %v2046 = vadd.f32 0.0, %v2045
        %v2047 = vpop.f32.mrf.mxu0
        %v2048 = vadd.f32 0.0, %v2047
        %2049 = vmatmul.bf16.gmra.mxu0 %v912
        %v2050 = vpop.f32.mrf.mxu0
        %v2051 = vadd.f32 0.0, %v2050
        %v2052 = vpop.f32.mrf.mxu0
        %v2053 = vadd.f32 0.0, %v2052
        %2054 = vmatmul.bf16.gmra.mxu0 %v916
        %v2055 = vpop.f32.mrf.mxu0
        %v2056 = vadd.f32 0.0, %v2055
        %v2057 = vpop.f32.mrf.mxu0
        %v2058 = vadd.f32 0.0, %v2057
        %2059 = vmatmul.bf16.gmra.mxu0 %v920
        %v2060 = vpop.f32.mrf.mxu0
        %v2061 = vadd.f32 0.0, %v2060
        %v2062 = vpop.f32.mrf.mxu0
        %v2063 = vadd.f32 0.0, %v2062
        %2064 = vmatmul.bf16.gmra.mxu0 %v924
        %v2065 = vpop.f32.mrf.mxu0
        %v2066 = vadd.f32 0.0, %v2065
        %v2067 = vpop.f32.mrf.mxu0
        %v2068 = vadd.f32 0.0, %v2067
        %2069 = vmatmul.bf16.gmra.mxu0 %v928
        %v2070 = vpop.f32.mrf.mxu0
        %v2071 = vadd.f32 0.0, %v2070
        %v2072 = vpop.f32.mrf.mxu0
        %v2073 = vadd.f32 0.0, %v2072
        %2074 = vmatmul.bf16.gmra.mxu0 %v932
        %v2075 = vpop.f32.mrf.mxu0
        %v2076 = vadd.f32 0.0, %v2075
        %v2077 = vpop.f32.mrf.mxu0
        %v2078 = vadd.f32 0.0, %v2077
        %2079 = vmatmul.bf16.gmra.mxu0 %v936
        %v2080 = vpop.f32.mrf.mxu0
        %v2081 = vadd.f32 0.0, %v2080
        %v2082 = vpop.f32.mrf.mxu0
        %v2083 = vadd.f32 0.0, %v2082
        %2084 = vmatmul.bf16.gmra.mxu0 %v940
        %v2085 = vpop.f32.mrf.mxu0
        %v2086 = vadd.f32 0.0, %v2085
        %v2087 = vpop.f32.mrf.mxu0
        %v2088 = vadd.f32 0.0, %v2087
        %2089 = vmatmul.bf16.gmra.mxu0 %v944
        %v2090 = vpop.f32.mrf.mxu0
        %v2091 = vadd.f32 0.0, %v2090
        %v2092 = vpop.f32.mrf.mxu0
        %v2093 = vadd.f32 0.0, %v2092
        %2094 = vmatmul.bf16.gmra.mxu0 %v948
        %v2095 = vpop.f32.mrf.mxu0
        %v2096 = vadd.f32 0.0, %v2095
        %v2097 = vpop.f32.mrf.mxu0
        %v2098 = vadd.f32 0.0, %v2097
        %2099 = vmatmul.bf16.gmra.mxu0 %v952
        %v2100 = vpop.f32.mrf.mxu0
        %v2101 = vadd.f32 0.0, %v2100
        %v2102 = vpop.f32.mrf.mxu0
        %v2103 = vadd.f32 0.0, %v2102
        %2104 = vdwg.mxu0
        %2105 = vmatpush.bf16.msra.mxu0 %v1465
        %2106 = vmatpush.bf16.msra.mxu0 %v1461
        %2107 = vmatpush.bf16.msra.mxu0 %v1457
        %2108 = vmatpush.bf16.msra.mxu0 %v1453
        %2109 = vmatpush.bf16.msra.mxu0 %v1449
        %2110 = vmatpush.bf16.msra.mxu0 %v1445
        %2111 = vmatpush.bf16.msra.mxu0 %v1441
        %2112 = vmatpush.bf16.msra.mxu0 %v1437
        %2113 = vmatmul.bf16.gmra.mxu0 %v893
        %v2114 = vpop.f32.mrf.mxu0
        %v2115 = vadd.f32 %v2026, %v2114
        %v2116 = vpop.f32.mrf.mxu0
        %v2117 = vadd.f32 %v2028, %v2116
        %2118 = vmatmul.bf16.gmra.mxu0 %v897
        %v2119 = vpop.f32.mrf.mxu0
        %v2120 = vadd.f32 %v2031, %v2119
        %v2121 = vpop.f32.mrf.mxu0
        %v2122 = vadd.f32 %v2033, %v2121
        %2123 = vmatmul.bf16.gmra.mxu0 %v901
        %v2124 = vpop.f32.mrf.mxu0
        %v2125 = vadd.f32 %v2036, %v2124
        %v2126 = vpop.f32.mrf.mxu0
        %v2127 = vadd.f32 %v2038, %v2126
        %2128 = vmatmul.bf16.gmra.mxu0 %v905
        %v2129 = vpop.f32.mrf.mxu0
        %v2130 = vadd.f32 %v2041, %v2129
        %v2131 = vpop.f32.mrf.mxu0
        %v2132 = vadd.f32 %v2043, %v2131
        %2133 = vmatmul.bf16.gmra.mxu0 %v909
        %v2134 = vpop.f32.mrf.mxu0
        %v2135 = vadd.f32 %v2046, %v2134
        %v2136 = vpop.f32.mrf.mxu0
        %v2137 = vadd.f32 %v2048, %v2136
        %2138 = vmatmul.bf16.gmra.mxu0 %v913
        %v2139 = vpop.f32.mrf.mxu0
        %v2140 = vadd.f32 %v2051, %v2139
        %v2141 = vpop.f32.mrf.mxu0
        %v2142 = vadd.f32 %v2053, %v2141
        %2143 = vmatmul.bf16.gmra.mxu0 %v917
        %v2144 = vpop.f32.mrf.mxu0
        %v2145 = vadd.f32 %v2056, %v2144
        %v2146 = vpop.f32.mrf.mxu0
        %v2147 = vadd.f32 %v2058, %v2146
        %2148 = vmatmul.bf16.gmra.mxu0 %v921
        %v2149 = vpop.f32.mrf.mxu0
        %v2150 = vadd.f32 %v2061, %v2149
        %v2151 = vpop.f32.mrf.mxu0
        %v2152 = vadd.f32 %v2063, %v2151
        %2153 = vmatmul.bf16.gmra.mxu0 %v925
        %v2154 = vpop.f32.mrf.mxu0
        %v2155 = vadd.f32 %v2066, %v2154
        %v2156 = vpop.f32.mrf.mxu0
        %v2157 = vadd.f32 %v2068, %v2156
        %2158 = vmatmul.bf16.gmra.mxu0 %v929
        %v2159 = vpop.f32.mrf.mxu0
        %v2160 = vadd.f32 %v2071, %v2159
        %v2161 = vpop.f32.mrf.mxu0
        %v2162 = vadd.f32 %v2073, %v2161
        %2163 = vmatmul.bf16.gmra.mxu0 %v933
        %v2164 = vpop.f32.mrf.mxu0
        %v2165 = vadd.f32 %v2076, %v2164
        %v2166 = vpop.f32.mrf.mxu0
        %v2167 = vadd.f32 %v2078, %v2166
        %2168 = vmatmul.bf16.gmra.mxu0 %v937
        %v2169 = vpop.f32.mrf.mxu0
        %v2170 = vadd.f32 %v2081, %v2169
        %v2171 = vpop.f32.mrf.mxu0
        %v2172 = vadd.f32 %v2083, %v2171
        %2173 = vmatmul.bf16.gmra.mxu0 %v941
        %v2174 = vpop.f32.mrf.mxu0
        %v2175 = vadd.f32 %v2086, %v2174
        %v2176 = vpop.f32.mrf.mxu0
        %v2177 = vadd.f32 %v2088, %v2176
        %2178 = vmatmul.bf16.gmra.mxu0 %v945
        %v2179 = vpop.f32.mrf.mxu0
        %v2180 = vadd.f32 %v2091, %v2179
        %v2181 = vpop.f32.mrf.mxu0
        %v2182 = vadd.f32 %v2093, %v2181
        %2183 = vmatmul.bf16.gmra.mxu0 %v949
        %v2184 = vpop.f32.mrf.mxu0
        %v2185 = vadd.f32 %v2096, %v2184
        %v2186 = vpop.f32.mrf.mxu0
        %v2187 = vadd.f32 %v2098, %v2186
        %2188 = vmatmul.bf16.gmra.mxu0 %v953
        %v2189 = vpop.f32.mrf.mxu0
        %v2190 = vadd.f32 %v2101, %v2189
        %v2191 = vpop.f32.mrf.mxu0
        %v2192 = vadd.f32 %v2103, %v2191
        %2193 = vdwg.mxu0
        %2194 = vmatpush.bf16.msra.mxu0 %v1497
        %2195 = vmatpush.bf16.msra.mxu0 %v1493
        %2196 = vmatpush.bf16.msra.mxu0 %v1489
        %2197 = vmatpush.bf16.msra.mxu0 %v1485
        %2198 = vmatpush.bf16.msra.mxu0 %v1481
        %2199 = vmatpush.bf16.msra.mxu0 %v1477
        %2200 = vmatpush.bf16.msra.mxu0 %v1473
        %2201 = vmatpush.bf16.msra.mxu0 %v1469
        %2202 = vmatmul.bf16.gmra.mxu0 %v894
        %v2203 = vpop.f32.mrf.mxu0
        %v2204 = vadd.f32 %v2115, %v2203
        %v2205 = vpop.f32.mrf.mxu0
        %v2206 = vadd.f32 %v2117, %v2205
        %2207 = vmatmul.bf16.gmra.mxu0 %v898
        %v2208 = vpop.f32.mrf.mxu0
        %v2209 = vadd.f32 %v2120, %v2208
        %v2210 = vpop.f32.mrf.mxu0
        %v2211 = vadd.f32 %v2122, %v2210
        %2212 = vmatmul.bf16.gmra.mxu0 %v902
        %v2213 = vpop.f32.mrf.mxu0
        %v2214 = vadd.f32 %v2125, %v2213
        %v2215 = vpop.f32.mrf.mxu0
        %v2216 = vadd.f32 %v2127, %v2215
        %2217 = vmatmul.bf16.gmra.mxu0 %v906
        %v2218 = vpop.f32.mrf.mxu0
        %v2219 = vadd.f32 %v2130, %v2218
        %v2220 = vpop.f32.mrf.mxu0
        %v2221 = vadd.f32 %v2132, %v2220
        %2222 = vmatmul.bf16.gmra.mxu0 %v910
        %v2223 = vpop.f32.mrf.mxu0
        %v2224 = vadd.f32 %v2135, %v2223
        %v2225 = vpop.f32.mrf.mxu0
        %v2226 = vadd.f32 %v2137, %v2225
        %2227 = vmatmul.bf16.gmra.mxu0 %v914
        %v2228 = vpop.f32.mrf.mxu0
        %v2229 = vadd.f32 %v2140, %v2228
        %v2230 = vpop.f32.mrf.mxu0
        %v2231 = vadd.f32 %v2142, %v2230
        %2232 = vmatmul.bf16.gmra.mxu0 %v918
        %v2233 = vpop.f32.mrf.mxu0
        %v2234 = vadd.f32 %v2145, %v2233
        %v2235 = vpop.f32.mrf.mxu0
        %v2236 = vadd.f32 %v2147, %v2235
        %2237 = vmatmul.bf16.gmra.mxu0 %v922
        %v2238 = vpop.f32.mrf.mxu0
        %v2239 = vadd.f32 %v2150, %v2238
        %v2240 = vpop.f32.mrf.mxu0
        %v2241 = vadd.f32 %v2152, %v2240
        %2242 = vmatmul.bf16.gmra.mxu0 %v926
        %v2243 = vpop.f32.mrf.mxu0
        %v2244 = vadd.f32 %v2155, %v2243
        %v2245 = vpop.f32.mrf.mxu0
        %v2246 = vadd.f32 %v2157, %v2245
        %2247 = vmatmul.bf16.gmra.mxu0 %v930
        %v2248 = vpop.f32.mrf.mxu0
        %v2249 = vadd.f32 %v2160, %v2248
        %v2250 = vpop.f32.mrf.mxu0
        %v2251 = vadd.f32 %v2162, %v2250
        %2252 = vmatmul.bf16.gmra.mxu0 %v934
        %v2253 = vpop.f32.mrf.mxu0
        %v2254 = vadd.f32 %v2165, %v2253
        %v2255 = vpop.f32.mrf.mxu0
        %v2256 = vadd.f32 %v2167, %v2255
        %2257 = vmatmul.bf16.gmra.mxu0 %v938
        %v2258 = vpop.f32.mrf.mxu0
        %v2259 = vadd.f32 %v2170, %v2258
        %v2260 = vpop.f32.mrf.mxu0
        %v2261 = vadd.f32 %v2172, %v2260
        %2262 = vmatmul.bf16.gmra.mxu0 %v942
        %v2263 = vpop.f32.mrf.mxu0
        %v2264 = vadd.f32 %v2175, %v2263
        %v2265 = vpop.f32.mrf.mxu0
        %v2266 = vadd.f32 %v2177, %v2265
        %2267 = vmatmul.bf16.gmra.mxu0 %v946
        %v2268 = vpop.f32.mrf.mxu0
        %v2269 = vadd.f32 %v2180, %v2268
        %v2270 = vpop.f32.mrf.mxu0
        %v2271 = vadd.f32 %v2182, %v2270
        %2272 = vmatmul.bf16.gmra.mxu0 %v950
        %v2273 = vpop.f32.mrf.mxu0
        %v2274 = vadd.f32 %v2185, %v2273
        %v2275 = vpop.f32.mrf.mxu0
        %v2276 = vadd.f32 %v2187, %v2275
        %2277 = vmatmul.bf16.gmra.mxu0 %v954
        %v2278 = vpop.f32.mrf.mxu0
        %v2279 = vadd.f32 %v2190, %v2278
        %v2280 = vpop.f32.mrf.mxu0
        %v2281 = vadd.f32 %v2192, %v2280
        %2282 = vdwg.mxu0
        %2283 = vmatpush.bf16.msra.mxu0 %v1529
        %2284 = vmatpush.bf16.msra.mxu0 %v1525
        %2285 = vmatpush.bf16.msra.mxu0 %v1521
        %2286 = vmatpush.bf16.msra.mxu0 %v1517
        %2287 = vmatpush.bf16.msra.mxu0 %v1513
        %2288 = vmatpush.bf16.msra.mxu0 %v1509
        %2289 = vmatpush.bf16.msra.mxu0 %v1505
        %2290 = vmatpush.bf16.msra.mxu0 %v1501
        %2291 = vmatmul.bf16.gmra.mxu0 %v895
        %v2292 = vpop.f32.mrf.mxu0
        %v2293 = vadd.f32 %v2204, %v2292
        %v2294 = vpop.f32.mrf.mxu0
        %v2295 = vadd.f32 %v2206, %v2294
        %2296 = vmatmul.bf16.gmra.mxu0 %v899
        %v2297 = vpop.f32.mrf.mxu0
        %v2298 = vadd.f32 %v2209, %v2297
        %v2299 = vpop.f32.mrf.mxu0
        %v2300 = vadd.f32 %v2211, %v2299
        %2301 = vmatmul.bf16.gmra.mxu0 %v903
        %v2302 = vpop.f32.mrf.mxu0
        %v2303 = vadd.f32 %v2214, %v2302
        %v2304 = vpop.f32.mrf.mxu0
        %v2305 = vadd.f32 %v2216, %v2304
        %2306 = vmatmul.bf16.gmra.mxu0 %v907
        %v2307 = vpop.f32.mrf.mxu0
        %v2308 = vadd.f32 %v2219, %v2307
        %v2309 = vpop.f32.mrf.mxu0
        %v2310 = vadd.f32 %v2221, %v2309
        %2311 = vmatmul.bf16.gmra.mxu0 %v911
        %v2312 = vpop.f32.mrf.mxu0
        %v2313 = vadd.f32 %v2224, %v2312
        %v2314 = vpop.f32.mrf.mxu0
        %v2315 = vadd.f32 %v2226, %v2314
        %2316 = vmatmul.bf16.gmra.mxu0 %v915
        %v2317 = vpop.f32.mrf.mxu0
        %v2318 = vadd.f32 %v2229, %v2317
        %v2319 = vpop.f32.mrf.mxu0
        %v2320 = vadd.f32 %v2231, %v2319
        %2321 = vmatmul.bf16.gmra.mxu0 %v919
        %v2322 = vpop.f32.mrf.mxu0
        %v2323 = vadd.f32 %v2234, %v2322
        %v2324 = vpop.f32.mrf.mxu0
        %v2325 = vadd.f32 %v2236, %v2324
        %2326 = vmatmul.bf16.gmra.mxu0 %v923
        %v2327 = vpop.f32.mrf.mxu0
        %v2328 = vadd.f32 %v2239, %v2327
        %v2329 = vpop.f32.mrf.mxu0
        %v2330 = vadd.f32 %v2241, %v2329
        %2331 = vmatmul.bf16.gmra.mxu0 %v927
        %v2332 = vpop.f32.mrf.mxu0
        %v2333 = vadd.f32 %v2244, %v2332
        %v2334 = vpop.f32.mrf.mxu0
        %v2335 = vadd.f32 %v2246, %v2334
        %2336 = vmatmul.bf16.gmra.mxu0 %v931
        %v2337 = vpop.f32.mrf.mxu0
        %v2338 = vadd.f32 %v2249, %v2337
        %v2339 = vpop.f32.mrf.mxu0
        %v2340 = vadd.f32 %v2251, %v2339
        %2341 = vmatmul.bf16.gmra.mxu0 %v935
        %v2342 = vpop.f32.mrf.mxu0
        %v2343 = vadd.f32 %v2254, %v2342
        %v2344 = vpop.f32.mrf.mxu0
        %v2345 = vadd.f32 %v2256, %v2344
        %2346 = vmatmul.bf16.gmra.mxu0 %v939
        %v2347 = vpop.f32.mrf.mxu0
        %v2348 = vadd.f32 %v2259, %v2347
        %v2349 = vpop.f32.mrf.mxu0
        %v2350 = vadd.f32 %v2261, %v2349
        %2351 = vmatmul.bf16.gmra.mxu0 %v943
        %v2352 = vpop.f32.mrf.mxu0
        %v2353 = vadd.f32 %v2264, %v2352
        %v2354 = vpop.f32.mrf.mxu0
        %v2355 = vadd.f32 %v2266, %v2354
        %2356 = vmatmul.bf16.gmra.mxu0 %v947
        %v2357 = vpop.f32.mrf.mxu0
        %v2358 = vadd.f32 %v2269, %v2357
        %v2359 = vpop.f32.mrf.mxu0
        %v2360 = vadd.f32 %v2271, %v2359
        %2361 = vmatmul.bf16.gmra.mxu0 %v951
        %v2362 = vpop.f32.mrf.mxu0
        %v2363 = vadd.f32 %v2274, %v2362
        %v2364 = vpop.f32.mrf.mxu0
        %v2365 = vadd.f32 %v2276, %v2364
        %2366 = vmatmul.bf16.gmra.mxu0 %v955
        %v2367 = vpop.f32.mrf.mxu0
        %v2368 = vadd.f32 %v2279, %v2367
        %v2369 = vpop.f32.mrf.mxu0
        %v2370 = vadd.f32 %v2281, %v2369
        %2371 = vdwg.mxu0
        %2372 = vmatpush.bf16.msra.mxu0 %v1434
        %2373 = vmatpush.bf16.msra.mxu0 %v1430
        %2374 = vmatpush.bf16.msra.mxu0 %v1426
        %2375 = vmatpush.bf16.msra.mxu0 %v1422
        %2376 = vmatpush.bf16.msra.mxu0 %v1418
        %2377 = vmatpush.bf16.msra.mxu0 %v1414
        %2378 = vmatpush.bf16.msra.mxu0 %v1410
        %2379 = vmatpush.bf16.msra.mxu0 %v1406
        %2380 = vmatmul.bf16.gmra.mxu0 %v892
        %v2381 = vpop.f32.mrf.mxu0
        %v2382 = vadd.f32 0.0, %v2381
        %v2383 = vpop.f32.mrf.mxu0
        %v2384 = vadd.f32 0.0, %v2383
        %2385 = vmatmul.bf16.gmra.mxu0 %v896
        %v2386 = vpop.f32.mrf.mxu0
        %v2387 = vadd.f32 0.0, %v2386
        %v2388 = vpop.f32.mrf.mxu0
        %v2389 = vadd.f32 0.0, %v2388
        %2390 = vmatmul.bf16.gmra.mxu0 %v900
        %v2391 = vpop.f32.mrf.mxu0
        %v2392 = vadd.f32 0.0, %v2391
        %v2393 = vpop.f32.mrf.mxu0
        %v2394 = vadd.f32 0.0, %v2393
        %2395 = vmatmul.bf16.gmra.mxu0 %v904
        %v2396 = vpop.f32.mrf.mxu0
        %v2397 = vadd.f32 0.0, %v2396
        %v2398 = vpop.f32.mrf.mxu0
        %v2399 = vadd.f32 0.0, %v2398
        %2400 = vmatmul.bf16.gmra.mxu0 %v908
        %v2401 = vpop.f32.mrf.mxu0
        %v2402 = vadd.f32 0.0, %v2401
        %v2403 = vpop.f32.mrf.mxu0
        %v2404 = vadd.f32 0.0, %v2403
        %2405 = vmatmul.bf16.gmra.mxu0 %v912
        %v2406 = vpop.f32.mrf.mxu0
        %v2407 = vadd.f32 0.0, %v2406
        %v2408 = vpop.f32.mrf.mxu0
        %v2409 = vadd.f32 0.0, %v2408
        %2410 = vmatmul.bf16.gmra.mxu0 %v916
        %v2411 = vpop.f32.mrf.mxu0
        %v2412 = vadd.f32 0.0, %v2411
        %v2413 = vpop.f32.mrf.mxu0
        %v2414 = vadd.f32 0.0, %v2413
        %2415 = vmatmul.bf16.gmra.mxu0 %v920
        %v2416 = vpop.f32.mrf.mxu0
        %v2417 = vadd.f32 0.0, %v2416
        %v2418 = vpop.f32.mrf.mxu0
        %v2419 = vadd.f32 0.0, %v2418
        %2420 = vmatmul.bf16.gmra.mxu0 %v924
        %v2421 = vpop.f32.mrf.mxu0
        %v2422 = vadd.f32 0.0, %v2421
        %v2423 = vpop.f32.mrf.mxu0
        %v2424 = vadd.f32 0.0, %v2423
        %2425 = vmatmul.bf16.gmra.mxu0 %v928
        %v2426 = vpop.f32.mrf.mxu0
        %v2427 = vadd.f32 0.0, %v2426
        %v2428 = vpop.f32.mrf.mxu0
        %v2429 = vadd.f32 0.0, %v2428
        %2430 = vmatmul.bf16.gmra.mxu0 %v932
        %v2431 = vpop.f32.mrf.mxu0
        %v2432 = vadd.f32 0.0, %v2431
        %v2433 = vpop.f32.mrf.mxu0
        %v2434 = vadd.f32 0.0, %v2433
        %2435 = vmatmul.bf16.gmra.mxu0 %v936
        %v2436 = vpop.f32.mrf.mxu0
        %v2437 = vadd.f32 0.0, %v2436
        %v2438 = vpop.f32.mrf.mxu0
        %v2439 = vadd.f32 0.0, %v2438
        %2440 = vmatmul.bf16.gmra.mxu0 %v940
        %v2441 = vpop.f32.mrf.mxu0
        %v2442 = vadd.f32 0.0, %v2441
        %v2443 = vpop.f32.mrf.mxu0
        %v2444 = vadd.f32 0.0, %v2443
        %2445 = vmatmul.bf16.gmra.mxu0 %v944
        %v2446 = vpop.f32.mrf.mxu0
        %v2447 = vadd.f32 0.0, %v2446
        %v2448 = vpop.f32.mrf.mxu0
        %v2449 = vadd.f32 0.0, %v2448
        %2450 = vmatmul.bf16.gmra.mxu0 %v948
        %v2451 = vpop.f32.mrf.mxu0
        %v2452 = vadd.f32 0.0, %v2451
        %v2453 = vpop.f32.mrf.mxu0
        %v2454 = vadd.f32 0.0, %v2453
        %2455 = vmatmul.bf16.gmra.mxu0 %v952
        %v2456 = vpop.f32.mrf.mxu0
        %v2457 = vadd.f32 0.0, %v2456
        %v2458 = vpop.f32.mrf.mxu0
        %v2459 = vadd.f32 0.0, %v2458
        %2460 = vdwg.mxu0
        %2461 = vmatpush.bf16.msra.mxu0 %v1466
        %2462 = vmatpush.bf16.msra.mxu0 %v1462
        %2463 = vmatpush.bf16.msra.mxu0 %v1458
        %2464 = vmatpush.bf16.msra.mxu0 %v1454
        %2465 = vmatpush.bf16.msra.mxu0 %v1450
        %2466 = vmatpush.bf16.msra.mxu0 %v1446
        %2467 = vmatpush.bf16.msra.mxu0 %v1442
        %2468 = vmatpush.bf16.msra.mxu0 %v1438
        %2469 = vmatmul.bf16.gmra.mxu0 %v893
        %v2470 = vpop.f32.mrf.mxu0
        %v2471 = vadd.f32 %v2382, %v2470
        %v2472 = vpop.f32.mrf.mxu0
        %v2473 = vadd.f32 %v2384, %v2472
        %2474 = vmatmul.bf16.gmra.mxu0 %v897
        %v2475 = vpop.f32.mrf.mxu0
        %v2476 = vadd.f32 %v2387, %v2475
        %v2477 = vpop.f32.mrf.mxu0
        %v2478 = vadd.f32 %v2389, %v2477
        %2479 = vmatmul.bf16.gmra.mxu0 %v901
        %v2480 = vpop.f32.mrf.mxu0
        %v2481 = vadd.f32 %v2392, %v2480
        %v2482 = vpop.f32.mrf.mxu0
        %v2483 = vadd.f32 %v2394, %v2482
        %2484 = vmatmul.bf16.gmra.mxu0 %v905
        %v2485 = vpop.f32.mrf.mxu0
        %v2486 = vadd.f32 %v2397, %v2485
        %v2487 = vpop.f32.mrf.mxu0
        %v2488 = vadd.f32 %v2399, %v2487
        %2489 = vmatmul.bf16.gmra.mxu0 %v909
        %v2490 = vpop.f32.mrf.mxu0
        %v2491 = vadd.f32 %v2402, %v2490
        %v2492 = vpop.f32.mrf.mxu0
        %v2493 = vadd.f32 %v2404, %v2492
        %2494 = vmatmul.bf16.gmra.mxu0 %v913
        %v2495 = vpop.f32.mrf.mxu0
        %v2496 = vadd.f32 %v2407, %v2495
        %v2497 = vpop.f32.mrf.mxu0
        %v2498 = vadd.f32 %v2409, %v2497
        %2499 = vmatmul.bf16.gmra.mxu0 %v917
        %v2500 = vpop.f32.mrf.mxu0
        %v2501 = vadd.f32 %v2412, %v2500
        %v2502 = vpop.f32.mrf.mxu0
        %v2503 = vadd.f32 %v2414, %v2502
        %2504 = vmatmul.bf16.gmra.mxu0 %v921
        %v2505 = vpop.f32.mrf.mxu0
        %v2506 = vadd.f32 %v2417, %v2505
        %v2507 = vpop.f32.mrf.mxu0
        %v2508 = vadd.f32 %v2419, %v2507
        %2509 = vmatmul.bf16.gmra.mxu0 %v925
        %v2510 = vpop.f32.mrf.mxu0
        %v2511 = vadd.f32 %v2422, %v2510
        %v2512 = vpop.f32.mrf.mxu0
        %v2513 = vadd.f32 %v2424, %v2512
        %2514 = vmatmul.bf16.gmra.mxu0 %v929
        %v2515 = vpop.f32.mrf.mxu0
        %v2516 = vadd.f32 %v2427, %v2515
        %v2517 = vpop.f32.mrf.mxu0
        %v2518 = vadd.f32 %v2429, %v2517
        %2519 = vmatmul.bf16.gmra.mxu0 %v933
        %v2520 = vpop.f32.mrf.mxu0
        %v2521 = vadd.f32 %v2432, %v2520
        %v2522 = vpop.f32.mrf.mxu0
        %v2523 = vadd.f32 %v2434, %v2522
        %2524 = vmatmul.bf16.gmra.mxu0 %v937
        %v2525 = vpop.f32.mrf.mxu0
        %v2526 = vadd.f32 %v2437, %v2525
        %v2527 = vpop.f32.mrf.mxu0
        %v2528 = vadd.f32 %v2439, %v2527
        %2529 = vmatmul.bf16.gmra.mxu0 %v941
        %v2530 = vpop.f32.mrf.mxu0
        %v2531 = vadd.f32 %v2442, %v2530
        %v2532 = vpop.f32.mrf.mxu0
        %v2533 = vadd.f32 %v2444, %v2532
        %2534 = vmatmul.bf16.gmra.mxu0 %v945
        %v2535 = vpop.f32.mrf.mxu0
        %v2536 = vadd.f32 %v2447, %v2535
        %v2537 = vpop.f32.mrf.mxu0
        %v2538 = vadd.f32 %v2449, %v2537
        %2539 = vmatmul.bf16.gmra.mxu0 %v949
        %v2540 = vpop.f32.mrf.mxu0
        %v2541 = vadd.f32 %v2452, %v2540
        %v2542 = vpop.f32.mrf.mxu0
        %v2543 = vadd.f32 %v2454, %v2542
        %2544 = vmatmul.bf16.gmra.mxu0 %v953
        %v2545 = vpop.f32.mrf.mxu0
        %v2546 = vadd.f32 %v2457, %v2545
        %v2547 = vpop.f32.mrf.mxu0
        %v2548 = vadd.f32 %v2459, %v2547
        %2549 = vdwg.mxu0
        %2550 = vmatpush.bf16.msra.mxu0 %v1498
        %2551 = vmatpush.bf16.msra.mxu0 %v1494
        %2552 = vmatpush.bf16.msra.mxu0 %v1490
        %2553 = vmatpush.bf16.msra.mxu0 %v1486
        %2554 = vmatpush.bf16.msra.mxu0 %v1482
        %2555 = vmatpush.bf16.msra.mxu0 %v1478
        %2556 = vmatpush.bf16.msra.mxu0 %v1474
        %2557 = vmatpush.bf16.msra.mxu0 %v1470
        %2558 = vmatmul.bf16.gmra.mxu0 %v894
        %v2559 = vpop.f32.mrf.mxu0
        %v2560 = vadd.f32 %v2471, %v2559
        %v2561 = vpop.f32.mrf.mxu0
        %v2562 = vadd.f32 %v2473, %v2561
        %2563 = vmatmul.bf16.gmra.mxu0 %v898
        %v2564 = vpop.f32.mrf.mxu0
        %v2565 = vadd.f32 %v2476, %v2564
        %v2566 = vpop.f32.mrf.mxu0
        %v2567 = vadd.f32 %v2478, %v2566
        %2568 = vmatmul.bf16.gmra.mxu0 %v902
        %v2569 = vpop.f32.mrf.mxu0
        %v2570 = vadd.f32 %v2481, %v2569
        %v2571 = vpop.f32.mrf.mxu0
        %v2572 = vadd.f32 %v2483, %v2571
        %2573 = vmatmul.bf16.gmra.mxu0 %v906
        %v2574 = vpop.f32.mrf.mxu0
        %v2575 = vadd.f32 %v2486, %v2574
        %v2576 = vpop.f32.mrf.mxu0
        %v2577 = vadd.f32 %v2488, %v2576
        %2578 = vmatmul.bf16.gmra.mxu0 %v910
        %v2579 = vpop.f32.mrf.mxu0
        %v2580 = vadd.f32 %v2491, %v2579
        %v2581 = vpop.f32.mrf.mxu0
        %v2582 = vadd.f32 %v2493, %v2581
        %2583 = vmatmul.bf16.gmra.mxu0 %v914
        %v2584 = vpop.f32.mrf.mxu0
        %v2585 = vadd.f32 %v2496, %v2584
        %v2586 = vpop.f32.mrf.mxu0
        %v2587 = vadd.f32 %v2498, %v2586
        %2588 = vmatmul.bf16.gmra.mxu0 %v918
        %v2589 = vpop.f32.mrf.mxu0
        %v2590 = vadd.f32 %v2501, %v2589
        %v2591 = vpop.f32.mrf.mxu0
        %v2592 = vadd.f32 %v2503, %v2591
        %2593 = vmatmul.bf16.gmra.mxu0 %v922
        %v2594 = vpop.f32.mrf.mxu0
        %v2595 = vadd.f32 %v2506, %v2594
        %v2596 = vpop.f32.mrf.mxu0
        %v2597 = vadd.f32 %v2508, %v2596
        %2598 = vmatmul.bf16.gmra.mxu0 %v926
        %v2599 = vpop.f32.mrf.mxu0
        %v2600 = vadd.f32 %v2511, %v2599
        %v2601 = vpop.f32.mrf.mxu0
        %v2602 = vadd.f32 %v2513, %v2601
        %2603 = vmatmul.bf16.gmra.mxu0 %v930
        %v2604 = vpop.f32.mrf.mxu0
        %v2605 = vadd.f32 %v2516, %v2604
        %v2606 = vpop.f32.mrf.mxu0
        %v2607 = vadd.f32 %v2518, %v2606
        %2608 = vmatmul.bf16.gmra.mxu0 %v934
        %v2609 = vpop.f32.mrf.mxu0
        %v2610 = vadd.f32 %v2521, %v2609
        %v2611 = vpop.f32.mrf.mxu0
        %v2612 = vadd.f32 %v2523, %v2611
        %2613 = vmatmul.bf16.gmra.mxu0 %v938
        %v2614 = vpop.f32.mrf.mxu0
        %v2615 = vadd.f32 %v2526, %v2614
        %v2616 = vpop.f32.mrf.mxu0
        %v2617 = vadd.f32 %v2528, %v2616
        %2618 = vmatmul.bf16.gmra.mxu0 %v942
        %v2619 = vpop.f32.mrf.mxu0
        %v2620 = vadd.f32 %v2531, %v2619
        %v2621 = vpop.f32.mrf.mxu0
        %v2622 = vadd.f32 %v2533, %v2621
        %2623 = vmatmul.bf16.gmra.mxu0 %v946
        %v2624 = vpop.f32.mrf.mxu0
        %v2625 = vadd.f32 %v2536, %v2624
        %v2626 = vpop.f32.mrf.mxu0
        %v2627 = vadd.f32 %v2538, %v2626
        %2628 = vmatmul.bf16.gmra.mxu0 %v950
        %v2629 = vpop.f32.mrf.mxu0
        %v2630 = vadd.f32 %v2541, %v2629
        %v2631 = vpop.f32.mrf.mxu0
        %v2632 = vadd.f32 %v2543, %v2631
        %2633 = vmatmul.bf16.gmra.mxu0 %v954
        %v2634 = vpop.f32.mrf.mxu0
        %v2635 = vadd.f32 %v2546, %v2634
        %v2636 = vpop.f32.mrf.mxu0
        %v2637 = vadd.f32 %v2548, %v2636
        %2638 = vdwg.mxu0
        %2639 = vmatpush.bf16.msra.mxu0 %v1530
        %2640 = vmatpush.bf16.msra.mxu0 %v1526
        %2641 = vmatpush.bf16.msra.mxu0 %v1522
        %2642 = vmatpush.bf16.msra.mxu0 %v1518
        %2643 = vmatpush.bf16.msra.mxu0 %v1514
        %2644 = vmatpush.bf16.msra.mxu0 %v1510
        %2645 = vmatpush.bf16.msra.mxu0 %v1506
        %2646 = vmatpush.bf16.msra.mxu0 %v1502
        %2647 = vmatmul.bf16.gmra.mxu0 %v895
        %v2648 = vpop.f32.mrf.mxu0
        %v2649 = vadd.f32 %v2560, %v2648
        %v2650 = vpop.f32.mrf.mxu0
        %v2651 = vadd.f32 %v2562, %v2650
        %2652 = vmatmul.bf16.gmra.mxu0 %v899
        %v2653 = vpop.f32.mrf.mxu0
        %v2654 = vadd.f32 %v2565, %v2653
        %v2655 = vpop.f32.mrf.mxu0
        %v2656 = vadd.f32 %v2567, %v2655
        %2657 = vmatmul.bf16.gmra.mxu0 %v903
        %v2658 = vpop.f32.mrf.mxu0
        %v2659 = vadd.f32 %v2570, %v2658
        %v2660 = vpop.f32.mrf.mxu0
        %v2661 = vadd.f32 %v2572, %v2660
        %2662 = vmatmul.bf16.gmra.mxu0 %v907
        %v2663 = vpop.f32.mrf.mxu0
        %v2664 = vadd.f32 %v2575, %v2663
        %v2665 = vpop.f32.mrf.mxu0
        %v2666 = vadd.f32 %v2577, %v2665
        %2667 = vmatmul.bf16.gmra.mxu0 %v911
        %v2668 = vpop.f32.mrf.mxu0
        %v2669 = vadd.f32 %v2580, %v2668
        %v2670 = vpop.f32.mrf.mxu0
        %v2671 = vadd.f32 %v2582, %v2670
        %2672 = vmatmul.bf16.gmra.mxu0 %v915
        %v2673 = vpop.f32.mrf.mxu0
        %v2674 = vadd.f32 %v2585, %v2673
        %v2675 = vpop.f32.mrf.mxu0
        %v2676 = vadd.f32 %v2587, %v2675
        %2677 = vmatmul.bf16.gmra.mxu0 %v919
        %v2678 = vpop.f32.mrf.mxu0
        %v2679 = vadd.f32 %v2590, %v2678
        %v2680 = vpop.f32.mrf.mxu0
        %v2681 = vadd.f32 %v2592, %v2680
        %2682 = vmatmul.bf16.gmra.mxu0 %v923
        %v2683 = vpop.f32.mrf.mxu0
        %v2684 = vadd.f32 %v2595, %v2683
        %v2685 = vpop.f32.mrf.mxu0
        %v2686 = vadd.f32 %v2597, %v2685
        %2687 = vmatmul.bf16.gmra.mxu0 %v927
        %v2688 = vpop.f32.mrf.mxu0
        %v2689 = vadd.f32 %v2600, %v2688
        %v2690 = vpop.f32.mrf.mxu0
        %v2691 = vadd.f32 %v2602, %v2690
        %2692 = vmatmul.bf16.gmra.mxu0 %v931
        %v2693 = vpop.f32.mrf.mxu0
        %v2694 = vadd.f32 %v2605, %v2693
        %v2695 = vpop.f32.mrf.mxu0
        %v2696 = vadd.f32 %v2607, %v2695
        %2697 = vmatmul.bf16.gmra.mxu0 %v935
        %v2698 = vpop.f32.mrf.mxu0
        %v2699 = vadd.f32 %v2610, %v2698
        %v2700 = vpop.f32.mrf.mxu0
        %v2701 = vadd.f32 %v2612, %v2700
        %2702 = vmatmul.bf16.gmra.mxu0 %v939
        %v2703 = vpop.f32.mrf.mxu0
        %v2704 = vadd.f32 %v2615, %v2703
        %v2705 = vpop.f32.mrf.mxu0
        %v2706 = vadd.f32 %v2617, %v2705
        %2707 = vmatmul.bf16.gmra.mxu0 %v943
        %v2708 = vpop.f32.mrf.mxu0
        %v2709 = vadd.f32 %v2620, %v2708
        %v2710 = vpop.f32.mrf.mxu0
        %v2711 = vadd.f32 %v2622, %v2710
        %2712 = vmatmul.bf16.gmra.mxu0 %v947
        %v2713 = vpop.f32.mrf.mxu0
        %v2714 = vadd.f32 %v2625, %v2713
        %v2715 = vpop.f32.mrf.mxu0
        %v2716 = vadd.f32 %v2627, %v2715
        %2717 = vmatmul.bf16.gmra.mxu0 %v951
        %v2718 = vpop.f32.mrf.mxu0
        %v2719 = vadd.f32 %v2630, %v2718
        %v2720 = vpop.f32.mrf.mxu0
        %v2721 = vadd.f32 %v2632, %v2720
        %2722 = vmatmul.bf16.gmra.mxu0 %v955
        %v2723 = vpop.f32.mrf.mxu0
        %v2724 = vadd.f32 %v2635, %v2723
        %v2725 = vpop.f32.mrf.mxu0
        %v2726 = vadd.f32 %v2637, %v2725
        %2727 = vdwg.mxu0
        %2728 = vmatpush.bf16.msra.mxu0 %v1435
        %2729 = vmatpush.bf16.msra.mxu0 %v1431
        %2730 = vmatpush.bf16.msra.mxu0 %v1427
        %2731 = vmatpush.bf16.msra.mxu0 %v1423
        %2732 = vmatpush.bf16.msra.mxu0 %v1419
        %2733 = vmatpush.bf16.msra.mxu0 %v1415
        %2734 = vmatpush.bf16.msra.mxu0 %v1411
        %2735 = vmatpush.bf16.msra.mxu0 %v1407
        %2736 = vmatmul.bf16.gmra.mxu0 %v892
        %v2737 = vpop.f32.mrf.mxu0
        %v2738 = vadd.f32 0.0, %v2737
        %v2739 = vpop.f32.mrf.mxu0
        %v2740 = vadd.f32 0.0, %v2739
        %2741 = vmatmul.bf16.gmra.mxu0 %v896
        %v2742 = vpop.f32.mrf.mxu0
        %v2743 = vadd.f32 0.0, %v2742
        %v2744 = vpop.f32.mrf.mxu0
        %v2745 = vadd.f32 0.0, %v2744
        %2746 = vmatmul.bf16.gmra.mxu0 %v900
        %v2747 = vpop.f32.mrf.mxu0
        %v2748 = vadd.f32 0.0, %v2747
        %v2749 = vpop.f32.mrf.mxu0
        %v2750 = vadd.f32 0.0, %v2749
        %2751 = vmatmul.bf16.gmra.mxu0 %v904
        %v2752 = vpop.f32.mrf.mxu0
        %v2753 = vadd.f32 0.0, %v2752
        %v2754 = vpop.f32.mrf.mxu0
        %v2755 = vadd.f32 0.0, %v2754
        %2756 = vmatmul.bf16.gmra.mxu0 %v908
        %v2757 = vpop.f32.mrf.mxu0
        %v2758 = vadd.f32 0.0, %v2757
        %v2759 = vpop.f32.mrf.mxu0
        %v2760 = vadd.f32 0.0, %v2759
        %2761 = vmatmul.bf16.gmra.mxu0 %v912
        %v2762 = vpop.f32.mrf.mxu0
        %v2763 = vadd.f32 0.0, %v2762
        %v2764 = vpop.f32.mrf.mxu0
        %v2765 = vadd.f32 0.0, %v2764
        %2766 = vmatmul.bf16.gmra.mxu0 %v916
        %v2767 = vpop.f32.mrf.mxu0
        %v2768 = vadd.f32 0.0, %v2767
        %v2769 = vpop.f32.mrf.mxu0
        %v2770 = vadd.f32 0.0, %v2769
        %2771 = vmatmul.bf16.gmra.mxu0 %v920
        %v2772 = vpop.f32.mrf.mxu0
        %v2773 = vadd.f32 0.0, %v2772
        %v2774 = vpop.f32.mrf.mxu0
        %v2775 = vadd.f32 0.0, %v2774
        %2776 = vmatmul.bf16.gmra.mxu0 %v924
        %v2777 = vpop.f32.mrf.mxu0
        %v2778 = vadd.f32 0.0, %v2777
        %v2779 = vpop.f32.mrf.mxu0
        %v2780 = vadd.f32 0.0, %v2779
        %2781 = vmatmul.bf16.gmra.mxu0 %v928
        %v2782 = vpop.f32.mrf.mxu0
        %v2783 = vadd.f32 0.0, %v2782
        %v2784 = vpop.f32.mrf.mxu0
        %v2785 = vadd.f32 0.0, %v2784
        %2786 = vmatmul.bf16.gmra.mxu0 %v932
        %v2787 = vpop.f32.mrf.mxu0
        %v2788 = vadd.f32 0.0, %v2787
        %v2789 = vpop.f32.mrf.mxu0
        %v2790 = vadd.f32 0.0, %v2789
        %2791 = vmatmul.bf16.gmra.mxu0 %v936
        %v2792 = vpop.f32.mrf.mxu0
        %v2793 = vadd.f32 0.0, %v2792
        %v2794 = vpop.f32.mrf.mxu0
        %v2795 = vadd.f32 0.0, %v2794
        %2796 = vmatmul.bf16.gmra.mxu0 %v940
        %v2797 = vpop.f32.mrf.mxu0
        %v2798 = vadd.f32 0.0, %v2797
        %v2799 = vpop.f32.mrf.mxu0
        %v2800 = vadd.f32 0.0, %v2799
        %2801 = vmatmul.bf16.gmra.mxu0 %v944
        %v2802 = vpop.f32.mrf.mxu0
        %v2803 = vadd.f32 0.0, %v2802
        %v2804 = vpop.f32.mrf.mxu0
        %v2805 = vadd.f32 0.0, %v2804
        %2806 = vmatmul.bf16.gmra.mxu0 %v948
        %v2807 = vpop.f32.mrf.mxu0
        %v2808 = vadd.f32 0.0, %v2807
        %v2809 = vpop.f32.mrf.mxu0
        %v2810 = vadd.f32 0.0, %v2809
        %2811 = vmatmul.bf16.gmra.mxu0 %v952
        %v2812 = vpop.f32.mrf.mxu0
        %v2813 = vadd.f32 0.0, %v2812
        %v2814 = vpop.f32.mrf.mxu0
        %v2815 = vadd.f32 0.0, %v2814
        %2816 = vdwg.mxu0
        %2817 = vmatpush.bf16.msra.mxu0 %v1467
        %2818 = vmatpush.bf16.msra.mxu0 %v1463
        %2819 = vmatpush.bf16.msra.mxu0 %v1459
        %2820 = vmatpush.bf16.msra.mxu0 %v1455
        %2821 = vmatpush.bf16.msra.mxu0 %v1451
        %2822 = vmatpush.bf16.msra.mxu0 %v1447
        %2823 = vmatpush.bf16.msra.mxu0 %v1443
        %2824 = vmatpush.bf16.msra.mxu0 %v1439
        %2825 = vmatmul.bf16.gmra.mxu0 %v893
        %v2826 = vpop.f32.mrf.mxu0
        %v2827 = vadd.f32 %v2738, %v2826
        %v2828 = vpop.f32.mrf.mxu0
        %v2829 = vadd.f32 %v2740, %v2828
        %2830 = vmatmul.bf16.gmra.mxu0 %v897
        %v2831 = vpop.f32.mrf.mxu0
        %v2832 = vadd.f32 %v2743, %v2831
        %v2833 = vpop.f32.mrf.mxu0
        %v2834 = vadd.f32 %v2745, %v2833
        %2835 = vmatmul.bf16.gmra.mxu0 %v901
        %v2836 = vpop.f32.mrf.mxu0
        %v2837 = vadd.f32 %v2748, %v2836
        %v2838 = vpop.f32.mrf.mxu0
        %v2839 = vadd.f32 %v2750, %v2838
        %2840 = vmatmul.bf16.gmra.mxu0 %v905
        %v2841 = vpop.f32.mrf.mxu0
        %v2842 = vadd.f32 %v2753, %v2841
        %v2843 = vpop.f32.mrf.mxu0
        %v2844 = vadd.f32 %v2755, %v2843
        %2845 = vmatmul.bf16.gmra.mxu0 %v909
        %v2846 = vpop.f32.mrf.mxu0
        %v2847 = vadd.f32 %v2758, %v2846
        %v2848 = vpop.f32.mrf.mxu0
        %v2849 = vadd.f32 %v2760, %v2848
        %2850 = vmatmul.bf16.gmra.mxu0 %v913
        %v2851 = vpop.f32.mrf.mxu0
        %v2852 = vadd.f32 %v2763, %v2851
        %v2853 = vpop.f32.mrf.mxu0
        %v2854 = vadd.f32 %v2765, %v2853
        %2855 = vmatmul.bf16.gmra.mxu0 %v917
        %v2856 = vpop.f32.mrf.mxu0
        %v2857 = vadd.f32 %v2768, %v2856
        %v2858 = vpop.f32.mrf.mxu0
        %v2859 = vadd.f32 %v2770, %v2858
        %2860 = vmatmul.bf16.gmra.mxu0 %v921
        %v2861 = vpop.f32.mrf.mxu0
        %v2862 = vadd.f32 %v2773, %v2861
        %v2863 = vpop.f32.mrf.mxu0
        %v2864 = vadd.f32 %v2775, %v2863
        %2865 = vmatmul.bf16.gmra.mxu0 %v925
        %v2866 = vpop.f32.mrf.mxu0
        %v2867 = vadd.f32 %v2778, %v2866
        %v2868 = vpop.f32.mrf.mxu0
        %v2869 = vadd.f32 %v2780, %v2868
        %2870 = vmatmul.bf16.gmra.mxu0 %v929
        %v2871 = vpop.f32.mrf.mxu0
        %v2872 = vadd.f32 %v2783, %v2871
        %v2873 = vpop.f32.mrf.mxu0
        %v2874 = vadd.f32 %v2785, %v2873
        %2875 = vmatmul.bf16.gmra.mxu0 %v933
        %v2876 = vpop.f32.mrf.mxu0
        %v2877 = vadd.f32 %v2788, %v2876
        %v2878 = vpop.f32.mrf.mxu0
        %v2879 = vadd.f32 %v2790, %v2878
        %2880 = vmatmul.bf16.gmra.mxu0 %v937
        %v2881 = vpop.f32.mrf.mxu0
        %v2882 = vadd.f32 %v2793, %v2881
        %v2883 = vpop.f32.mrf.mxu0
        %v2884 = vadd.f32 %v2795, %v2883
        %2885 = vmatmul.bf16.gmra.mxu0 %v941
        %v2886 = vpop.f32.mrf.mxu0
        %v2887 = vadd.f32 %v2798, %v2886
        %v2888 = vpop.f32.mrf.mxu0
        %v2889 = vadd.f32 %v2800, %v2888
        %2890 = vmatmul.bf16.gmra.mxu0 %v945
        %v2891 = vpop.f32.mrf.mxu0
        %v2892 = vadd.f32 %v2803, %v2891
        %v2893 = vpop.f32.mrf.mxu0
        %v2894 = vadd.f32 %v2805, %v2893
        %2895 = vmatmul.bf16.gmra.mxu0 %v949
        %v2896 = vpop.f32.mrf.mxu0
        %v2897 = vadd.f32 %v2808, %v2896
        %v2898 = vpop.f32.mrf.mxu0
        %v2899 = vadd.f32 %v2810, %v2898
        %2900 = vmatmul.bf16.gmra.mxu0 %v953
        %v2901 = vpop.f32.mrf.mxu0
        %v2902 = vadd.f32 %v2813, %v2901
        %v2903 = vpop.f32.mrf.mxu0
        %v2904 = vadd.f32 %v2815, %v2903
        %2905 = vdwg.mxu0
        %2906 = vmatpush.bf16.msra.mxu0 %v1499
        %2907 = vmatpush.bf16.msra.mxu0 %v1495
        %2908 = vmatpush.bf16.msra.mxu0 %v1491
        %2909 = vmatpush.bf16.msra.mxu0 %v1487
        %2910 = vmatpush.bf16.msra.mxu0 %v1483
        %2911 = vmatpush.bf16.msra.mxu0 %v1479
        %2912 = vmatpush.bf16.msra.mxu0 %v1475
        %2913 = vmatpush.bf16.msra.mxu0 %v1471
        %2914 = vmatmul.bf16.gmra.mxu0 %v894
        %v2915 = vpop.f32.mrf.mxu0
        %v2916 = vadd.f32 %v2827, %v2915
        %v2917 = vpop.f32.mrf.mxu0
        %v2918 = vadd.f32 %v2829, %v2917
        %2919 = vmatmul.bf16.gmra.mxu0 %v898
        %v2920 = vpop.f32.mrf.mxu0
        %v2921 = vadd.f32 %v2832, %v2920
        %v2922 = vpop.f32.mrf.mxu0
        %v2923 = vadd.f32 %v2834, %v2922
        %2924 = vmatmul.bf16.gmra.mxu0 %v902
        %v2925 = vpop.f32.mrf.mxu0
        %v2926 = vadd.f32 %v2837, %v2925
        %v2927 = vpop.f32.mrf.mxu0
        %v2928 = vadd.f32 %v2839, %v2927
        %2929 = vmatmul.bf16.gmra.mxu0 %v906
        %v2930 = vpop.f32.mrf.mxu0
        %v2931 = vadd.f32 %v2842, %v2930
        %v2932 = vpop.f32.mrf.mxu0
        %v2933 = vadd.f32 %v2844, %v2932
        %2934 = vmatmul.bf16.gmra.mxu0 %v910
        %v2935 = vpop.f32.mrf.mxu0
        %v2936 = vadd.f32 %v2847, %v2935
        %v2937 = vpop.f32.mrf.mxu0
        %v2938 = vadd.f32 %v2849, %v2937
        %2939 = vmatmul.bf16.gmra.mxu0 %v914
        %v2940 = vpop.f32.mrf.mxu0
        %v2941 = vadd.f32 %v2852, %v2940
        %v2942 = vpop.f32.mrf.mxu0
        %v2943 = vadd.f32 %v2854, %v2942
        %2944 = vmatmul.bf16.gmra.mxu0 %v918
        %v2945 = vpop.f32.mrf.mxu0
        %v2946 = vadd.f32 %v2857, %v2945
        %v2947 = vpop.f32.mrf.mxu0
        %v2948 = vadd.f32 %v2859, %v2947
        %2949 = vmatmul.bf16.gmra.mxu0 %v922
        %v2950 = vpop.f32.mrf.mxu0
        %v2951 = vadd.f32 %v2862, %v2950
        %v2952 = vpop.f32.mrf.mxu0
        %v2953 = vadd.f32 %v2864, %v2952
        %2954 = vmatmul.bf16.gmra.mxu0 %v926
        %v2955 = vpop.f32.mrf.mxu0
        %v2956 = vadd.f32 %v2867, %v2955
        %v2957 = vpop.f32.mrf.mxu0
        %v2958 = vadd.f32 %v2869, %v2957
        %2959 = vmatmul.bf16.gmra.mxu0 %v930
        %v2960 = vpop.f32.mrf.mxu0
        %v2961 = vadd.f32 %v2872, %v2960
        %v2962 = vpop.f32.mrf.mxu0
        %v2963 = vadd.f32 %v2874, %v2962
        %2964 = vmatmul.bf16.gmra.mxu0 %v934
        %v2965 = vpop.f32.mrf.mxu0
        %v2966 = vadd.f32 %v2877, %v2965
        %v2967 = vpop.f32.mrf.mxu0
        %v2968 = vadd.f32 %v2879, %v2967
        %2969 = vmatmul.bf16.gmra.mxu0 %v938
        %v2970 = vpop.f32.mrf.mxu0
        %v2971 = vadd.f32 %v2882, %v2970
        %v2972 = vpop.f32.mrf.mxu0
        %v2973 = vadd.f32 %v2884, %v2972
        %2974 = vmatmul.bf16.gmra.mxu0 %v942
        %v2975 = vpop.f32.mrf.mxu0
        %v2976 = vadd.f32 %v2887, %v2975
        %v2977 = vpop.f32.mrf.mxu0
        %v2978 = vadd.f32 %v2889, %v2977
        %2979 = vmatmul.bf16.gmra.mxu0 %v946
        %v2980 = vpop.f32.mrf.mxu0
        %v2981 = vadd.f32 %v2892, %v2980
        %v2982 = vpop.f32.mrf.mxu0
        %v2983 = vadd.f32 %v2894, %v2982
        %2984 = vmatmul.bf16.gmra.mxu0 %v950
        %v2985 = vpop.f32.mrf.mxu0
        %v2986 = vadd.f32 %v2897, %v2985
        %v2987 = vpop.f32.mrf.mxu0
        %v2988 = vadd.f32 %v2899, %v2987
        %2989 = vmatmul.bf16.gmra.mxu0 %v954
        %v2990 = vpop.f32.mrf.mxu0
        %v2991 = vadd.f32 %v2902, %v2990
        %v2992 = vpop.f32.mrf.mxu0
        %v2993 = vadd.f32 %v2904, %v2992
        %2994 = vdwg.mxu0
        %2995 = vmatpush.bf16.msra.mxu0 %v1531
        %2996 = vmatpush.bf16.msra.mxu0 %v1527
        %2997 = vmatpush.bf16.msra.mxu0 %v1523
        %2998 = vmatpush.bf16.msra.mxu0 %v1519
        %2999 = vmatpush.bf16.msra.mxu0 %v1515
        %3000 = vmatpush.bf16.msra.mxu0 %v1511
        %3001 = vmatpush.bf16.msra.mxu0 %v1507
        %3002 = vmatpush.bf16.msra.mxu0 %v1503
        %3003 = vmatmul.bf16.gmra.mxu0 %v895
        %v3004 = vpop.f32.mrf.mxu0
        %v3005 = vadd.f32 %v2916, %v3004
        %v3006 = vpop.f32.mrf.mxu0
        %v3007 = vadd.f32 %v2918, %v3006
        %3008 = vmatmul.bf16.gmra.mxu0 %v899
        %v3009 = vpop.f32.mrf.mxu0
        %v3010 = vadd.f32 %v2921, %v3009
        %v3011 = vpop.f32.mrf.mxu0
        %v3012 = vadd.f32 %v2923, %v3011
        %3013 = vmatmul.bf16.gmra.mxu0 %v903
        %v3014 = vpop.f32.mrf.mxu0
        %v3015 = vadd.f32 %v2926, %v3014
        %v3016 = vpop.f32.mrf.mxu0
        %v3017 = vadd.f32 %v2928, %v3016
        %3018 = vmatmul.bf16.gmra.mxu0 %v907
        %v3019 = vpop.f32.mrf.mxu0
        %v3020 = vadd.f32 %v2931, %v3019
        %v3021 = vpop.f32.mrf.mxu0
        %v3022 = vadd.f32 %v2933, %v3021
        %3023 = vmatmul.bf16.gmra.mxu0 %v911
        %v3024 = vpop.f32.mrf.mxu0
        %v3025 = vadd.f32 %v2936, %v3024
        %v3026 = vpop.f32.mrf.mxu0
        %v3027 = vadd.f32 %v2938, %v3026
        %3028 = vmatmul.bf16.gmra.mxu0 %v915
        %v3029 = vpop.f32.mrf.mxu0
        %v3030 = vadd.f32 %v2941, %v3029
        %v3031 = vpop.f32.mrf.mxu0
        %v3032 = vadd.f32 %v2943, %v3031
        %3033 = vmatmul.bf16.gmra.mxu0 %v919
        %v3034 = vpop.f32.mrf.mxu0
        %v3035 = vadd.f32 %v2946, %v3034
        %v3036 = vpop.f32.mrf.mxu0
        %v3037 = vadd.f32 %v2948, %v3036
        %3038 = vmatmul.bf16.gmra.mxu0 %v923
        %v3039 = vpop.f32.mrf.mxu0
        %v3040 = vadd.f32 %v2951, %v3039
        %v3041 = vpop.f32.mrf.mxu0
        %v3042 = vadd.f32 %v2953, %v3041
        %3043 = vmatmul.bf16.gmra.mxu0 %v927
        %v3044 = vpop.f32.mrf.mxu0
        %v3045 = vadd.f32 %v2956, %v3044
        %v3046 = vpop.f32.mrf.mxu0
        %v3047 = vadd.f32 %v2958, %v3046
        %3048 = vmatmul.bf16.gmra.mxu0 %v931
        %v3049 = vpop.f32.mrf.mxu0
        %v3050 = vadd.f32 %v2961, %v3049
        %v3051 = vpop.f32.mrf.mxu0
        %v3052 = vadd.f32 %v2963, %v3051
        %3053 = vmatmul.bf16.gmra.mxu0 %v935
        %v3054 = vpop.f32.mrf.mxu0
        %v3055 = vadd.f32 %v2966, %v3054
        %v3056 = vpop.f32.mrf.mxu0
        %v3057 = vadd.f32 %v2968, %v3056
        %3058 = vmatmul.bf16.gmra.mxu0 %v939
        %v3059 = vpop.f32.mrf.mxu0
        %v3060 = vadd.f32 %v2971, %v3059
        %v3061 = vpop.f32.mrf.mxu0
        %v3062 = vadd.f32 %v2973, %v3061
        %3063 = vmatmul.bf16.gmra.mxu0 %v943
        %v3064 = vpop.f32.mrf.mxu0
        %v3065 = vadd.f32 %v2976, %v3064
        %v3066 = vpop.f32.mrf.mxu0
        %v3067 = vadd.f32 %v2978, %v3066
        %3068 = vmatmul.bf16.gmra.mxu0 %v947
        %v3069 = vpop.f32.mrf.mxu0
        %v3070 = vadd.f32 %v2981, %v3069
        %v3071 = vpop.f32.mrf.mxu0
        %v3072 = vadd.f32 %v2983, %v3071
        %3073 = vmatmul.bf16.gmra.mxu0 %v951
        %v3074 = vpop.f32.mrf.mxu0
        %v3075 = vadd.f32 %v2986, %v3074
        %v3076 = vpop.f32.mrf.mxu0
        %v3077 = vadd.f32 %v2988, %v3076
        %3078 = vmatmul.bf16.gmra.mxu0 %v955
        %v3079 = vpop.f32.mrf.mxu0
        %v3080 = vadd.f32 %v2991, %v3079
        %v3081 = vpop.f32.mrf.mxu0
        %v3082 = vadd.f32 %v2993, %v3081
        %3083 = vdwg.mxu0
        %v3084 = vadd.f32 %v375, %v1937
        %v3085 = vadd.f32 %v376, %v2293
        %v3086 = vadd.f32 %v377, %v2649
        %v3087 = vadd.f32 %v378, %v3005
        %v3088 = vadd.f32 %v379, %v1939
        %v3089 = vadd.f32 %v380, %v2295
        %v3090 = vadd.f32 %v381, %v2651
        %v3091 = vadd.f32 %v382, %v3007
        %v3092 = vadd.f32 %v383, %v1942
        %v3093 = vadd.f32 %v384, %v2298
        %v3094 = vadd.f32 %v385, %v2654
        %v3095 = vadd.f32 %v386, %v3010
        %v3096 = vadd.f32 %v387, %v1944
        %v3097 = vadd.f32 %v388, %v2300
        %v3098 = vadd.f32 %v389, %v2656
        %v3099 = vadd.f32 %v390, %v3012
        %v3100 = vadd.f32 %v391, %v1947
        %v3101 = vadd.f32 %v392, %v2303
        %v3102 = vadd.f32 %v393, %v2659
        %v3103 = vadd.f32 %v394, %v3015
        %v3104 = vadd.f32 %v395, %v1949
        %v3105 = vadd.f32 %v396, %v2305
        %v3106 = vadd.f32 %v397, %v2661
        %v3107 = vadd.f32 %v398, %v3017
        %v3108 = vadd.f32 %v399, %v1952
        %v3109 = vadd.f32 %v400, %v2308
        %v3110 = vadd.f32 %v401, %v2664
        %v3111 = vadd.f32 %v402, %v3020
        %v3112 = vadd.f32 %v403, %v1954
        %v3113 = vadd.f32 %v404, %v2310
        %v3114 = vadd.f32 %v405, %v2666
        %v3115 = vadd.f32 %v406, %v3022
        %v3116 = vadd.f32 %v407, %v1957
        %v3117 = vadd.f32 %v408, %v2313
        %v3118 = vadd.f32 %v409, %v2669
        %v3119 = vadd.f32 %v410, %v3025
        %v3120 = vadd.f32 %v411, %v1959
        %v3121 = vadd.f32 %v412, %v2315
        %v3122 = vadd.f32 %v413, %v2671
        %v3123 = vadd.f32 %v414, %v3027
        %v3124 = vadd.f32 %v415, %v1962
        %v3125 = vadd.f32 %v416, %v2318
        %v3126 = vadd.f32 %v417, %v2674
        %v3127 = vadd.f32 %v418, %v3030
        %v3128 = vadd.f32 %v419, %v1964
        %v3129 = vadd.f32 %v420, %v2320
        %v3130 = vadd.f32 %v421, %v2676
        %v3131 = vadd.f32 %v422, %v3032
        %v3132 = vadd.f32 %v423, %v1967
        %v3133 = vadd.f32 %v424, %v2323
        %v3134 = vadd.f32 %v425, %v2679
        %v3135 = vadd.f32 %v426, %v3035
        %v3136 = vadd.f32 %v427, %v1969
        %v3137 = vadd.f32 %v428, %v2325
        %v3138 = vadd.f32 %v429, %v2681
        %v3139 = vadd.f32 %v430, %v3037
        %v3140 = vadd.f32 %v431, %v1972
        %v3141 = vadd.f32 %v432, %v2328
        %v3142 = vadd.f32 %v433, %v2684
        %v3143 = vadd.f32 %v434, %v3040
        %v3144 = vadd.f32 %v435, %v1974
        %v3145 = vadd.f32 %v436, %v2330
        %v3146 = vadd.f32 %v437, %v2686
        %v3147 = vadd.f32 %v438, %v3042
        %v3148 = vadd.f32 %v439, %v1977
        %v3149 = vadd.f32 %v440, %v2333
        %v3150 = vadd.f32 %v441, %v2689
        %v3151 = vadd.f32 %v442, %v3045
        %v3152 = vadd.f32 %v443, %v1979
        %v3153 = vadd.f32 %v444, %v2335
        %v3154 = vadd.f32 %v445, %v2691
        %v3155 = vadd.f32 %v446, %v3047
        %v3156 = vadd.f32 %v447, %v1982
        %v3157 = vadd.f32 %v448, %v2338
        %v3158 = vadd.f32 %v449, %v2694
        %v3159 = vadd.f32 %v450, %v3050
        %v3160 = vadd.f32 %v451, %v1984
        %v3161 = vadd.f32 %v452, %v2340
        %v3162 = vadd.f32 %v453, %v2696
        %v3163 = vadd.f32 %v454, %v3052
        %v3164 = vadd.f32 %v455, %v1987
        %v3165 = vadd.f32 %v456, %v2343
        %v3166 = vadd.f32 %v457, %v2699
        %v3167 = vadd.f32 %v458, %v3055
        %v3168 = vadd.f32 %v459, %v1989
        %v3169 = vadd.f32 %v460, %v2345
        %v3170 = vadd.f32 %v461, %v2701
        %v3171 = vadd.f32 %v462, %v3057
        %v3172 = vadd.f32 %v463, %v1992
        %v3173 = vadd.f32 %v464, %v2348
        %v3174 = vadd.f32 %v465, %v2704
        %v3175 = vadd.f32 %v466, %v3060
        %v3176 = vadd.f32 %v467, %v1994
        %v3177 = vadd.f32 %v468, %v2350
        %v3178 = vadd.f32 %v469, %v2706
        %v3179 = vadd.f32 %v470, %v3062
        %v3180 = vadd.f32 %v471, %v1997
        %v3181 = vadd.f32 %v472, %v2353
        %v3182 = vadd.f32 %v473, %v2709
        %v3183 = vadd.f32 %v474, %v3065
        %v3184 = vadd.f32 %v475, %v1999
        %v3185 = vadd.f32 %v476, %v2355
        %v3186 = vadd.f32 %v477, %v2711
        %v3187 = vadd.f32 %v478, %v3067
        %v3188 = vadd.f32 %v479, %v2002
        %v3189 = vadd.f32 %v480, %v2358
        %v3190 = vadd.f32 %v481, %v2714
        %v3191 = vadd.f32 %v482, %v3070
        %v3192 = vadd.f32 %v483, %v2004
        %v3193 = vadd.f32 %v484, %v2360
        %v3194 = vadd.f32 %v485, %v2716
        %v3195 = vadd.f32 %v486, %v3072
        %v3196 = vadd.f32 %v487, %v2007
        %v3197 = vadd.f32 %v488, %v2363
        %v3198 = vadd.f32 %v489, %v2719
        %v3199 = vadd.f32 %v490, %v3075
        %v3200 = vadd.f32 %v491, %v2009
        %v3201 = vadd.f32 %v492, %v2365
        %v3202 = vadd.f32 %v493, %v2721
        %v3203 = vadd.f32 %v494, %v3077
        %v3204 = vadd.f32 %v495, %v2012
        %v3205 = vadd.f32 %v496, %v2368
        %v3206 = vadd.f32 %v497, %v2724
        %v3207 = vadd.f32 %v498, %v3080
        %v3208 = vadd.f32 %v499, %v2014
        %v3209 = vadd.f32 %v500, %v2370
        %v3210 = vadd.f32 %v501, %v2726
        %v3211 = vadd.f32 %v502, %v3082
        %3212 = vst [vmem:[%s238] sm:$0xff] %v3084
        %3213 = vst [vmem:[%s238 + $0x8] sm:$0xff] %v3085
        %3214 = vst [vmem:[%s238 + $0x10] sm:$0xff] %v3086
        %3215 = vst [vmem:[%s238 + $0x18] sm:$0xff] %v3087
        %3216 = vst [vmem:[%s238 + $0x20] sm:$0xff] %v3088
        %3217 = vst [vmem:[%s238 + $0x28] sm:$0xff] %v3089
        %3218 = vst [vmem:[%s238 + $0x30] sm:$0xff] %v3090
        %3219 = vst [vmem:[%s238 + $0x38] sm:$0xff] %v3091
        %3220 = vst [vmem:[%s238 + $0x40] sm:$0xff] %v3092
        %3221 = vst [vmem:[%s238 + $0x48] sm:$0xff] %v3093
        %3222 = vst [vmem:[%s238 + $0x50] sm:$0xff] %v3094
        %3223 = vst [vmem:[%s238 + $0x58] sm:$0xff] %v3095
        %3224 = vst [vmem:[%s238 + $0x60] sm:$0xff] %v3096
        %3225 = vst [vmem:[%s238 + $0x68] sm:$0xff] %v3097
        %3226 = vst [vmem:[%s238 + $0x70] sm:$0xff] %v3098
        %3227 = vst [vmem:[%s238 + $0x78] sm:$0xff] %v3099
        %3228 = vst [vmem:[%s238 + $0x80] sm:$0xff] %v3100
        %3229 = vst [vmem:[%s238 + $0x88] sm:$0xff] %v3101
        %3230 = vst [vmem:[%s238 + $0x90] sm:$0xff] %v3102
        %3231 = vst [vmem:[%s238 + $0x98] sm:$0xff] %v3103
        %3232 = vst [vmem:[%s238 + $0xa0] sm:$0xff] %v3104
        %3233 = vst [vmem:[%s238 + $0xa8] sm:$0xff] %v3105
        %3234 = vst [vmem:[%s238 + $0xb0] sm:$0xff] %v3106
        %3235 = vst [vmem:[%s238 + $0xb8] sm:$0xff] %v3107
        %3236 = vst [vmem:[%s238 + $0xc0] sm:$0xff] %v3108
        %3237 = vst [vmem:[%s238 + $0xc8] sm:$0xff] %v3109
        %3238 = vst [vmem:[%s238 + $0xd0] sm:$0xff] %v3110
        %3239 = vst [vmem:[%s238 + $0xd8] sm:$0xff] %v3111
        %3240 = vst [vmem:[%s238 + $0xe0] sm:$0xff] %v3112
        %3241 = vst [vmem:[%s238 + $0xe8] sm:$0xff] %v3113
        %3242 = vst [vmem:[%s238 + $0xf0] sm:$0xff] %v3114
        %3243 = vst [vmem:[%s238 + $0xf8] sm:$0xff] %v3115
        %3244 = vst [vmem:[%s238 + $0x100] sm:$0xff] %v3116
        %3245 = vst [vmem:[%s238 + $0x108] sm:$0xff] %v3117
        %3246 = vst [vmem:[%s238 + $0x110] sm:$0xff] %v3118
        %3247 = vst [vmem:[%s238 + $0x118] sm:$0xff] %v3119
        %3248 = vst [vmem:[%s238 + $0x120] sm:$0xff] %v3120
        %3249 = vst [vmem:[%s238 + $0x128] sm:$0xff] %v3121
        %3250 = vst [vmem:[%s238 + $0x130] sm:$0xff] %v3122
        %3251 = vst [vmem:[%s238 + $0x138] sm:$0xff] %v3123
        %3252 = vst [vmem:[%s238 + $0x140] sm:$0xff] %v3124
        %3253 = vst [vmem:[%s238 + $0x148] sm:$0xff] %v3125
        %3254 = vst [vmem:[%s238 + $0x150] sm:$0xff] %v3126
        %3255 = vst [vmem:[%s238 + $0x158] sm:$0xff] %v3127
        %3256 = vst [vmem:[%s238 + $0x160] sm:$0xff] %v3128
        %3257 = vst [vmem:[%s238 + $0x168] sm:$0xff] %v3129
        %3258 = vst [vmem:[%s238 + $0x170] sm:$0xff] %v3130
        %3259 = vst [vmem:[%s238 + $0x178] sm:$0xff] %v3131
        %3260 = vst [vmem:[%s238 + $0x180] sm:$0xff] %v3132
        %3261 = vst [vmem:[%s238 + $0x188] sm:$0xff] %v3133
        %3262 = vst [vmem:[%s238 + $0x190] sm:$0xff] %v3134
        %3263 = vst [vmem:[%s238 + $0x198] sm:$0xff] %v3135
        %3264 = vst [vmem:[%s238 + $0x1a0] sm:$0xff] %v3136
        %3265 = vst [vmem:[%s238 + $0x1a8] sm:$0xff] %v3137
        %3266 = vst [vmem:[%s238 + $0x1b0] sm:$0xff] %v3138
        %3267 = vst [vmem:[%s238 + $0x1b8] sm:$0xff] %v3139
        %3268 = vst [vmem:[%s238 + $0x1c0] sm:$0xff] %v3140
        %3269 = vst [vmem:[%s238 + $0x1c8] sm:$0xff] %v3141
        %3270 = vst [vmem:[%s238 + $0x1d0] sm:$0xff] %v3142
        %3271 = vst [vmem:[%s238 + $0x1d8] sm:$0xff] %v3143
        %3272 = vst [vmem:[%s238 + $0x1e0] sm:$0xff] %v3144
        %3273 = vst [vmem:[%s238 + $0x1e8] sm:$0xff] %v3145
        %3274 = vst [vmem:[%s238 + $0x1f0] sm:$0xff] %v3146
        %3275 = vst [vmem:[%s238 + $0x1f8] sm:$0xff] %v3147
        %3276 = vst [vmem:[%s238 + $0x200] sm:$0xff] %v3148
        %3277 = vst [vmem:[%s238 + $0x208] sm:$0xff] %v3149
        %3278 = vst [vmem:[%s238 + $0x210] sm:$0xff] %v3150
        %3279 = vst [vmem:[%s238 + $0x218] sm:$0xff] %v3151
        %3280 = vst [vmem:[%s238 + $0x220] sm:$0xff] %v3152
        %3281 = vst [vmem:[%s238 + $0x228] sm:$0xff] %v3153
        %3282 = vst [vmem:[%s238 + $0x230] sm:$0xff] %v3154
        %3283 = vst [vmem:[%s238 + $0x238] sm:$0xff] %v3155
        %3284 = vst [vmem:[%s238 + $0x240] sm:$0xff] %v3156
        %3285 = vst [vmem:[%s238 + $0x248] sm:$0xff] %v3157
        %3286 = vst [vmem:[%s238 + $0x250] sm:$0xff] %v3158
        %3287 = vst [vmem:[%s238 + $0x258] sm:$0xff] %v3159
        %3288 = vst [vmem:[%s238 + $0x260] sm:$0xff] %v3160
        %3289 = vst [vmem:[%s238 + $0x268] sm:$0xff] %v3161
        %3290 = vst [vmem:[%s238 + $0x270] sm:$0xff] %v3162
        %3291 = vst [vmem:[%s238 + $0x278] sm:$0xff] %v3163
        %3292 = vst [vmem:[%s238 + $0x280] sm:$0xff] %v3164
        %3293 = vst [vmem:[%s238 + $0x288] sm:$0xff] %v3165
        %3294 = vst [vmem:[%s238 + $0x290] sm:$0xff] %v3166
        %3295 = vst [vmem:[%s238 + $0x298] sm:$0xff] %v3167
        %3296 = vst [vmem:[%s238 + $0x2a0] sm:$0xff] %v3168
        %3297 = vst [vmem:[%s238 + $0x2a8] sm:$0xff] %v3169
        %3298 = vst [vmem:[%s238 + $0x2b0] sm:$0xff] %v3170
        %3299 = vst [vmem:[%s238 + $0x2b8] sm:$0xff] %v3171
        %3300 = vst [vmem:[%s238 + $0x2c0] sm:$0xff] %v3172
        %3301 = vst [vmem:[%s238 + $0x2c8] sm:$0xff] %v3173
        %3302 = vst [vmem:[%s238 + $0x2d0] sm:$0xff] %v3174
        %3303 = vst [vmem:[%s238 + $0x2d8] sm:$0xff] %v3175
        %3304 = vst [vmem:[%s238 + $0x2e0] sm:$0xff] %v3176
        %3305 = vst [vmem:[%s238 + $0x2e8] sm:$0xff] %v3177
        %3306 = vst [vmem:[%s238 + $0x2f0] sm:$0xff] %v3178
        %3307 = vst [vmem:[%s238 + $0x2f8] sm:$0xff] %v3179
        %3308 = vst [vmem:[%s238 + $0x300] sm:$0xff] %v3180
        %3309 = vst [vmem:[%s238 + $0x308] sm:$0xff] %v3181
        %3310 = vst [vmem:[%s238 + $0x310] sm:$0xff] %v3182
        %3311 = vst [vmem:[%s238 + $0x318] sm:$0xff] %v3183
        %3312 = vst [vmem:[%s238 + $0x320] sm:$0xff] %v3184
        %3313 = vst [vmem:[%s238 + $0x328] sm:$0xff] %v3185
        %3314 = vst [vmem:[%s238 + $0x330] sm:$0xff] %v3186
        %3315 = vst [vmem:[%s238 + $0x338] sm:$0xff] %v3187
        %3316 = vst [vmem:[%s238 + $0x340] sm:$0xff] %v3188
        %3317 = vst [vmem:[%s238 + $0x348] sm:$0xff] %v3189
        %3318 = vst [vmem:[%s238 + $0x350] sm:$0xff] %v3190
        %3319 = vst [vmem:[%s238 + $0x358] sm:$0xff] %v3191
        %3320 = vst [vmem:[%s238 + $0x360] sm:$0xff] %v3192
        %3321 = vst [vmem:[%s238 + $0x368] sm:$0xff] %v3193
        %3322 = vst [vmem:[%s238 + $0x370] sm:$0xff] %v3194
        %3323 = vst [vmem:[%s238 + $0x378] sm:$0xff] %v3195
        %3324 = vst [vmem:[%s238 + $0x380] sm:$0xff] %v3196
        %3325 = vst [vmem:[%s238 + $0x388] sm:$0xff] %v3197
        %3326 = vst [vmem:[%s238 + $0x390] sm:$0xff] %v3198
        %3327 = vst [vmem:[%s238 + $0x398] sm:$0xff] %v3199
        %3328 = vst [vmem:[%s238 + $0x3a0] sm:$0xff] %v3200
        %3329 = vst [vmem:[%s238 + $0x3a8] sm:$0xff] %v3201
        %3330 = vst [vmem:[%s238 + $0x3b0] sm:$0xff] %v3202
        %3331 = vst [vmem:[%s238 + $0x3b8] sm:$0xff] %v3203
        %3332 = vst [vmem:[%s238 + $0x3c0] sm:$0xff] %v3204
        %3333 = vst [vmem:[%s238 + $0x3c8] sm:$0xff] %v3205
        %3334 = vst [vmem:[%s238 + $0x3d0] sm:$0xff] %v3206
        %3335 = vst [vmem:[%s238 + $0x3d8] sm:$0xff] %v3207
        %3336 = vst [vmem:[%s238 + $0x3e0] sm:$0xff] %v3208
        %3337 = vst [vmem:[%s238 + $0x3e8] sm:$0xff] %v3209
        %3338 = vst [vmem:[%s238 + $0x3f0] sm:$0xff] %v3210
        %3339 = vst [vmem:[%s238 + $0x3f8] sm:$0xff] %v3211
        // Predicated region
        $region49: #{tpu_custom_call.1} parent=31 // pred_check
          %p3340 = pneg %p242
        $region50: #{tpu_custom_call.1} parent=31 // pred_check_branch
          %3342 = sbr.rel (%p3340) target = $region52
        $region51: #{tpu_custom_call.1} parent=31 // pred_region
          %v3343 = vld [vmem:[%s238] sm:$0xff]
          %v3344 = vld [vmem:[%s238 + $0x8] sm:$0xff]
          %v3345 = vld [vmem:[%s238 + $0x10] sm:$0xff]
          %v3346 = vld [vmem:[%s238 + $0x18] sm:$0xff]
          %v3347 = vld [vmem:[%s238 + $0x20] sm:$0xff]
          %v3348 = vld [vmem:[%s238 + $0x28] sm:$0xff]
          %v3349 = vld [vmem:[%s238 + $0x30] sm:$0xff]
          %v3350 = vld [vmem:[%s238 + $0x38] sm:$0xff]
          %v3351 = vld [vmem:[%s238 + $0x40] sm:$0xff]
          %v3352 = vld [vmem:[%s238 + $0x48] sm:$0xff]
          %v3353 = vld [vmem:[%s238 + $0x50] sm:$0xff]
          %v3354 = vld [vmem:[%s238 + $0x58] sm:$0xff]
          %v3355 = vld [vmem:[%s238 + $0x60] sm:$0xff]
          %v3356 = vld [vmem:[%s238 + $0x68] sm:$0xff]
          %v3357 = vld [vmem:[%s238 + $0x70] sm:$0xff]
          %v3358 = vld [vmem:[%s238 + $0x78] sm:$0xff]
          %v3359 = vld [vmem:[%s238 + $0x80] sm:$0xff]
          %v3360 = vld [vmem:[%s238 + $0x88] sm:$0xff]
          %v3361 = vld [vmem:[%s238 + $0x90] sm:$0xff]
          %v3362 = vld [vmem:[%s238 + $0x98] sm:$0xff]
          %v3363 = vld [vmem:[%s238 + $0xa0] sm:$0xff]
          %v3364 = vld [vmem:[%s238 + $0xa8] sm:$0xff]
          %v3365 = vld [vmem:[%s238 + $0xb0] sm:$0xff]
          %v3366 = vld [vmem:[%s238 + $0xb8] sm:$0xff]
          %v3367 = vld [vmem:[%s238 + $0xc0] sm:$0xff]
          %v3368 = vld [vmem:[%s238 + $0xc8] sm:$0xff]
          %v3369 = vld [vmem:[%s238 + $0xd0] sm:$0xff]
          %v3370 = vld [vmem:[%s238 + $0xd8] sm:$0xff]
          %v3371 = vld [vmem:[%s238 + $0xe0] sm:$0xff]
          %v3372 = vld [vmem:[%s238 + $0xe8] sm:$0xff]
          %v3373 = vld [vmem:[%s238 + $0xf0] sm:$0xff]
          %v3374 = vld [vmem:[%s238 + $0xf8] sm:$0xff]
          %v3375 = vld [vmem:[%s238 + $0x100] sm:$0xff]
          %v3376 = vld [vmem:[%s238 + $0x108] sm:$0xff]
          %v3377 = vld [vmem:[%s238 + $0x110] sm:$0xff]
          %v3378 = vld [vmem:[%s238 + $0x118] sm:$0xff]
          %v3379 = vld [vmem:[%s238 + $0x120] sm:$0xff]
          %v3380 = vld [vmem:[%s238 + $0x128] sm:$0xff]
          %v3381 = vld [vmem:[%s238 + $0x130] sm:$0xff]
          %v3382 = vld [vmem:[%s238 + $0x138] sm:$0xff]
          %v3383 = vld [vmem:[%s238 + $0x140] sm:$0xff]
          %v3384 = vld [vmem:[%s238 + $0x148] sm:$0xff]
          %v3385 = vld [vmem:[%s238 + $0x150] sm:$0xff]
          %v3386 = vld [vmem:[%s238 + $0x158] sm:$0xff]
          %v3387 = vld [vmem:[%s238 + $0x160] sm:$0xff]
          %v3388 = vld [vmem:[%s238 + $0x168] sm:$0xff]
          %v3389 = vld [vmem:[%s238 + $0x170] sm:$0xff]
          %v3390 = vld [vmem:[%s238 + $0x178] sm:$0xff]
          %v3391 = vld [vmem:[%s238 + $0x180] sm:$0xff]
          %v3392 = vld [vmem:[%s238 + $0x188] sm:$0xff]
          %v3393 = vld [vmem:[%s238 + $0x190] sm:$0xff]
          %v3394 = vld [vmem:[%s238 + $0x198] sm:$0xff]
          %v3395 = vld [vmem:[%s238 + $0x1a0] sm:$0xff]
          %v3396 = vld [vmem:[%s238 + $0x1a8] sm:$0xff]
          %v3397 = vld [vmem:[%s238 + $0x1b0] sm:$0xff]
          %v3398 = vld [vmem:[%s238 + $0x1b8] sm:$0xff]
          %v3399 = vld [vmem:[%s238 + $0x1c0] sm:$0xff]
          %v3400 = vld [vmem:[%s238 + $0x1c8] sm:$0xff]
          %v3401 = vld [vmem:[%s238 + $0x1d0] sm:$0xff]
          %v3402 = vld [vmem:[%s238 + $0x1d8] sm:$0xff]
          %v3403 = vld [vmem:[%s238 + $0x1e0] sm:$0xff]
          %v3404 = vld [vmem:[%s238 + $0x1e8] sm:$0xff]
          %v3405 = vld [vmem:[%s238 + $0x1f0] sm:$0xff]
          %v3406 = vld [vmem:[%s238 + $0x1f8] sm:$0xff]
          %v3407 = vld [vmem:[%s238 + $0x200] sm:$0xff]
          %v3408 = vld [vmem:[%s238 + $0x208] sm:$0xff]
          %v3409 = vld [vmem:[%s238 + $0x210] sm:$0xff]
          %v3410 = vld [vmem:[%s238 + $0x218] sm:$0xff]
          %v3411 = vld [vmem:[%s238 + $0x220] sm:$0xff]
          %v3412 = vld [vmem:[%s238 + $0x228] sm:$0xff]
          %v3413 = vld [vmem:[%s238 + $0x230] sm:$0xff]
          %v3414 = vld [vmem:[%s238 + $0x238] sm:$0xff]
          %v3415 = vld [vmem:[%s238 + $0x240] sm:$0xff]
          %v3416 = vld [vmem:[%s238 + $0x248] sm:$0xff]
          %v3417 = vld [vmem:[%s238 + $0x250] sm:$0xff]
          %v3418 = vld [vmem:[%s238 + $0x258] sm:$0xff]
          %v3419 = vld [vmem:[%s238 + $0x260] sm:$0xff]
          %v3420 = vld [vmem:[%s238 + $0x268] sm:$0xff]
          %v3421 = vld [vmem:[%s238 + $0x270] sm:$0xff]
          %v3422 = vld [vmem:[%s238 + $0x278] sm:$0xff]
          %v3423 = vld [vmem:[%s238 + $0x280] sm:$0xff]
          %v3424 = vld [vmem:[%s238 + $0x288] sm:$0xff]
          %v3425 = vld [vmem:[%s238 + $0x290] sm:$0xff]
          %v3426 = vld [vmem:[%s238 + $0x298] sm:$0xff]
          %v3427 = vld [vmem:[%s238 + $0x2a0] sm:$0xff]
          %v3428 = vld [vmem:[%s238 + $0x2a8] sm:$0xff]
          %v3429 = vld [vmem:[%s238 + $0x2b0] sm:$0xff]
          %v3430 = vld [vmem:[%s238 + $0x2b8] sm:$0xff]
          %v3431 = vld [vmem:[%s238 + $0x2c0] sm:$0xff]
          %v3432 = vld [vmem:[%s238 + $0x2c8] sm:$0xff]
          %v3433 = vld [vmem:[%s238 + $0x2d0] sm:$0xff]
          %v3434 = vld [vmem:[%s238 + $0x2d8] sm:$0xff]
          %v3435 = vld [vmem:[%s238 + $0x2e0] sm:$0xff]
          %v3436 = vld [vmem:[%s238 + $0x2e8] sm:$0xff]
          %v3437 = vld [vmem:[%s238 + $0x2f0] sm:$0xff]
          %v3438 = vld [vmem:[%s238 + $0x2f8] sm:$0xff]
          %v3439 = vld [vmem:[%s238 + $0x300] sm:$0xff]
          %v3440 = vld [vmem:[%s238 + $0x308] sm:$0xff]
          %v3441 = vld [vmem:[%s238 + $0x310] sm:$0xff]
          %v3442 = vld [vmem:[%s238 + $0x318] sm:$0xff]
          %v3443 = vld [vmem:[%s238 + $0x320] sm:$0xff]
          %v3444 = vld [vmem:[%s238 + $0x328] sm:$0xff]
          %v3445 = vld [vmem:[%s238 + $0x330] sm:$0xff]
          %v3446 = vld [vmem:[%s238 + $0x338] sm:$0xff]
          %v3447 = vld [vmem:[%s238 + $0x340] sm:$0xff]
          %v3448 = vld [vmem:[%s238 + $0x348] sm:$0xff]
          %v3449 = vld [vmem:[%s238 + $0x350] sm:$0xff]
          %v3450 = vld [vmem:[%s238 + $0x358] sm:$0xff]
          %v3451 = vld [vmem:[%s238 + $0x360] sm:$0xff]
          %v3452 = vld [vmem:[%s238 + $0x368] sm:$0xff]
          %v3453 = vld [vmem:[%s238 + $0x370] sm:$0xff]
          %v3454 = vld [vmem:[%s238 + $0x378] sm:$0xff]
          %v3455 = vld [vmem:[%s238 + $0x380] sm:$0xff]
          %v3456 = vld [vmem:[%s238 + $0x388] sm:$0xff]
          %v3457 = vld [vmem:[%s238 + $0x390] sm:$0xff]
          %v3458 = vld [vmem:[%s238 + $0x398] sm:$0xff]
          %v3459 = vld [vmem:[%s238 + $0x3a0] sm:$0xff]
          %v3460 = vld [vmem:[%s238 + $0x3a8] sm:$0xff]
          %v3461 = vld [vmem:[%s238 + $0x3b0] sm:$0xff]
          %v3462 = vld [vmem:[%s238 + $0x3b8] sm:$0xff]
          %v3463 = vld [vmem:[%s238 + $0x3c0] sm:$0xff]
          %v3464 = vld [vmem:[%s238 + $0x3c8] sm:$0xff]
          %v3465 = vld [vmem:[%s238 + $0x3d0] sm:$0xff]
          %v3466 = vld [vmem:[%s238 + $0x3d8] sm:$0xff]
          %v3467 = vld [vmem:[%s238 + $0x3e0] sm:$0xff]
          %v3468 = vld [vmem:[%s238 + $0x3e8] sm:$0xff]
          %v3469 = vld [vmem:[%s238 + $0x3f0] sm:$0xff]
          %v3470 = vld [vmem:[%s238 + $0x3f8] sm:$0xff]
          %v3471 = vld [vmem:[#allocation7] sm:$0xf]
          %v3473 = vperm.slane %v3471, 0
          %v3474 = vperm.slane %v3471, 1
          %v3475 = vperm.slane %v3471, 2
          %v3476 = vperm.slane %v3471, 3
          %v3481 = vadd.f32 %v3343, %v3473
          %v3482 = vadd.f32 %v3344, %v3474
          %v3483 = vadd.f32 %v3345, %v3475
          %v3484 = vadd.f32 %v3346, %v3476
          %v3485 = vadd.f32 %v3347, %v3473
          %v3486 = vadd.f32 %v3348, %v3474
          %v3487 = vadd.f32 %v3349, %v3475
          %v3488 = vadd.f32 %v3350, %v3476
          %v3489 = vadd.f32 %v3351, %v3473
          %v3490 = vadd.f32 %v3352, %v3474
          %v3491 = vadd.f32 %v3353, %v3475
          %v3492 = vadd.f32 %v3354, %v3476
          %v3493 = vadd.f32 %v3355, %v3473
          %v3494 = vadd.f32 %v3356, %v3474
          %v3495 = vadd.f32 %v3357, %v3475
          %v3496 = vadd.f32 %v3358, %v3476
          %v3497 = vadd.f32 %v3359, %v3473
          %v3498 = vadd.f32 %v3360, %v3474
          %v3499 = vadd.f32 %v3361, %v3475
          %v3500 = vadd.f32 %v3362, %v3476
          %v3501 = vadd.f32 %v3363, %v3473
          %v3502 = vadd.f32 %v3364, %v3474
          %v3503 = vadd.f32 %v3365, %v3475
          %v3504 = vadd.f32 %v3366, %v3476
          %v3505 = vadd.f32 %v3367, %v3473
          %v3506 = vadd.f32 %v3368, %v3474
          %v3507 = vadd.f32 %v3369, %v3475
          %v3508 = vadd.f32 %v3370, %v3476
          %v3509 = vadd.f32 %v3371, %v3473
          %v3510 = vadd.f32 %v3372, %v3474
          %v3511 = vadd.f32 %v3373, %v3475
          %v3512 = vadd.f32 %v3374, %v3476
          %v3513 = vadd.f32 %v3375, %v3473
          %v3514 = vadd.f32 %v3376, %v3474
          %v3515 = vadd.f32 %v3377, %v3475
          %v3516 = vadd.f32 %v3378, %v3476
          %v3517 = vadd.f32 %v3379, %v3473
          %v3518 = vadd.f32 %v3380, %v3474
          %v3519 = vadd.f32 %v3381, %v3475
          %v3520 = vadd.f32 %v3382, %v3476
          %v3521 = vadd.f32 %v3383, %v3473
          %v3522 = vadd.f32 %v3384, %v3474
          %v3523 = vadd.f32 %v3385, %v3475
          %v3524 = vadd.f32 %v3386, %v3476
          %v3525 = vadd.f32 %v3387, %v3473
          %v3526 = vadd.f32 %v3388, %v3474
          %v3527 = vadd.f32 %v3389, %v3475
          %v3528 = vadd.f32 %v3390, %v3476
          %v3529 = vadd.f32 %v3391, %v3473
          %v3530 = vadd.f32 %v3392, %v3474
          %v3531 = vadd.f32 %v3393, %v3475
          %v3532 = vadd.f32 %v3394, %v3476
          %v3533 = vadd.f32 %v3395, %v3473
          %v3534 = vadd.f32 %v3396, %v3474
          %v3535 = vadd.f32 %v3397, %v3475
          %v3536 = vadd.f32 %v3398, %v3476
          %v3537 = vadd.f32 %v3399, %v3473
          %v3538 = vadd.f32 %v3400, %v3474
          %v3539 = vadd.f32 %v3401, %v3475
          %v3540 = vadd.f32 %v3402, %v3476
          %v3541 = vadd.f32 %v3403, %v3473
          %v3542 = vadd.f32 %v3404, %v3474
          %v3543 = vadd.f32 %v3405, %v3475
          %v3544 = vadd.f32 %v3406, %v3476
          %v3545 = vadd.f32 %v3407, %v3473
          %v3546 = vadd.f32 %v3408, %v3474
          %v3547 = vadd.f32 %v3409, %v3475
          %v3548 = vadd.f32 %v3410, %v3476
          %v3549 = vadd.f32 %v3411, %v3473
          %v3550 = vadd.f32 %v3412, %v3474
          %v3551 = vadd.f32 %v3413, %v3475
          %v3552 = vadd.f32 %v3414, %v3476
          %v3553 = vadd.f32 %v3415, %v3473
          %v3554 = vadd.f32 %v3416, %v3474
          %v3555 = vadd.f32 %v3417, %v3475
          %v3556 = vadd.f32 %v3418, %v3476
          %v3557 = vadd.f32 %v3419, %v3473
          %v3558 = vadd.f32 %v3420, %v3474
          %v3559 = vadd.f32 %v3421, %v3475
          %v3560 = vadd.f32 %v3422, %v3476
          %v3561 = vadd.f32 %v3423, %v3473
          %v3562 = vadd.f32 %v3424, %v3474
          %v3563 = vadd.f32 %v3425, %v3475
          %v3564 = vadd.f32 %v3426, %v3476
          %v3565 = vadd.f32 %v3427, %v3473
          %v3566 = vadd.f32 %v3428, %v3474
          %v3567 = vadd.f32 %v3429, %v3475
          %v3568 = vadd.f32 %v3430, %v3476
          %v3569 = vadd.f32 %v3431, %v3473
          %v3570 = vadd.f32 %v3432, %v3474
          %v3571 = vadd.f32 %v3433, %v3475
          %v3572 = vadd.f32 %v3434, %v3476
          %v3573 = vadd.f32 %v3435, %v3473
          %v3574 = vadd.f32 %v3436, %v3474
          %v3575 = vadd.f32 %v3437, %v3475
          %v3576 = vadd.f32 %v3438, %v3476
          %v3577 = vadd.f32 %v3439, %v3473
          %v3578 = vadd.f32 %v3440, %v3474
          %v3579 = vadd.f32 %v3441, %v3475
          %v3580 = vadd.f32 %v3442, %v3476
          %v3581 = vadd.f32 %v3443, %v3473
          %v3582 = vadd.f32 %v3444, %v3474
          %v3583 = vadd.f32 %v3445, %v3475
          %v3584 = vadd.f32 %v3446, %v3476
          %v3585 = vadd.f32 %v3447, %v3473
          %v3586 = vadd.f32 %v3448, %v3474
          %v3587 = vadd.f32 %v3449, %v3475
          %v3588 = vadd.f32 %v3450, %v3476
          %v3589 = vadd.f32 %v3451, %v3473
          %v3590 = vadd.f32 %v3452, %v3474
          %v3591 = vadd.f32 %v3453, %v3475
          %v3592 = vadd.f32 %v3454, %v3476
          %v3593 = vadd.f32 %v3455, %v3473
          %v3594 = vadd.f32 %v3456, %v3474
          %v3595 = vadd.f32 %v3457, %v3475
          %v3596 = vadd.f32 %v3458, %v3476
          %v3597 = vadd.f32 %v3459, %v3473
          %v3598 = vadd.f32 %v3460, %v3474
          %v3599 = vadd.f32 %v3461, %v3475
          %v3600 = vadd.f32 %v3462, %v3476
          %v3601 = vadd.f32 %v3463, %v3473
          %v3602 = vadd.f32 %v3464, %v3474
          %v3603 = vadd.f32 %v3465, %v3475
          %v3604 = vadd.f32 %v3466, %v3476
          %v3605 = vadd.f32 %v3467, %v3473
          %v3606 = vadd.f32 %v3468, %v3474
          %v3607 = vadd.f32 %v3469, %v3475
          %v3608 = vadd.f32 %v3470, %v3476
          %3609 = vst [vmem:[%s238] sm:$0xff] %v3481
          %3610 = vst [vmem:[%s238 + $0x8] sm:$0xff] %v3482
          %3611 = vst [vmem:[%s238 + $0x10] sm:$0xff] %v3483
          %3612 = vst [vmem:[%s238 + $0x18] sm:$0xff] %v3484
          %3613 = vst [vmem:[%s238 + $0x20] sm:$0xff] %v3485
          %3614 = vst [vmem:[%s238 + $0x28] sm:$0xff] %v3486
          %3615 = vst [vmem:[%s238 + $0x30] sm:$0xff] %v3487
          %3616 = vst [vmem:[%s238 + $0x38] sm:$0xff] %v3488
          %3617 = vst [vmem:[%s238 + $0x40] sm:$0xff] %v3489
          %3618 = vst [vmem:[%s238 + $0x48] sm:$0xff] %v3490
          %3619 = vst [vmem:[%s238 + $0x50] sm:$0xff] %v3491
          %3620 = vst [vmem:[%s238 + $0x58] sm:$0xff] %v3492
          %3621 = vst [vmem:[%s238 + $0x60] sm:$0xff] %v3493
          %3622 = vst [vmem:[%s238 + $0x68] sm:$0xff] %v3494
          %3623 = vst [vmem:[%s238 + $0x70] sm:$0xff] %v3495
          %3624 = vst [vmem:[%s238 + $0x78] sm:$0xff] %v3496
          %3625 = vst [vmem:[%s238 + $0x80] sm:$0xff] %v3497
          %3626 = vst [vmem:[%s238 + $0x88] sm:$0xff] %v3498
          %3627 = vst [vmem:[%s238 + $0x90] sm:$0xff] %v3499
          %3628 = vst [vmem:[%s238 + $0x98] sm:$0xff] %v3500
          %3629 = vst [vmem:[%s238 + $0xa0] sm:$0xff] %v3501
          %3630 = vst [vmem:[%s238 + $0xa8] sm:$0xff] %v3502
          %3631 = vst [vmem:[%s238 + $0xb0] sm:$0xff] %v3503
          %3632 = vst [vmem:[%s238 + $0xb8] sm:$0xff] %v3504
          %3633 = vst [vmem:[%s238 + $0xc0] sm:$0xff] %v3505
          %3634 = vst [vmem:[%s238 + $0xc8] sm:$0xff] %v3506
          %3635 = vst [vmem:[%s238 + $0xd0] sm:$0xff] %v3507
          %3636 = vst [vmem:[%s238 + $0xd8] sm:$0xff] %v3508
          %3637 = vst [vmem:[%s238 + $0xe0] sm:$0xff] %v3509
          %3638 = vst [vmem:[%s238 + $0xe8] sm:$0xff] %v3510
          %3639 = vst [vmem:[%s238 + $0xf0] sm:$0xff] %v3511
          %3640 = vst [vmem:[%s238 + $0xf8] sm:$0xff] %v3512
          %3641 = vst [vmem:[%s238 + $0x100] sm:$0xff] %v3513
          %3642 = vst [vmem:[%s238 + $0x108] sm:$0xff] %v3514
          %3643 = vst [vmem:[%s238 + $0x110] sm:$0xff] %v3515
          %3644 = vst [vmem:[%s238 + $0x118] sm:$0xff] %v3516
          %3645 = vst [vmem:[%s238 + $0x120] sm:$0xff] %v3517
          %3646 = vst [vmem:[%s238 + $0x128] sm:$0xff] %v3518
          %3647 = vst [vmem:[%s238 + $0x130] sm:$0xff] %v3519
          %3648 = vst [vmem:[%s238 + $0x138] sm:$0xff] %v3520
          %3649 = vst [vmem:[%s238 + $0x140] sm:$0xff] %v3521
          %3650 = vst [vmem:[%s238 + $0x148] sm:$0xff] %v3522
          %3651 = vst [vmem:[%s238 + $0x150] sm:$0xff] %v3523
          %3652 = vst [vmem:[%s238 + $0x158] sm:$0xff] %v3524
          %3653 = vst [vmem:[%s238 + $0x160] sm:$0xff] %v3525
          %3654 = vst [vmem:[%s238 + $0x168] sm:$0xff] %v3526
          %3655 = vst [vmem:[%s238 + $0x170] sm:$0xff] %v3527
          %3656 = vst [vmem:[%s238 + $0x178] sm:$0xff] %v3528
          %3657 = vst [vmem:[%s238 + $0x180] sm:$0xff] %v3529
          %3658 = vst [vmem:[%s238 + $0x188] sm:$0xff] %v3530
          %3659 = vst [vmem:[%s238 + $0x190] sm:$0xff] %v3531
          %3660 = vst [vmem:[%s238 + $0x198] sm:$0xff] %v3532
          %3661 = vst [vmem:[%s238 + $0x1a0] sm:$0xff] %v3533
          %3662 = vst [vmem:[%s238 + $0x1a8] sm:$0xff] %v3534
          %3663 = vst [vmem:[%s238 + $0x1b0] sm:$0xff] %v3535
          %3664 = vst [vmem:[%s238 + $0x1b8] sm:$0xff] %v3536
          %3665 = vst [vmem:[%s238 + $0x1c0] sm:$0xff] %v3537
          %3666 = vst [vmem:[%s238 + $0x1c8] sm:$0xff] %v3538
          %3667 = vst [vmem:[%s238 + $0x1d0] sm:$0xff] %v3539
          %3668 = vst [vmem:[%s238 + $0x1d8] sm:$0xff] %v3540
          %3669 = vst [vmem:[%s238 + $0x1e0] sm:$0xff] %v3541
          %3670 = vst [vmem:[%s238 + $0x1e8] sm:$0xff] %v3542
          %3671 = vst [vmem:[%s238 + $0x1f0] sm:$0xff] %v3543
          %3672 = vst [vmem:[%s238 + $0x1f8] sm:$0xff] %v3544
          %3673 = vst [vmem:[%s238 + $0x200] sm:$0xff] %v3545
          %3674 = vst [vmem:[%s238 + $0x208] sm:$0xff] %v3546
          %3675 = vst [vmem:[%s238 + $0x210] sm:$0xff] %v3547
          %3676 = vst [vmem:[%s238 + $0x218] sm:$0xff] %v3548
          %3677 = vst [vmem:[%s238 + $0x220] sm:$0xff] %v3549
          %3678 = vst [vmem:[%s238 + $0x228] sm:$0xff] %v3550
          %3679 = vst [vmem:[%s238 + $0x230] sm:$0xff] %v3551
          %3680 = vst [vmem:[%s238 + $0x238] sm:$0xff] %v3552
          %3681 = vst [vmem:[%s238 + $0x240] sm:$0xff] %v3553
          %3682 = vst [vmem:[%s238 + $0x248] sm:$0xff] %v3554
          %3683 = vst [vmem:[%s238 + $0x250] sm:$0xff] %v3555
          %3684 = vst [vmem:[%s238 + $0x258] sm:$0xff] %v3556
          %3685 = vst [vmem:[%s238 + $0x260] sm:$0xff] %v3557
          %3686 = vst [vmem:[%s238 + $0x268] sm:$0xff] %v3558
          %3687 = vst [vmem:[%s238 + $0x270] sm:$0xff] %v3559
          %3688 = vst [vmem:[%s238 + $0x278] sm:$0xff] %v3560
          %3689 = vst [vmem:[%s238 + $0x280] sm:$0xff] %v3561
          %3690 = vst [vmem:[%s238 + $0x288] sm:$0xff] %v3562
          %3691 = vst [vmem:[%s238 + $0x290] sm:$0xff] %v3563
          %3692 = vst [vmem:[%s238 + $0x298] sm:$0xff] %v3564
          %3693 = vst [vmem:[%s238 + $0x2a0] sm:$0xff] %v3565
          %3694 = vst [vmem:[%s238 + $0x2a8] sm:$0xff] %v3566
          %3695 = vst [vmem:[%s238 + $0x2b0] sm:$0xff] %v3567
          %3696 = vst [vmem:[%s238 + $0x2b8] sm:$0xff] %v3568
          %3697 = vst [vmem:[%s238 + $0x2c0] sm:$0xff] %v3569
          %3698 = vst [vmem:[%s238 + $0x2c8] sm:$0xff] %v3570
          %3699 = vst [vmem:[%s238 + $0x2d0] sm:$0xff] %v3571
          %3700 = vst [vmem:[%s238 + $0x2d8] sm:$0xff] %v3572
          %3701 = vst [vmem:[%s238 + $0x2e0] sm:$0xff] %v3573
          %3702 = vst [vmem:[%s238 + $0x2e8] sm:$0xff] %v3574
          %3703 = vst [vmem:[%s238 + $0x2f0] sm:$0xff] %v3575
          %3704 = vst [vmem:[%s238 + $0x2f8] sm:$0xff] %v3576
          %3705 = vst [vmem:[%s238 + $0x300] sm:$0xff] %v3577
          %3706 = vst [vmem:[%s238 + $0x308] sm:$0xff] %v3578
          %3707 = vst [vmem:[%s238 + $0x310] sm:$0xff] %v3579
          %3708 = vst [vmem:[%s238 + $0x318] sm:$0xff] %v3580
          %3709 = vst [vmem:[%s238 + $0x320] sm:$0xff] %v3581
          %3710 = vst [vmem:[%s238 + $0x328] sm:$0xff] %v3582
          %3711 = vst [vmem:[%s238 + $0x330] sm:$0xff] %v3583
          %3712 = vst [vmem:[%s238 + $0x338] sm:$0xff] %v3584
          %3713 = vst [vmem:[%s238 + $0x340] sm:$0xff] %v3585
          %3714 = vst [vmem:[%s238 + $0x348] sm:$0xff] %v3586
          %3715 = vst [vmem:[%s238 + $0x350] sm:$0xff] %v3587
          %3716 = vst [vmem:[%s238 + $0x358] sm:$0xff] %v3588
          %3717 = vst [vmem:[%s238 + $0x360] sm:$0xff] %v3589
          %3718 = vst [vmem:[%s238 + $0x368] sm:$0xff] %v3590
          %3719 = vst [vmem:[%s238 + $0x370] sm:$0xff] %v3591
          %3720 = vst [vmem:[%s238 + $0x378] sm:$0xff] %v3592
          %3721 = vst [vmem:[%s238 + $0x380] sm:$0xff] %v3593
          %3722 = vst [vmem:[%s238 + $0x388] sm:$0xff] %v3594
          %3723 = vst [vmem:[%s238 + $0x390] sm:$0xff] %v3595
          %3724 = vst [vmem:[%s238 + $0x398] sm:$0xff] %v3596
          %3725 = vst [vmem:[%s238 + $0x3a0] sm:$0xff] %v3597
          %3726 = vst [vmem:[%s238 + $0x3a8] sm:$0xff] %v3598
          %3727 = vst [vmem:[%s238 + $0x3b0] sm:$0xff] %v3599
          %3728 = vst [vmem:[%s238 + $0x3b8] sm:$0xff] %v3600
          %3729 = vst [vmem:[%s238 + $0x3c0] sm:$0xff] %v3601
          %3730 = vst [vmem:[%s238 + $0x3c8] sm:$0xff] %v3602
          %3731 = vst [vmem:[%s238 + $0x3d0] sm:$0xff] %v3603
          %3732 = vst [vmem:[%s238 + $0x3d8] sm:$0xff] %v3604
          %3733 = vst [vmem:[%s238 + $0x3e0] sm:$0xff] %v3605
          %3734 = vst [vmem:[%s238 + $0x3e8] sm:$0xff] %v3606
          %3735 = vst [vmem:[%s238 + $0x3f0] sm:$0xff] %v3607
          %3736 = vst [vmem:[%s238 + $0x3f8] sm:$0xff] %v3608
        $region52: #{tpu_custom_call.1} parent=31 // pred_fallthru
          _
        %s3737 = sand.u32 %s111, 1
        %s3738 = scalar_lea.sflag [#allocation4], %s3737
        %s3739 = sand.u32 %s111, 1
        %s3740 = smul.addr %s3739, 1024
        %s3741 = scalar_lea.vmem [#allocation8], %s3740
        // Predicated region
        $region53: #{tpu_custom_call.1} parent=31 // pred_check
          %p3742 = pneg %p121
        $region54: #{tpu_custom_call.1} parent=31 // pred_check_branch
          %3744 = sbr.rel (%p3742) target = $region56
        $region55: #{tpu_custom_call.1} parent=31 // pred_region
          %s3745 = smul.u32 32, %s25
          %3747 = vsyncadd %s3738, 0
          %s3748 = smul.addr %s3745, 4
          %s3749 = smul.addr %s3748, 8
          %s3750 = scalar_lea.hbm %s3, %s3749
          %s3751 = sshll.u32 %s3741, 4
          %s3752 = int_to_ptr.vmem [resolvable:$true] %s3751
          %s3753 = sshll.u32 %s3750, 4
          %s3754 = int_to_ptr.hbm [resolvable:$true] %s3753
          %3759 = dma.vmem_to_hbm [thread:$0]  %s3752, 16384, %s3754, %s3738, 512, 512, 32
        $region56: #{tpu_custom_call.1} parent=31 // pred_fallthru
          _
      $region32: #{tpu_custom_call.1} parent=5 // pred_fallthru
        _
      %p3760 = scmp.le.s32.totalorder 2, %s16
      // Predicated region
      $region57: #{tpu_custom_call.1} parent=5 // pred_check
        %p3761 = pneg %p3760
      $region58: #{tpu_custom_call.1} parent=5 // pred_check_branch
        %3763 = sbr.rel (%p3761) target = $region60
      $region59: #{tpu_custom_call.1} parent=5 // pred_region
        %s3764 = ssub.s32 %s16, 2
        // Predicated region
        $region61: #{tpu_custom_call.1} parent=59 // pred_check
          %p3765 = pneg %p127
        $region62: #{tpu_custom_call.1} parent=59 // pred_check_branch
          %3767 = sbr.rel (%p3765) target = $region64
        $region63: #{tpu_custom_call.1} parent=59 // pred_region
          %s3768 = sand.u32 %s112, 1
          %s3769 = scalar_lea.sflag [#allocation4], %s3768
          %s3770 = sand.u32 %s112, 1
          %s3771 = smul.addr %s3770, 1024
          %s3772 = scalar_lea.vmem [#allocation8], %s3771
          %3774 = dma.done %s3769, 16384
        $region64: #{tpu_custom_call.1} parent=59 // pred_fallthru
          _
      $region60: #{tpu_custom_call.1} parent=5 // pred_fallthru
        _
    $region6: #{tpu_custom_call.1} parent=1 // loop_footer
      %s20 = sadd.s32 1, %s16
    $region7: #{tpu_custom_call.1} parent=1 // loop_footer_branch
      %15 = sbr.rel target = $region3
    $region8: #{tpu_custom_call.1} parent=1 // loop_exit
      _
    %3775 = vsyncpa [#allocation3], 1
    %s3776 = scalar_lea.sflag [#allocation3], 1
    %3777 = vsyncpa %s3776, 1
    %3778 = vsyncpa [#allocation6], 1
    %3779 = vsyncpa [#allocation4], 1
    %s3780 = scalar_lea.sflag [#allocation4], 1
    %3781 = vsyncpa %s3780, 1

</llo_original>
